<compile_context>
chip_gen: v7x
topology: tpu7x:2x2x1
jax: 0.10.0
libtpu: 0.0.40
codegen_flags: <defaults>
</compile_context>

<pallas_src>
import functools

import numpy as np
import jax
import jax.numpy as jnp
from jax import lax
from jax.experimental import pallas as pl
from jax.experimental.pallas import tpu as pltpu

EPS = 1e-5   # PyTorch GroupNorm default eps
PT = 8       # top halo rows in the activation scratch (keeps interior stores aligned)
PB = 8       # bottom halo rows


def _elu(v):
    # ELU(alpha=1); clamp the exp argument so the unselected branch cannot overflow.
    return jnp.where(v > 0, v, jnp.exp(jnp.minimum(v, 0.0)) - 1.0)


# ----------------------------- Pallas kernel ------------------------------ #
def _ext_resnet_kernel(x_ref,
                       w1_ref, g1_ref, b1_ref,
                       w2_ref, g2_ref, b2_ref,
                       w3_ref, g3_ref, b3_ref,
                       redagg_ref, expand_ref,
                       o_ref,
                       ext_ref, res_ref,
                       *, nb, H, W, Cin, Cout):
    """conv1(c,g,e) -> conv2(c,g,e) -> conv3(c,g) -> +res -> ELU, nb samples.

    Activations are lane-dense: rows = (sample, h), lanes = (w, c)."""
    R = nb * H
    WCin = W * Cin
    WCout = W * Cout

    # Per-row h index (same for every sample in the stack) -> dy boundary masks.
    hh = lax.broadcasted_iota(jnp.int32, (R, 1), 0) % H

    def conv_gn(wc_in, w_ref, g_ref, b_ref):
        # 3x3 "SAME" conv as 3 matmuls (one per dy shift) against banded
        # (wc_in, WCout) bf16 weights; f32 accumulation.
        acc = jnp.zeros((R, WCout), jnp.float32)
        for dy in (-1, 0, 1):
            src = ext_ref[PT + dy:PT + dy + R, :wc_in]        # (R, wc_in) f32
            valid = (hh + dy >= 0) & (hh + dy <= H - 1)       # (R, 1) row mask
            lhs = jnp.where(valid, src, 0.0).astype(jnp.bfloat16)
            acc = acc + jnp.dot(lhs, w_ref[dy + 1],
                                preferred_element_type=jnp.float32)

        # GroupNorm (per sample, per channel group); statistics in f32.
        y = acc.reshape(nb, H, WCout)                         # free leading split
        rsum = jnp.sum(y, axis=1)                             # (nb, WCout)
        ssum = jnp.sum(y * y, axis=1)                         # (nb, WCout)
        # Fold the w lanes and the channel group (and 1/count) in one tiny dot.
        mean = jnp.dot(rsum, redagg_ref[...],
                       preferred_element_type=jnp.float32)    # (nb, Cout)
        ex2 = jnp.dot(ssum, redagg_ref[...],
                      preferred_element_type=jnp.float32)     # (nb, Cout)
        var = jnp.maximum(ex2 - mean * mean, 0.0)             # clamp: no negative var
        scale = lax.rsqrt(var + EPS) * g_ref[...]             # (nb, Cout)
        shift = b_ref[...] - mean * scale                     # (nb, Cout)
        # Replicate per-channel scale/shift across the w lanes.
        scale_w = jnp.dot(scale, expand_ref[...],
                          preferred_element_type=jnp.float32)  # (nb, WCout)
        shift_w = jnp.dot(shift, expand_ref[...],
                          preferred_element_type=jnp.float32)
        out = y * scale_w[:, None, :] + shift_w[:, None, :]
        return out.reshape(R, WCout)

    # conv1 : conv -> GN -> ELU   (input dropped into the scratch interior)
    ext_ref[PT:PT + R, :WCin] = x_ref[...].astype(jnp.float32)
    out1 = _elu(conv_gn(WCin, w1_ref, g1_ref, b1_ref))
    res_ref[...] = out1                      # residual stays on-chip
    ext_ref[PT:PT + R, :WCout] = out1        # direct handoff to conv2

    # conv2 : conv -> GN -> ELU
    out2 = _elu(conv_gn(WCout, w2_ref, g2_ref, b2_ref))
    ext_ref[PT:PT + R, :WCout] = out2        # direct handoff to conv3

    # conv3 : conv -> GN, then residual add + ELU; lane-dense output store.
    out3 = conv_gn(WCout, w3_ref, g3_ref, b3_ref)
    o_ref[...] = _elu(out3 + res_ref[...]).astype(o_ref.dtype)


# -------------------------------- wrapper ---------------------------------- #
def ext_resnet_block_pallas(x, p, *, groups=8, nb=None):
    """x: (N, H, W, Cin) NHWC float32.  p: dict of HWIO conv weights + GN affine."""
    N, H, W, Cin = x.shape
    Cout = p["w1"].shape[-1]
    if Cout < groups:                 # mirrors create_conv's num_groups adjustment
        groups = 1
    assert Cout % groups == 0
    cpg = Cout // groups

    if nb is None:                    # samples stacked per grid step
        nb = 1
        for cand in (8, 4, 2):
            if N % cand == 0:
                nb = cand
                break
    assert N % nb == 0
    R = nb * H
    WCin, WCout = W * Cin, W * Cout
    WCmax = max(WCin, WCout)

    def banded(w):
        """HWIO (3,3,ci,Cout) -> (3, W*ci, W*Cout) bf16; block-banded over w so
        the dx taps and w-boundary zero padding live inside the weights."""
        ci = int(w.shape[2])
        wn = np.asarray(w, np.float32)
        B = np.zeros((3, W * ci, W * Cout), np.float32)
        for dyi in range(3):
            for dxi, dx in enumerate((-1, 0, 1)):
                for ws in range(W):        # source column w' = w + dx
                    wo = ws - dx           # output column w
                    if 0 <= wo < W:
                        B[dyi, ws * ci:(ws + 1) * ci,
                          wo * Cout:(wo + 1) * Cout] = wn[dyi, dxi]
        return jnp.asarray(B, jnp.bfloat16)

    def affine(v):
        return jnp.asarray(v, jnp.float32).reshape(1, Cout)

    # (W*Cout, Cout): folds the lane-resident w axis AND the channel group,
    # scaled by 1/(H*W*cpg) -> per-(sample, channel) group mean in one dot.
    red_agg = np.zeros((W * Cout, Cout), np.float32)
    # (Cout, W*Cout): replicates a per-channel vector across the w lanes.
    expand = np.zeros((Cout, W * Cout), np.float32)
    for ws in range(W):
        for c in range(Cout):
            g0 = (c // cpg) * cpg
            red_agg[ws * Cout + c, g0:g0 + cpg] = 1.0 / (H * W * cpg)
            expand[c, ws * Cout + c] = 1.0

    args = (x.reshape(N * H, WCin),          # NHWC -> lane-dense rows, free
            banded(p["w1"]), affine(p["g1"]), affine(p["b1"]),
            banded(p["w2"]), affine(p["g2"]), affine(p["b2"]),
            banded(p["w3"]), affine(p["g3"]), affine(p["b3"]),
            jnp.asarray(red_agg), jnp.asarray(expand))

    kernel = functools.partial(_ext_resnet_kernel, nb=nb, H=H, W=W,
                               Cin=Cin, Cout=Cout)

    rep2 = lambda s: pl.BlockSpec(s, lambda n: (0, 0))
    rep3 = lambda s: pl.BlockSpec(s, lambda n: (0, 0, 0))

    in_specs = [
        pl.BlockSpec((R, WCin), lambda n: (n, 0)),
        rep3((3, WCin, WCout)), rep2((1, Cout)), rep2((1, Cout)),
        rep3((3, WCout, WCout)), rep2((1, Cout)), rep2((1, Cout)),
        rep3((3, WCout, WCout)), rep2((1, Cout)), rep2((1, Cout)),
        rep2((WCout, Cout)), rep2((Cout, WCout)),
    ]

    # Output emitted lane-dense as (N*H, W*Cout): identical HBM byte layout to
    # NHWC, so the reshape back below is free.
    out2d = pl.pallas_call(
        kernel,
        out_shape=jax.ShapeDtypeStruct((N * H, WCout), x.dtype),
        grid=(N // nb,),
        in_specs=in_specs,
        out_specs=pl.BlockSpec((R, WCout), lambda n: (n, 0)),
        scratch_shapes=[
            pltpu.VMEM((PT + R + PB, WCmax), jnp.float32),   # halo'd activations
            pltpu.VMEM((R, WCout), jnp.float32),             # residual (conv1 out)
        ],
        compiler_params=pltpu.CompilerParams(
            dimension_semantics=("parallel",),               # megacore on v7x
            vmem_limit_bytes=32 * 1024 * 1024),
    )(*args)
    return out2d.reshape(N, H, W, Cout)


# ------------------------- pure-JAX reference ------------------------------ #
def _gn_ref(x, gamma, beta, groups):
    N, H, W, C = x.shape
    xg = x.reshape(N, H, W, groups, C // groups)
    mean = xg.mean(axis=(1, 2, 4), keepdims=True)
    var = ((xg - mean) ** 2).mean(axis=(1, 2, 4), keepdims=True)
    xn = (xg - mean) * lax.rsqrt(var + EPS)
    return xn.reshape(N, H, W, C) * gamma + beta


def _single_conv_ref(x, w, gamma, beta, groups, apply_act):
    y = lax.conv_general_dilated(
        x, w, (1, 1), "SAME",
        dimension_numbers=("NHWC", "HWIO", "NHWC"),
        precision=lax.Precision.HIGHEST)
    y = _gn_ref(y, gamma, beta, groups)
    return _elu(y) if apply_act else y


def ext_resnet_block_ref(x, p, *, groups):
    out = _single_conv_ref(x, p["w1"], p["g1"], p["b1"], groups, True)
    res = out
    out = _single_conv_ref(out, p["w2"], p["g2"], p["b2"], groups, True)
    out = _single_conv_ref(out, p["w3"], p["g3"], p["b3"], groups, False)
    return _elu(out + res)


# --------------------------------- main ------------------------------------ #
if __name__ == "__main__":
    N, Cin, Cout, H, W, G = 2, 4, 16, 16, 16, 8

    ks = jax.random.split(jax.random.PRNGKey(0), 10)
    x_nchw = jax.random.normal(ks[0], (N, Cin, H, W), jnp.float32)  # PyTorch NCHW
    x = jnp.transpose(x_nchw, (0, 2, 3, 1))                         # -> NHWC

    def conv_w(k, cin, cout):
        return jax.random.normal(k, (3, 3, cin, cout), jnp.float32) / jnp.sqrt(
            9.0 * cin)

    params = {
        "w1": conv_w(ks[1], Cin, Cout),
        "g1": 1.0 + 0.1 * jax.random.normal(ks[2], (Cout,), jnp.float32),
        "b1": 0.1 * jax.random.normal(ks[3], (Cout,), jnp.float32),
        "w2": conv_w(ks[4], Cout, Cout),
        "g2": 1.0 + 0.1 * jax.random.normal(ks[5], (Cout,), jnp.float32),
        "b2": 0.1 * jax.random.normal(ks[6], (Cout,), jnp.float32),
        "w3": conv_w(ks[7], Cout, Cout),
        "g3": 1.0 + 0.1 * jax.random.normal(ks[8], (Cout,), jnp.float32),
        "b3": 0.1 * jax.random.normal(ks[9], (Cout,), jnp.float32),
    }

    out = jax.block_until_ready(ext_resnet_block_pallas(x, params, groups=G))
    ref = jax.block_until_ready(ext_resnet_block_ref(x, params, groups=G))

    assert out.shape == (N, H, W, Cout)
    # Kernel feeds the MXU bf16 operands (f32 accumulation); the reference is
    # f32 at HIGHEST precision, so allow a bf16-sized tolerance.
    max_diff = float(jnp.max(jnp.abs(out - ref)))
    assert jnp.allclose(out, ref, atol=5e-2, rtol=5e-2), f"max abs diff {max_diff}"

    print("KERNEL_OK")
</pallas_src>

<mosaic_0001>
module attributes {stable_mosaic.version = 11 : i64} {
  func.func @_ext_resnet_kernel(%arg0: i32, %arg1: memref<32x64xf32, #tpu.memory_space<vmem>>, %arg2: memref<3x64x256xbf16, #tpu.memory_space<vmem>>, %arg3: memref<1x16xf32, #tpu.memory_space<vmem>>, %arg4: memref<1x16xf32, #tpu.memory_space<vmem>>, %arg5: memref<3x256x256xbf16, #tpu.memory_space<vmem>>, %arg6: memref<1x16xf32, #tpu.memory_space<vmem>>, %arg7: memref<1x16xf32, #tpu.memory_space<vmem>>, %arg8: memref<3x256x256xbf16, #tpu.memory_space<vmem>>, %arg9: memref<1x16xf32, #tpu.memory_space<vmem>>, %arg10: memref<1x16xf32, #tpu.memory_space<vmem>>, %arg11: memref<256x16xf32, #tpu.memory_space<vmem>>, %arg12: memref<16x256xf32, #tpu.memory_space<vmem>>, %arg13: memref<32x256xf32, #tpu.memory_space<vmem>>, %arg14: memref<48x256xf32, #tpu.memory_space<vmem>>, %arg15: memref<32x256xf32, #tpu.memory_space<vmem>>) attributes {dimension_semantics = [#tpu.dimension_semantics<parallel>], iteration_bounds = array<i64: 1>, scalar_prefetch = 0 : i64, scratch_operands = 2 : i64, tpu.core_type = #tpu.core_type<tc>, window_params = [{transform_indices = @transform_0, window_bounds = array<i64: 32, 64>}, {pipeline_mode = #tpu.pipeline_mode<synchronous>, transform_indices = @transform_1, window_bounds = array<i64: 3, 64, 256>}, {pipeline_mode = #tpu.pipeline_mode<synchronous>, transform_indices = @transform_2, window_bounds = array<i64: 1, 16>}, {pipeline_mode = #tpu.pipeline_mode<synchronous>, transform_indices = @transform_3, window_bounds = array<i64: 1, 16>}, {pipeline_mode = #tpu.pipeline_mode<synchronous>, transform_indices = @transform_4, window_bounds = array<i64: 3, 256, 256>}, {pipeline_mode = #tpu.pipeline_mode<synchronous>, transform_indices = @transform_5, window_bounds = array<i64: 1, 16>}, {pipeline_mode = #tpu.pipeline_mode<synchronous>, transform_indices = @transform_6, window_bounds = array<i64: 1, 16>}, {pipeline_mode = #tpu.pipeline_mode<synchronous>, transform_indices = @transform_7, window_bounds = array<i64: 3, 256, 256>}, {pipeline_mode = #tpu.pipeline_mode<synchronous>, transform_indices = @transform_8, window_bounds = array<i64: 1, 16>}, {pipeline_mode = #tpu.pipeline_mode<synchronous>, transform_indices = @transform_9, window_bounds = array<i64: 1, 16>}, {pipeline_mode = #tpu.pipeline_mode<synchronous>, transform_indices = @transform_10, window_bounds = array<i64: 256, 16>}, {pipeline_mode = #tpu.pipeline_mode<synchronous>, transform_indices = @transform_11, window_bounds = array<i64: 16, 256>}, {transform_indices = @transform_12, window_bounds = array<i64: 32, 256>}]} {
    %0 = tpu.iota {dimensions = array<i32: 0>} : vector<32x1xi32>
    %c16_i32 = arith.constant 16 : i32
    %c0_i32 = arith.constant 0 : i32
    %1 = arith.cmpi eq, %c16_i32, %c0_i32 : i32
    %c1_i32 = arith.constant 1 : i32
    %2 = arith.select %1, %c1_i32, %c16_i32 : i32
    %3 = vector.broadcast %2 : i32 to vector<32x1xi32>
    %4 = arith.remsi %0, %3 : vector<32x1xi32>
    %c0_i32_0 = arith.constant 0 : i32
    %5 = vector.broadcast %c0_i32_0 : i32 to vector<32x1xi32>
    %6 = arith.cmpi ne, %4, %5 : vector<32x1xi32>
    %c0_i32_1 = arith.constant 0 : i32
    %7 = vector.broadcast %c0_i32_1 : i32 to vector<32x1xi32>
    %8 = arith.cmpi slt, %4, %7 : vector<32x1xi32>
    %c0_i32_2 = arith.constant 0 : i32
    %9 = arith.cmpi slt, %2, %c0_i32_2 : i32
    %10 = vector.broadcast %9 : i1 to vector<32x1xi1>
    %11 = vector.broadcast %10 : vector<32x1xi1> to vector<32x1xi1>
    %12 = arith.xori %8, %11 : vector<32x1xi1>
    %13 = arith.andi %12, %6 : vector<32x1xi1>
    %14 = vector.broadcast %2 : i32 to vector<32x1xi32>
    %15 = arith.addi %4, %14 : vector<32x1xi32>
    %16 = arith.select %13, %15, %4 : vector<32x1xi1>, vector<32x1xi32>
    %c0 = arith.constant 0 : index
    %c0_3 = arith.constant 0 : index
    %17 = vector.load %arg1[%c0, %c0_3] : memref<32x64xf32, #tpu.memory_space<vmem>>, vector<32x64xf32>
    %c8 = arith.constant 8 : index
    %c0_4 = arith.constant 0 : index
    %18 = vector.load %arg14[%c8, %c0_4] : memref<48x256xf32, #tpu.memory_space<vmem>>, vector<32x64xf32>
    tpu.vector_store %arg14[%c8, %c0_4], %17 {strides = array<i32>} : memref<48x256xf32, #tpu.memory_space<vmem>>, vector<32x64xf32>,
    %cst = arith.constant 0.000000e+00 : f32
    %19 = vector.broadcast %cst : f32 to vector<32x256xf32>
    %c7 = arith.constant 7 : index
    %c0_5 = arith.constant 0 : index
    %20 = vector.load %arg14[%c7, %c0_5] : memref<48x256xf32, #tpu.memory_space<vmem>>, vector<32x64xf32>
    %c-1_i32 = arith.constant -1 : i32
    %21 = vector.broadcast %c-1_i32 : i32 to vector<32x1xi32>
    %22 = arith.addi %16, %21 : vector<32x1xi32>
    %c0_i32_6 = arith.constant 0 : i32
    %23 = vector.broadcast %c0_i32_6 : i32 to vector<32x1xi32>
    %24 = arith.cmpi sge, %22, %23 : vector<32x1xi32>
    %c-1_i32_7 = arith.constant -1 : i32
    %25 = vector.broadcast %c-1_i32_7 : i32 to vector<32x1xi32>
    %26 = arith.addi %16, %25 : vector<32x1xi32>
    %c15_i32 = arith.constant 15 : i32
    %27 = vector.broadcast %c15_i32 : i32 to vector<32x1xi32>
    %28 = arith.cmpi sle, %26, %27 : vector<32x1xi32>
    %29 = arith.andi %24, %28 : vector<32x1xi1>
    %cst_8 = arith.constant 0.000000e+00 : f32
    %30 = vector.shape_cast %29 : vector<32x1xi1> to vector<32x1xi1>
    %31 = vector.broadcast %30 : vector<32x1xi1> to vector<32x64xi1>
    %32 = vector.broadcast %cst_8 : f32 to vector<32x64xf32>
    %33 = arith.select %31, %20, %32 : vector<32x64xi1>, vector<32x64xf32>
    %34 = arith.truncf %33 : vector<32x64xf32> to vector<32x64xbf16>
    %c0_9 = arith.constant 0 : index
    %c0_10 = arith.constant 0 : index
    %c0_11 = arith.constant 0 : index
    %35 = vector.load %arg2[%c0_9, %c0_10, %c0_11] : memref<3x64x256xbf16, #tpu.memory_space<vmem>>, vector<1x64x256xbf16>
    %36 = vector.shape_cast %35 : vector<1x64x256xbf16> to vector<64x256xbf16>
    %cst_12 = arith.constant dense<0.000000e+00> : vector<32x256xf32>
    %37 = tpu.matmul %34, %36, %cst_12 {dimension_numbers = #tpu.dot_dimension_numbers<[1], [0], [0], [1], [0, 0, 1, 1], [], []>} : vector<32x64xbf16>, vector<64x256xbf16>, vector<32x256xf32> -> vector<32x256xf32>
    %38 = arith.addf %19, %37 : vector<32x256xf32>
    %c8_13 = arith.constant 8 : index
    %c0_14 = arith.constant 0 : index
    %39 = vector.load %arg14[%c8_13, %c0_14] : memref<48x256xf32, #tpu.memory_space<vmem>>, vector<32x64xf32>
    %c0_i32_15 = arith.constant 0 : i32
    %40 = vector.broadcast %c0_i32_15 : i32 to vector<32x1xi32>
    %41 = arith.addi %16, %40 : vector<32x1xi32>
    %c0_i32_16 = arith.constant 0 : i32
    %42 = vector.broadcast %c0_i32_16 : i32 to vector<32x1xi32>
    %43 = arith.cmpi sge, %41, %42 : vector<32x1xi32>
    %c0_i32_17 = arith.constant 0 : i32
    %44 = vector.broadcast %c0_i32_17 : i32 to vector<32x1xi32>
    %45 = arith.addi %16, %44 : vector<32x1xi32>
    %c15_i32_18 = arith.constant 15 : i32
    %46 = vector.broadcast %c15_i32_18 : i32 to vector<32x1xi32>
    %47 = arith.cmpi sle, %45, %46 : vector<32x1xi32>
    %48 = arith.andi %43, %47 : vector<32x1xi1>
    %cst_19 = arith.constant 0.000000e+00 : f32
    %49 = vector.shape_cast %48 : vector<32x1xi1> to vector<32x1xi1>
    %50 = vector.broadcast %49 : vector<32x1xi1> to vector<32x64xi1>
    %51 = vector.broadcast %cst_19 : f32 to vector<32x64xf32>
    %52 = arith.select %50, %39, %51 : vector<32x64xi1>, vector<32x64xf32>
    %53 = arith.truncf %52 : vector<32x64xf32> to vector<32x64xbf16>
    %c1 = arith.constant 1 : index
    %c0_20 = arith.constant 0 : index
    %c0_21 = arith.constant 0 : index
    %54 = vector.load %arg2[%c1, %c0_20, %c0_21] : memref<3x64x256xbf16, #tpu.memory_space<vmem>>, vector<1x64x256xbf16>
    %55 = vector.shape_cast %54 : vector<1x64x256xbf16> to vector<64x256xbf16>
    %cst_22 = arith.constant dense<0.000000e+00> : vector<32x256xf32>
    %56 = tpu.matmul %53, %55, %cst_22 {dimension_numbers = #tpu.dot_dimension_numbers<[1], [0], [0], [1], [0, 0, 1, 1], [], []>} : vector<32x64xbf16>, vector<64x256xbf16>, vector<32x256xf32> -> vector<32x256xf32>
    %57 = arith.addf %38, %56 : vector<32x256xf32>
    %c9 = arith.constant 9 : index
    %c0_23 = arith.constant 0 : index
    %58 = vector.load %arg14[%c9, %c0_23] : memref<48x256xf32, #tpu.memory_space<vmem>>, vector<32x64xf32>
    %c1_i32_24 = arith.constant 1 : i32
    %59 = vector.broadcast %c1_i32_24 : i32 to vector<32x1xi32>
    %60 = arith.addi %16, %59 : vector<32x1xi32>
    %c0_i32_25 = arith.constant 0 : i32
    %61 = vector.broadcast %c0_i32_25 : i32 to vector<32x1xi32>
    %62 = arith.cmpi sge, %60, %61 : vector<32x1xi32>
    %c1_i32_26 = arith.constant 1 : i32
    %63 = vector.broadcast %c1_i32_26 : i32 to vector<32x1xi32>
    %64 = arith.addi %16, %63 : vector<32x1xi32>
    %c15_i32_27 = arith.constant 15 : i32
    %65 = vector.broadcast %c15_i32_27 : i32 to vector<32x1xi32>
    %66 = arith.cmpi sle, %64, %65 : vector<32x1xi32>
    %67 = arith.andi %62, %66 : vector<32x1xi1>
    %cst_28 = arith.constant 0.000000e+00 : f32
    %68 = vector.shape_cast %67 : vector<32x1xi1> to vector<32x1xi1>
    %69 = vector.broadcast %68 : vector<32x1xi1> to vector<32x64xi1>
    %70 = vector.broadcast %cst_28 : f32 to vector<32x64xf32>
    %71 = arith.select %69, %58, %70 : vector<32x64xi1>, vector<32x64xf32>
    %72 = arith.truncf %71 : vector<32x64xf32> to vector<32x64xbf16>
    %c2 = arith.constant 2 : index
    %c0_29 = arith.constant 0 : index
    %c0_30 = arith.constant 0 : index
    %73 = vector.load %arg2[%c2, %c0_29, %c0_30] : memref<3x64x256xbf16, #tpu.memory_space<vmem>>, vector<1x64x256xbf16>
    %74 = vector.shape_cast %73 : vector<1x64x256xbf16> to vector<64x256xbf16>
    %cst_31 = arith.constant dense<0.000000e+00> : vector<32x256xf32>
    %75 = tpu.matmul %72, %74, %cst_31 {dimension_numbers = #tpu.dot_dimension_numbers<[1], [0], [0], [1], [0, 0, 1, 1], [], []>} : vector<32x64xbf16>, vector<64x256xbf16>, vector<32x256xf32> -> vector<32x256xf32>
    %76 = arith.addf %57, %75 : vector<32x256xf32>
    %77 = vector.shape_cast %76 : vector<32x256xf32> to vector<2x16x256xf32>
    %cst_32 = arith.constant dense<0.000000e+00> : vector<2x256xf32>
    %78 = vector.multi_reduction <add>, %77, %cst_32 [1] : vector<2x16x256xf32> to vector<2x256xf32>
    %79 = arith.mulf %77, %77 : vector<2x16x256xf32>
    %cst_33 = arith.constant dense<0.000000e+00> : vector<2x256xf32>
    %80 = vector.multi_reduction <add>, %79, %cst_33 [1] : vector<2x16x256xf32> to vector<2x256xf32>
    %c0_34 = arith.constant 0 : index
    %c0_35 = arith.constant 0 : index
    %81 = vector.load %arg11[%c0_34, %c0_35] : memref<256x16xf32, #tpu.memory_space<vmem>>, vector<256x16xf32>
    %cst_36 = arith.constant dense<0.000000e+00> : vector<2x16xf32>
    %82 = tpu.matmul %78, %81, %cst_36 {dimension_numbers = #tpu.dot_dimension_numbers<[1], [0], [0], [1], [0, 0, 1, 1], [], []>} : vector<2x256xf32>, vector<256x16xf32>, vector<2x16xf32> -> vector<2x16xf32>
    %c0_37 = arith.constant 0 : index
    %c0_38 = arith.constant 0 : index
    %83 = vector.load %arg11[%c0_37, %c0_38] : memref<256x16xf32, #tpu.memory_space<vmem>>, vector<256x16xf32>
    %cst_39 = arith.constant dense<0.000000e+00> : vector<2x16xf32>
    %84 = tpu.matmul %80, %83, %cst_39 {dimension_numbers = #tpu.dot_dimension_numbers<[1], [0], [0], [1], [0, 0, 1, 1], [], []>} : vector<2x256xf32>, vector<256x16xf32>, vector<2x16xf32> -> vector<2x16xf32>
    %85 = arith.mulf %82, %82 : vector<2x16xf32>
    %86 = arith.subf %84, %85 : vector<2x16xf32>
    %cst_40 = arith.constant 0.000000e+00 : f32
    %87 = vector.broadcast %cst_40 : f32 to vector<2x16xf32>
    %88 = arith.maximumf %86, %87 : vector<2x16xf32>
    %cst_41 = arith.constant 9.99999974E-6 : f32
    %89 = vector.broadcast %cst_41 : f32 to vector<2x16xf32>
    %90 = arith.addf %88, %89 : vector<2x16xf32>
    %91 = math.rsqrt %90 : vector<2x16xf32>
    %c0_42 = arith.constant 0 : index
    %c0_43 = arith.constant 0 : index
    %92 = vector.load %arg3[%c0_42, %c0_43] : memref<1x16xf32, #tpu.memory_space<vmem>>, vector<1x16xf32>
    %93 = vector.broadcast %92 : vector<1x16xf32> to vector<2x16xf32>
    %94 = arith.mulf %91, %93 : vector<2x16xf32>
    %c0_44 = arith.constant 0 : index
    %c0_45 = arith.constant 0 : index
    %95 = vector.load %arg4[%c0_44, %c0_45] : memref<1x16xf32, #tpu.memory_space<vmem>>, vector<1x16xf32>
    %96 = arith.mulf %82, %94 : vector<2x16xf32>
    %97 = vector.broadcast %95 : vector<1x16xf32> to vector<2x16xf32>
    %98 = arith.subf %97, %96 : vector<2x16xf32>
    %c0_46 = arith.constant 0 : index
    %c0_47 = arith.constant 0 : index
    %99 = vector.load %arg12[%c0_46, %c0_47] : memref<16x256xf32, #tpu.memory_space<vmem>>, vector<16x256xf32>
    %cst_48 = arith.constant dense<0.000000e+00> : vector<2x256xf32>
    %100 = tpu.matmul %94, %99, %cst_48 {dimension_numbers = #tpu.dot_dimension_numbers<[1], [0], [0], [1], [0, 0, 1, 1], [], []>} : vector<2x16xf32>, vector<16x256xf32>, vector<2x256xf32> -> vector<2x256xf32>
    %c0_49 = arith.constant 0 : index
    %c0_50 = arith.constant 0 : index
    %101 = vector.load %arg12[%c0_49, %c0_50] : memref<16x256xf32, #tpu.memory_space<vmem>>, vector<16x256xf32>
    %cst_51 = arith.constant dense<0.000000e+00> : vector<2x256xf32>
    %102 = tpu.matmul %98, %101, %cst_51 {dimension_numbers = #tpu.dot_dimension_numbers<[1], [0], [0], [1], [0, 0, 1, 1], [], []>} : vector<2x16xf32>, vector<16x256xf32>, vector<2x256xf32> -> vector<2x256xf32>
    %103 = vector.shape_cast %100 : vector<2x256xf32> to vector<2x1x256xf32>
    %104 = vector.broadcast %103 : vector<2x1x256xf32> to vector<2x16x256xf32>
    %105 = arith.mulf %77, %104 : vector<2x16x256xf32>
    %106 = vector.shape_cast %102 : vector<2x256xf32> to vector<2x1x256xf32>
    %107 = vector.broadcast %106 : vector<2x1x256xf32> to vector<2x16x256xf32>
    %108 = arith.addf %105, %107 : vector<2x16x256xf32>
    %109 = vector.shape_cast %108 : vector<2x16x256xf32> to vector<32x256xf32>
    %cst_52 = arith.constant 0.000000e+00 : f32
    %110 = vector.broadcast %cst_52 : f32 to vector<32x256xf32>
    %111 = arith.cmpf ogt, %109, %110 : vector<32x256xf32>
    %cst_53 = arith.constant 0.000000e+00 : f32
    %112 = vector.broadcast %cst_53 : f32 to vector<32x256xf32>
    %113 = arith.minimumf %109, %112 : vector<32x256xf32>
    %114 = math.exp %113 : vector<32x256xf32>
    %cst_54 = arith.constant 1.000000e+00 : f32
    %115 = vector.broadcast %cst_54 : f32 to vector<32x256xf32>
    %116 = arith.subf %114, %115 : vector<32x256xf32>
    %117 = arith.select %111, %109, %116 : vector<32x256xi1>, vector<32x256xf32>
    %c0_55 = arith.constant 0 : index
    %c0_56 = arith.constant 0 : index
    %118 = vector.load %arg15[%c0_55, %c0_56] : memref<32x256xf32, #tpu.memory_space<vmem>>, vector<32x256xf32>
    tpu.vector_store %arg15[%c0_55, %c0_56], %117 {strides = array<i32>} : memref<32x256xf32, #tpu.memory_space<vmem>>, vector<32x256xf32>,
    %c8_57 = arith.constant 8 : index
    %c0_58 = arith.constant 0 : index
    %119 = vector.load %arg14[%c8_57, %c0_58] : memref<48x256xf32, #tpu.memory_space<vmem>>, vector<32x256xf32>
    tpu.vector_store %arg14[%c8_57, %c0_58], %117 {strides = array<i32>} : memref<48x256xf32, #tpu.memory_space<vmem>>, vector<32x256xf32>,
    %cst_59 = arith.constant 0.000000e+00 : f32
    %120 = vector.broadcast %cst_59 : f32 to vector<32x256xf32>
    %c7_60 = arith.constant 7 : index
    %c0_61 = arith.constant 0 : index
    %121 = vector.load %arg14[%c7_60, %c0_61] : memref<48x256xf32, #tpu.memory_space<vmem>>, vector<32x256xf32>
    %c-1_i32_62 = arith.constant -1 : i32
    %122 = vector.broadcast %c-1_i32_62 : i32 to vector<32x1xi32>
    %123 = arith.addi %16, %122 : vector<32x1xi32>
    %c0_i32_63 = arith.constant 0 : i32
    %124 = vector.broadcast %c0_i32_63 : i32 to vector<32x1xi32>
    %125 = arith.cmpi sge, %123, %124 : vector<32x1xi32>
    %c-1_i32_64 = arith.constant -1 : i32
    %126 = vector.broadcast %c-1_i32_64 : i32 to vector<32x1xi32>
    %127 = arith.addi %16, %126 : vector<32x1xi32>
    %c15_i32_65 = arith.constant 15 : i32
    %128 = vector.broadcast %c15_i32_65 : i32 to vector<32x1xi32>
    %129 = arith.cmpi sle, %127, %128 : vector<32x1xi32>
    %130 = arith.andi %125, %129 : vector<32x1xi1>
    %cst_66 = arith.constant 0.000000e+00 : f32
    %131 = vector.shape_cast %130 : vector<32x1xi1> to vector<32x1xi1>
    %132 = vector.broadcast %131 : vector<32x1xi1> to vector<32x256xi1>
    %133 = vector.broadcast %cst_66 : f32 to vector<32x256xf32>
    %134 = arith.select %132, %121, %133 : vector<32x256xi1>, vector<32x256xf32>
    %135 = arith.truncf %134 : vector<32x256xf32> to vector<32x256xbf16>
    %c0_67 = arith.constant 0 : index
    %c0_68 = arith.constant 0 : index
    %c0_69 = arith.constant 0 : index
    %136 = vector.load %arg5[%c0_67, %c0_68, %c0_69] : memref<3x256x256xbf16, #tpu.memory_space<vmem>>, vector<1x256x256xbf16>
    %137 = vector.shape_cast %136 : vector<1x256x256xbf16> to vector<256x256xbf16>
    %cst_70 = arith.constant dense<0.000000e+00> : vector<32x256xf32>
    %138 = tpu.matmul %135, %137, %cst_70 {dimension_numbers = #tpu.dot_dimension_numbers<[1], [0], [0], [1], [0, 0, 1, 1], [], []>} : vector<32x256xbf16>, vector<256x256xbf16>, vector<32x256xf32> -> vector<32x256xf32>
    %139 = arith.addf %120, %138 : vector<32x256xf32>
    %c8_71 = arith.constant 8 : index
    %c0_72 = arith.constant 0 : index
    %140 = vector.load %arg14[%c8_71, %c0_72] : memref<48x256xf32, #tpu.memory_space<vmem>>, vector<32x256xf32>
    %c0_i32_73 = arith.constant 0 : i32
    %141 = vector.broadcast %c0_i32_73 : i32 to vector<32x1xi32>
    %142 = arith.addi %16, %141 : vector<32x1xi32>
    %c0_i32_74 = arith.constant 0 : i32
    %143 = vector.broadcast %c0_i32_74 : i32 to vector<32x1xi32>
    %144 = arith.cmpi sge, %142, %143 : vector<32x1xi32>
    %c0_i32_75 = arith.constant 0 : i32
    %145 = vector.broadcast %c0_i32_75 : i32 to vector<32x1xi32>
    %146 = arith.addi %16, %145 : vector<32x1xi32>
    %c15_i32_76 = arith.constant 15 : i32
    %147 = vector.broadcast %c15_i32_76 : i32 to vector<32x1xi32>
    %148 = arith.cmpi sle, %146, %147 : vector<32x1xi32>
    %149 = arith.andi %144, %148 : vector<32x1xi1>
    %cst_77 = arith.constant 0.000000e+00 : f32
    %150 = vector.shape_cast %149 : vector<32x1xi1> to vector<32x1xi1>
    %151 = vector.broadcast %150 : vector<32x1xi1> to vector<32x256xi1>
    %152 = vector.broadcast %cst_77 : f32 to vector<32x256xf32>
    %153 = arith.select %151, %140, %152 : vector<32x256xi1>, vector<32x256xf32>
    %154 = arith.truncf %153 : vector<32x256xf32> to vector<32x256xbf16>
    %c1_78 = arith.constant 1 : index
    %c0_79 = arith.constant 0 : index
    %c0_80 = arith.constant 0 : index
    %155 = vector.load %arg5[%c1_78, %c0_79, %c0_80] : memref<3x256x256xbf16, #tpu.memory_space<vmem>>, vector<1x256x256xbf16>
    %156 = vector.shape_cast %155 : vector<1x256x256xbf16> to vector<256x256xbf16>
    %cst_81 = arith.constant dense<0.000000e+00> : vector<32x256xf32>
    %157 = tpu.matmul %154, %156, %cst_81 {dimension_numbers = #tpu.dot_dimension_numbers<[1], [0], [0], [1], [0, 0, 1, 1], [], []>} : vector<32x256xbf16>, vector<256x256xbf16>, vector<32x256xf32> -> vector<32x256xf32>
    %158 = arith.addf %139, %157 : vector<32x256xf32>
    %c9_82 = arith.constant 9 : index
    %c0_83 = arith.constant 0 : index
    %159 = vector.load %arg14[%c9_82, %c0_83] : memref<48x256xf32, #tpu.memory_space<vmem>>, vector<32x256xf32>
    %c1_i32_84 = arith.constant 1 : i32
    %160 = vector.broadcast %c1_i32_84 : i32 to vector<32x1xi32>
    %161 = arith.addi %16, %160 : vector<32x1xi32>
    %c0_i32_85 = arith.constant 0 : i32
    %162 = vector.broadcast %c0_i32_85 : i32 to vector<32x1xi32>
    %163 = arith.cmpi sge, %161, %162 : vector<32x1xi32>
    %c1_i32_86 = arith.constant 1 : i32
    %164 = vector.broadcast %c1_i32_86 : i32 to vector<32x1xi32>
    %165 = arith.addi %16, %164 : vector<32x1xi32>
    %c15_i32_87 = arith.constant 15 : i32
    %166 = vector.broadcast %c15_i32_87 : i32 to vector<32x1xi32>
    %167 = arith.cmpi sle, %165, %166 : vector<32x1xi32>
    %168 = arith.andi %163, %167 : vector<32x1xi1>
    %cst_88 = arith.constant 0.000000e+00 : f32
    %169 = vector.shape_cast %168 : vector<32x1xi1> to vector<32x1xi1>
    %170 = vector.broadcast %169 : vector<32x1xi1> to vector<32x256xi1>
    %171 = vector.broadcast %cst_88 : f32 to vector<32x256xf32>
    %172 = arith.select %170, %159, %171 : vector<32x256xi1>, vector<32x256xf32>
    %173 = arith.truncf %172 : vector<32x256xf32> to vector<32x256xbf16>
    %c2_89 = arith.constant 2 : index
    %c0_90 = arith.constant 0 : index
    %c0_91 = arith.constant 0 : index
    %174 = vector.load %arg5[%c2_89, %c0_90, %c0_91] : memref<3x256x256xbf16, #tpu.memory_space<vmem>>, vector<1x256x256xbf16>
    %175 = vector.shape_cast %174 : vector<1x256x256xbf16> to vector<256x256xbf16>
    %cst_92 = arith.constant dense<0.000000e+00> : vector<32x256xf32>
    %176 = tpu.matmul %173, %175, %cst_92 {dimension_numbers = #tpu.dot_dimension_numbers<[1], [0], [0], [1], [0, 0, 1, 1], [], []>} : vector<32x256xbf16>, vector<256x256xbf16>, vector<32x256xf32> -> vector<32x256xf32>
    %177 = arith.addf %158, %176 : vector<32x256xf32>
    %178 = vector.shape_cast %177 : vector<32x256xf32> to vector<2x16x256xf32>
    %cst_93 = arith.constant dense<0.000000e+00> : vector<2x256xf32>
    %179 = vector.multi_reduction <add>, %178, %cst_93 [1] : vector<2x16x256xf32> to vector<2x256xf32>
    %180 = arith.mulf %178, %178 : vector<2x16x256xf32>
    %cst_94 = arith.constant dense<0.000000e+00> : vector<2x256xf32>
    %181 = vector.multi_reduction <add>, %180, %cst_94 [1] : vector<2x16x256xf32> to vector<2x256xf32>
    %c0_95 = arith.constant 0 : index
    %c0_96 = arith.constant 0 : index
    %182 = vector.load %arg11[%c0_95, %c0_96] : memref<256x16xf32, #tpu.memory_space<vmem>>, vector<256x16xf32>
    %cst_97 = arith.constant dense<0.000000e+00> : vector<2x16xf32>
    %183 = tpu.matmul %179, %182, %cst_97 {dimension_numbers = #tpu.dot_dimension_numbers<[1], [0], [0], [1], [0, 0, 1, 1], [], []>} : vector<2x256xf32>, vector<256x16xf32>, vector<2x16xf32> -> vector<2x16xf32>
    %c0_98 = arith.constant 0 : index
    %c0_99 = arith.constant 0 : index
    %184 = vector.load %arg11[%c0_98, %c0_99] : memref<256x16xf32, #tpu.memory_space<vmem>>, vector<256x16xf32>
    %cst_100 = arith.constant dense<0.000000e+00> : vector<2x16xf32>
    %185 = tpu.matmul %181, %184, %cst_100 {dimension_numbers = #tpu.dot_dimension_numbers<[1], [0], [0], [1], [0, 0, 1, 1], [], []>} : vector<2x256xf32>, vector<256x16xf32>, vector<2x16xf32> -> vector<2x16xf32>
    %186 = arith.mulf %183, %183 : vector<2x16xf32>
    %187 = arith.subf %185, %186 : vector<2x16xf32>
    %cst_101 = arith.constant 0.000000e+00 : f32
    %188 = vector.broadcast %cst_101 : f32 to vector<2x16xf32>
    %189 = arith.maximumf %187, %188 : vector<2x16xf32>
    %cst_102 = arith.constant 9.99999974E-6 : f32
    %190 = vector.broadcast %cst_102 : f32 to vector<2x16xf32>
    %191 = arith.addf %189, %190 : vector<2x16xf32>
    %192 = math.rsqrt %191 : vector<2x16xf32>
    %c0_103 = arith.constant 0 : index
    %c0_104 = arith.constant 0 : index
    %193 = vector.load %arg6[%c0_103, %c0_104] : memref<1x16xf32, #tpu.memory_space<vmem>>, vector<1x16xf32>
    %194 = vector.broadcast %193 : vector<1x16xf32> to vector<2x16xf32>
    %195 = arith.mulf %192, %194 : vector<2x16xf32>
    %c0_105 = arith.constant 0 : index
    %c0_106 = arith.constant 0 : index
    %196 = vector.load %arg7[%c0_105, %c0_106] : memref<1x16xf32, #tpu.memory_space<vmem>>, vector<1x16xf32>
    %197 = arith.mulf %183, %195 : vector<2x16xf32>
    %198 = vector.broadcast %196 : vector<1x16xf32> to vector<2x16xf32>
    %199 = arith.subf %198, %197 : vector<2x16xf32>
    %c0_107 = arith.constant 0 : index
    %c0_108 = arith.constant 0 : index
    %200 = vector.load %arg12[%c0_107, %c0_108] : memref<16x256xf32, #tpu.memory_space<vmem>>, vector<16x256xf32>
    %cst_109 = arith.constant dense<0.000000e+00> : vector<2x256xf32>
    %201 = tpu.matmul %195, %200, %cst_109 {dimension_numbers = #tpu.dot_dimension_numbers<[1], [0], [0], [1], [0, 0, 1, 1], [], []>} : vector<2x16xf32>, vector<16x256xf32>, vector<2x256xf32> -> vector<2x256xf32>
    %c0_110 = arith.constant 0 : index
    %c0_111 = arith.constant 0 : index
    %202 = vector.load %arg12[%c0_110, %c0_111] : memref<16x256xf32, #tpu.memory_space<vmem>>, vector<16x256xf32>
    %cst_112 = arith.constant dense<0.000000e+00> : vector<2x256xf32>
    %203 = tpu.matmul %199, %202, %cst_112 {dimension_numbers = #tpu.dot_dimension_numbers<[1], [0], [0], [1], [0, 0, 1, 1], [], []>} : vector<2x16xf32>, vector<16x256xf32>, vector<2x256xf32> -> vector<2x256xf32>
    %204 = vector.shape_cast %201 : vector<2x256xf32> to vector<2x1x256xf32>
    %205 = vector.broadcast %204 : vector<2x1x256xf32> to vector<2x16x256xf32>
    %206 = arith.mulf %178, %205 : vector<2x16x256xf32>
    %207 = vector.shape_cast %203 : vector<2x256xf32> to vector<2x1x256xf32>
    %208 = vector.broadcast %207 : vector<2x1x256xf32> to vector<2x16x256xf32>
    %209 = arith.addf %206, %208 : vector<2x16x256xf32>
    %210 = vector.shape_cast %209 : vector<2x16x256xf32> to vector<32x256xf32>
    %cst_113 = arith.constant 0.000000e+00 : f32
    %211 = vector.broadcast %cst_113 : f32 to vector<32x256xf32>
    %212 = arith.cmpf ogt, %210, %211 : vector<32x256xf32>
    %cst_114 = arith.constant 0.000000e+00 : f32
    %213 = vector.broadcast %cst_114 : f32 to vector<32x256xf32>
    %214 = arith.minimumf %210, %213 : vector<32x256xf32>
    %215 = math.exp %214 : vector<32x256xf32>
    %cst_115 = arith.constant 1.000000e+00 : f32
    %216 = vector.broadcast %cst_115 : f32 to vector<32x256xf32>
    %217 = arith.subf %215, %216 : vector<32x256xf32>
    %218 = arith.select %212, %210, %217 : vector<32x256xi1>, vector<32x256xf32>
    %c8_116 = arith.constant 8 : index
    %c0_117 = arith.constant 0 : index
    %219 = vector.load %arg14[%c8_116, %c0_117] : memref<48x256xf32, #tpu.memory_space<vmem>>, vector<32x256xf32>
    tpu.vector_store %arg14[%c8_116, %c0_117], %218 {strides = array<i32>} : memref<48x256xf32, #tpu.memory_space<vmem>>, vector<32x256xf32>,
    %cst_118 = arith.constant 0.000000e+00 : f32
    %220 = vector.broadcast %cst_118 : f32 to vector<32x256xf32>
    %c7_119 = arith.constant 7 : index
    %c0_120 = arith.constant 0 : index
    %221 = vector.load %arg14[%c7_119, %c0_120] : memref<48x256xf32, #tpu.memory_space<vmem>>, vector<32x256xf32>
    %c-1_i32_121 = arith.constant -1 : i32
    %222 = vector.broadcast %c-1_i32_121 : i32 to vector<32x1xi32>
    %223 = arith.addi %16, %222 : vector<32x1xi32>
    %c0_i32_122 = arith.constant 0 : i32
    %224 = vector.broadcast %c0_i32_122 : i32 to vector<32x1xi32>
    %225 = arith.cmpi sge, %223, %224 : vector<32x1xi32>
    %c-1_i32_123 = arith.constant -1 : i32
    %226 = vector.broadcast %c-1_i32_123 : i32 to vector<32x1xi32>
    %227 = arith.addi %16, %226 : vector<32x1xi32>
    %c15_i32_124 = arith.constant 15 : i32
    %228 = vector.broadcast %c15_i32_124 : i32 to vector<32x1xi32>
    %229 = arith.cmpi sle, %227, %228 : vector<32x1xi32>
    %230 = arith.andi %225, %229 : vector<32x1xi1>
    %cst_125 = arith.constant 0.000000e+00 : f32
    %231 = vector.shape_cast %230 : vector<32x1xi1> to vector<32x1xi1>
    %232 = vector.broadcast %231 : vector<32x1xi1> to vector<32x256xi1>
    %233 = vector.broadcast %cst_125 : f32 to vector<32x256xf32>
    %234 = arith.select %232, %221, %233 : vector<32x256xi1>, vector<32x256xf32>
    %235 = arith.truncf %234 : vector<32x256xf32> to vector<32x256xbf16>
    %c0_126 = arith.constant 0 : index
    %c0_127 = arith.constant 0 : index
    %c0_128 = arith.constant 0 : index
    %236 = vector.load %arg8[%c0_126, %c0_127, %c0_128] : memref<3x256x256xbf16, #tpu.memory_space<vmem>>, vector<1x256x256xbf16>
    %237 = vector.shape_cast %236 : vector<1x256x256xbf16> to vector<256x256xbf16>
    %cst_129 = arith.constant dense<0.000000e+00> : vector<32x256xf32>
    %238 = tpu.matmul %235, %237, %cst_129 {dimension_numbers = #tpu.dot_dimension_numbers<[1], [0], [0], [1], [0, 0, 1, 1], [], []>} : vector<32x256xbf16>, vector<256x256xbf16>, vector<32x256xf32> -> vector<32x256xf32>
    %239 = arith.addf %220, %238 : vector<32x256xf32>
    %c8_130 = arith.constant 8 : index
    %c0_131 = arith.constant 0 : index
    %240 = vector.load %arg14[%c8_130, %c0_131] : memref<48x256xf32, #tpu.memory_space<vmem>>, vector<32x256xf32>
    %c0_i32_132 = arith.constant 0 : i32
    %241 = vector.broadcast %c0_i32_132 : i32 to vector<32x1xi32>
    %242 = arith.addi %16, %241 : vector<32x1xi32>
    %c0_i32_133 = arith.constant 0 : i32
    %243 = vector.broadcast %c0_i32_133 : i32 to vector<32x1xi32>
    %244 = arith.cmpi sge, %242, %243 : vector<32x1xi32>
    %c0_i32_134 = arith.constant 0 : i32
    %245 = vector.broadcast %c0_i32_134 : i32 to vector<32x1xi32>
    %246 = arith.addi %16, %245 : vector<32x1xi32>
    %c15_i32_135 = arith.constant 15 : i32
    %247 = vector.broadcast %c15_i32_135 : i32 to vector<32x1xi32>
    %248 = arith.cmpi sle, %246, %247 : vector<32x1xi32>
    %249 = arith.andi %244, %248 : vector<32x1xi1>
    %cst_136 = arith.constant 0.000000e+00 : f32
    %250 = vector.shape_cast %249 : vector<32x1xi1> to vector<32x1xi1>
    %251 = vector.broadcast %250 : vector<32x1xi1> to vector<32x256xi1>
    %252 = vector.broadcast %cst_136 : f32 to vector<32x256xf32>
    %253 = arith.select %251, %240, %252 : vector<32x256xi1>, vector<32x256xf32>
    %254 = arith.truncf %253 : vector<32x256xf32> to vector<32x256xbf16>
    %c1_137 = arith.constant 1 : index
    %c0_138 = arith.constant 0 : index
    %c0_139 = arith.constant 0 : index
    %255 = vector.load %arg8[%c1_137, %c0_138, %c0_139] : memref<3x256x256xbf16, #tpu.memory_space<vmem>>, vector<1x256x256xbf16>
    %256 = vector.shape_cast %255 : vector<1x256x256xbf16> to vector<256x256xbf16>
    %cst_140 = arith.constant dense<0.000000e+00> : vector<32x256xf32>
    %257 = tpu.matmul %254, %256, %cst_140 {dimension_numbers = #tpu.dot_dimension_numbers<[1], [0], [0], [1], [0, 0, 1, 1], [], []>} : vector<32x256xbf16>, vector<256x256xbf16>, vector<32x256xf32> -> vector<32x256xf32>
    %258 = arith.addf %239, %257 : vector<32x256xf32>
    %c9_141 = arith.constant 9 : index
    %c0_142 = arith.constant 0 : index
    %259 = vector.load %arg14[%c9_141, %c0_142] : memref<48x256xf32, #tpu.memory_space<vmem>>, vector<32x256xf32>
    %c1_i32_143 = arith.constant 1 : i32
    %260 = vector.broadcast %c1_i32_143 : i32 to vector<32x1xi32>
    %261 = arith.addi %16, %260 : vector<32x1xi32>
    %c0_i32_144 = arith.constant 0 : i32
    %262 = vector.broadcast %c0_i32_144 : i32 to vector<32x1xi32>
    %263 = arith.cmpi sge, %261, %262 : vector<32x1xi32>
    %c1_i32_145 = arith.constant 1 : i32
    %264 = vector.broadcast %c1_i32_145 : i32 to vector<32x1xi32>
    %265 = arith.addi %16, %264 : vector<32x1xi32>
    %c15_i32_146 = arith.constant 15 : i32
    %266 = vector.broadcast %c15_i32_146 : i32 to vector<32x1xi32>
    %267 = arith.cmpi sle, %265, %266 : vector<32x1xi32>
    %268 = arith.andi %263, %267 : vector<32x1xi1>
    %cst_147 = arith.constant 0.000000e+00 : f32
    %269 = vector.shape_cast %268 : vector<32x1xi1> to vector<32x1xi1>
    %270 = vector.broadcast %269 : vector<32x1xi1> to vector<32x256xi1>
    %271 = vector.broadcast %cst_147 : f32 to vector<32x256xf32>
    %272 = arith.select %270, %259, %271 : vector<32x256xi1>, vector<32x256xf32>
    %273 = arith.truncf %272 : vector<32x256xf32> to vector<32x256xbf16>
    %c2_148 = arith.constant 2 : index
    %c0_149 = arith.constant 0 : index
    %c0_150 = arith.constant 0 : index
    %274 = vector.load %arg8[%c2_148, %c0_149, %c0_150] : memref<3x256x256xbf16, #tpu.memory_space<vmem>>, vector<1x256x256xbf16>
    %275 = vector.shape_cast %274 : vector<1x256x256xbf16> to vector<256x256xbf16>
    %cst_151 = arith.constant dense<0.000000e+00> : vector<32x256xf32>
    %276 = tpu.matmul %273, %275, %cst_151 {dimension_numbers = #tpu.dot_dimension_numbers<[1], [0], [0], [1], [0, 0, 1, 1], [], []>} : vector<32x256xbf16>, vector<256x256xbf16>, vector<32x256xf32> -> vector<32x256xf32>
    %277 = arith.addf %258, %276 : vector<32x256xf32>
    %278 = vector.shape_cast %277 : vector<32x256xf32> to vector<2x16x256xf32>
    %cst_152 = arith.constant dense<0.000000e+00> : vector<2x256xf32>
    %279 = vector.multi_reduction <add>, %278, %cst_152 [1] : vector<2x16x256xf32> to vector<2x256xf32>
    %280 = arith.mulf %278, %278 : vector<2x16x256xf32>
    %cst_153 = arith.constant dense<0.000000e+00> : vector<2x256xf32>
    %281 = vector.multi_reduction <add>, %280, %cst_153 [1] : vector<2x16x256xf32> to vector<2x256xf32>
    %c0_154 = arith.constant 0 : index
    %c0_155 = arith.constant 0 : index
    %282 = vector.load %arg11[%c0_154, %c0_155] : memref<256x16xf32, #tpu.memory_space<vmem>>, vector<256x16xf32>
    %cst_156 = arith.constant dense<0.000000e+00> : vector<2x16xf32>
    %283 = tpu.matmul %279, %282, %cst_156 {dimension_numbers = #tpu.dot_dimension_numbers<[1], [0], [0], [1], [0, 0, 1, 1], [], []>} : vector<2x256xf32>, vector<256x16xf32>, vector<2x16xf32> -> vector<2x16xf32>
    %c0_157 = arith.constant 0 : index
    %c0_158 = arith.constant 0 : index
    %284 = vector.load %arg11[%c0_157, %c0_158] : memref<256x16xf32, #tpu.memory_space<vmem>>, vector<256x16xf32>
    %cst_159 = arith.constant dense<0.000000e+00> : vector<2x16xf32>
    %285 = tpu.matmul %281, %284, %cst_159 {dimension_numbers = #tpu.dot_dimension_numbers<[1], [0], [0], [1], [0, 0, 1, 1], [], []>} : vector<2x256xf32>, vector<256x16xf32>, vector<2x16xf32> -> vector<2x16xf32>
    %286 = arith.mulf %283, %283 : vector<2x16xf32>
    %287 = arith.subf %285, %286 : vector<2x16xf32>
    %cst_160 = arith.constant 0.000000e+00 : f32
    %288 = vector.broadcast %cst_160 : f32 to vector<2x16xf32>
    %289 = arith.maximumf %287, %288 : vector<2x16xf32>
    %cst_161 = arith.constant 9.99999974E-6 : f32
    %290 = vector.broadcast %cst_161 : f32 to vector<2x16xf32>
    %291 = arith.addf %289, %290 : vector<2x16xf32>
    %292 = math.rsqrt %291 : vector<2x16xf32>
    %c0_162 = arith.constant 0 : index
    %c0_163 = arith.constant 0 : index
    %293 = vector.load %arg9[%c0_162, %c0_163] : memref<1x16xf32, #tpu.memory_space<vmem>>, vector<1x16xf32>
    %294 = vector.broadcast %293 : vector<1x16xf32> to vector<2x16xf32>
    %295 = arith.mulf %292, %294 : vector<2x16xf32>
    %c0_164 = arith.constant 0 : index
    %c0_165 = arith.constant 0 : index
    %296 = vector.load %arg10[%c0_164, %c0_165] : memref<1x16xf32, #tpu.memory_space<vmem>>, vector<1x16xf32>
    %297 = arith.mulf %283, %295 : vector<2x16xf32>
    %298 = vector.broadcast %296 : vector<1x16xf32> to vector<2x16xf32>
    %299 = arith.subf %298, %297 : vector<2x16xf32>
    %c0_166 = arith.constant 0 : index
    %c0_167 = arith.constant 0 : index
    %300 = vector.load %arg12[%c0_166, %c0_167] : memref<16x256xf32, #tpu.memory_space<vmem>>, vector<16x256xf32>
    %cst_168 = arith.constant dense<0.000000e+00> : vector<2x256xf32>
    %301 = tpu.matmul %295, %300, %cst_168 {dimension_numbers = #tpu.dot_dimension_numbers<[1], [0], [0], [1], [0, 0, 1, 1], [], []>} : vector<2x16xf32>, vector<16x256xf32>, vector<2x256xf32> -> vector<2x256xf32>
    %c0_169 = arith.constant 0 : index
    %c0_170 = arith.constant 0 : index
    %302 = vector.load %arg12[%c0_169, %c0_170] : memref<16x256xf32, #tpu.memory_space<vmem>>, vector<16x256xf32>
    %cst_171 = arith.constant dense<0.000000e+00> : vector<2x256xf32>
    %303 = tpu.matmul %299, %302, %cst_171 {dimension_numbers = #tpu.dot_dimension_numbers<[1], [0], [0], [1], [0, 0, 1, 1], [], []>} : vector<2x16xf32>, vector<16x256xf32>, vector<2x256xf32> -> vector<2x256xf32>
    %304 = vector.shape_cast %301 : vector<2x256xf32> to vector<2x1x256xf32>
    %305 = vector.broadcast %304 : vector<2x1x256xf32> to vector<2x16x256xf32>
    %306 = arith.mulf %278, %305 : vector<2x16x256xf32>
    %307 = vector.shape_cast %303 : vector<2x256xf32> to vector<2x1x256xf32>
    %308 = vector.broadcast %307 : vector<2x1x256xf32> to vector<2x16x256xf32>
    %309 = arith.addf %306, %308 : vector<2x16x256xf32>
    %310 = vector.shape_cast %309 : vector<2x16x256xf32> to vector<32x256xf32>
    %c0_172 = arith.constant 0 : index
    %c0_173 = arith.constant 0 : index
    %311 = vector.load %arg15[%c0_172, %c0_173] : memref<32x256xf32, #tpu.memory_space<vmem>>, vector<32x256xf32>
    %312 = arith.addf %310, %311 : vector<32x256xf32>
    %cst_174 = arith.constant 0.000000e+00 : f32
    %313 = vector.broadcast %cst_174 : f32 to vector<32x256xf32>
    %314 = arith.cmpf ogt, %312, %313 : vector<32x256xf32>
    %cst_175 = arith.constant 0.000000e+00 : f32
    %315 = vector.broadcast %cst_175 : f32 to vector<32x256xf32>
    %316 = arith.minimumf %312, %315 : vector<32x256xf32>
    %317 = math.exp %316 : vector<32x256xf32>
    %cst_176 = arith.constant 1.000000e+00 : f32
    %318 = vector.broadcast %cst_176 : f32 to vector<32x256xf32>
    %319 = arith.subf %317, %318 : vector<32x256xf32>
    %320 = arith.select %314, %312, %319 : vector<32x256xi1>, vector<32x256xf32>
    %c0_177 = arith.constant 0 : index
    %c0_178 = arith.constant 0 : index
    %321 = vector.load %arg13[%c0_177, %c0_178] : memref<32x256xf32, #tpu.memory_space<vmem>>, vector<32x256xf32>
    tpu.vector_store %arg13[%c0_177, %c0_178], %320 {strides = array<i32>} : memref<32x256xf32, #tpu.memory_space<vmem>>, vector<32x256xf32>,
    return
  }
  func.func @transform_0(%arg0: i32) -> (i32, i32) {
    %c0_i32 = arith.constant 0 : i32
    %c0_i32_0 = arith.constant 0 : i32
    return %arg0, %c0_i32 : i32, i32
  }
  func.func @transform_1(%arg0: i32) -> (i32, i32, i32) {
    %c0_i32 = arith.constant 0 : i32
    %c0_i32_0 = arith.constant 0 : i32
    %c0_i32_1 = arith.constant 0 : i32
    %c0_i32_2 = arith.constant 0 : i32
    return %c0_i32, %c0_i32_0, %c0_i32_1 : i32, i32, i32
  }
  func.func @transform_2(%arg0: i32) -> (i32, i32) {
    %c0_i32 = arith.constant 0 : i32
    %c0_i32_0 = arith.constant 0 : i32
    %c0_i32_1 = arith.constant 0 : i32
    return %c0_i32, %c0_i32_0 : i32, i32
  }
  func.func @transform_3(%arg0: i32) -> (i32, i32) {
    %c0_i32 = arith.constant 0 : i32
    %c0_i32_0 = arith.constant 0 : i32
    %c0_i32_1 = arith.constant 0 : i32
    return %c0_i32, %c0_i32_0 : i32, i32
  }
  func.func @transform_4(%arg0: i32) -> (i32, i32, i32) {
    %c0_i32 = arith.constant 0 : i32
    %c0_i32_0 = arith.constant 0 : i32
    %c0_i32_1 = arith.constant 0 : i32
    %c0_i32_2 = arith.constant 0 : i32
    return %c0_i32, %c0_i32_0, %c0_i32_1 : i32, i32, i32
  }
  func.func @transform_5(%arg0: i32) -> (i32, i32) {
    %c0_i32 = arith.constant 0 : i32
    %c0_i32_0 = arith.constant 0 : i32
    %c0_i32_1 = arith.constant 0 : i32
    return %c0_i32, %c0_i32_0 : i32, i32
  }
  func.func @transform_6(%arg0: i32) -> (i32, i32) {
    %c0_i32 = arith.constant 0 : i32
    %c0_i32_0 = arith.constant 0 : i32
    %c0_i32_1 = arith.constant 0 : i32
    return %c0_i32, %c0_i32_0 : i32, i32
  }
  func.func @transform_7(%arg0: i32) -> (i32, i32, i32) {
    %c0_i32 = arith.constant 0 : i32
    %c0_i32_0 = arith.constant 0 : i32
    %c0_i32_1 = arith.constant 0 : i32
    %c0_i32_2 = arith.constant 0 : i32
    return %c0_i32, %c0_i32_0, %c0_i32_1 : i32, i32, i32
  }
  func.func @transform_8(%arg0: i32) -> (i32, i32) {
    %c0_i32 = arith.constant 0 : i32
    %c0_i32_0 = arith.constant 0 : i32
    %c0_i32_1 = arith.constant 0 : i32
    return %c0_i32, %c0_i32_0 : i32, i32
  }
  func.func @transform_9(%arg0: i32) -> (i32, i32) {
    %c0_i32 = arith.constant 0 : i32
    %c0_i32_0 = arith.constant 0 : i32
    %c0_i32_1 = arith.constant 0 : i32
    return %c0_i32, %c0_i32_0 : i32, i32
  }
  func.func @transform_10(%arg0: i32) -> (i32, i32) {
    %c0_i32 = arith.constant 0 : i32
    %c0_i32_0 = arith.constant 0 : i32
    %c0_i32_1 = arith.constant 0 : i32
    return %c0_i32, %c0_i32_0 : i32, i32
  }
  func.func @transform_11(%arg0: i32) -> (i32, i32) {
    %c0_i32 = arith.constant 0 : i32
    %c0_i32_0 = arith.constant 0 : i32
    %c0_i32_1 = arith.constant 0 : i32
    return %c0_i32, %c0_i32_0 : i32, i32
  }
  func.func @transform_12(%arg0: i32) -> (i32, i32) {
    %c0_i32 = arith.constant 0 : i32
    %c0_i32_0 = arith.constant 0 : i32
    return %arg0, %c0_i32 : i32, i32
  }
}

</mosaic_0001>

<llo_original>
// kernel: tpu_custom_call.1
$region0: #{tpu_custom_call.1}
  #allocation0 [shape = 'u32[]', space=smem, size = 0x4, offset = 0x4, fixed_abs, tag = 'smem constant byte address 0x4 - core index']
  #allocation1 [shape = 'u32[144,128]{1,0:T(1,128)}', space=vmem, size = 0x12000, scoped, tag = 'internal scratch']
  #allocation2 [shape = 'f32[48,256]{1,0:T(8,128)}', space=vmem, size = 0xc000, scoped, tag = 'scratch operand']
  #allocation3 [shape = 'f32[32,256]{1,0:T(8,128)}', space=vmem, size = 0x8000, scoped, tag = 'scratch operand']
  %s0 = inlined_call_operand.vmem [shape: f32[32,64], index: 0, kind: input, shape index: {}]
  %s1 = inlined_call_operand.vmem [shape: bf16[3,64,256], index: 1, kind: input, shape index: {}]
  %s2 = inlined_call_operand.vmem [shape: f32[1,16], index: 2, kind: input, shape index: {}]
  %s3 = inlined_call_operand.vmem [shape: f32[1,16], index: 3, kind: input, shape index: {}]
  %s4 = inlined_call_operand.hbm [shape: bf16[3,256,256], index: 4, kind: input, shape index: {}]
  %s5 = inlined_call_operand.vmem [shape: f32[1,16], index: 5, kind: input, shape index: {}]
  %s6 = inlined_call_operand.vmem [shape: f32[1,16], index: 6, kind: input, shape index: {}]
  %s7 = inlined_call_operand.hbm [shape: bf16[3,256,256], index: 7, kind: input, shape index: {}]
  %s8 = inlined_call_operand.vmem [shape: f32[1,16], index: 8, kind: input, shape index: {}]
  %s9 = inlined_call_operand.vmem [shape: f32[1,16], index: 9, kind: input, shape index: {}]
  %s10 = inlined_call_operand.vmem [shape: f32[256,16], index: 10, kind: input, shape index: {}]
  %s11 = inlined_call_operand.vmem [shape: f32[16,256], index: 11, kind: input, shape index: {}]
  %s12 = inlined_call_operand.hbm [shape: f32[32,256], index: 12, kind: output, shape index: {}]
  %s13 = sld [smem:[#allocation0]]
  $region66: #{tpu_custom_call.1} parent=0
    _
  %s15 = ssub.s32 1, %s13
  %s16 = scalar_select 0, %s15, %s13
  $region1: #{tpu_custom_call.1} parent=0
    #allocation4 [shape = 'u8[393216]{0}', space=vmem, size = 0x60000, scoped, tag = 'input window, operand 4, single buffered']
    #allocation5 [shape = 's32[1]{0}', space=sflag, size = 0x4, scoped, tag = 'scoped memory for tpu_custom_call.1']
    #allocation6 [shape = 's32[1]{0}', space=sflag, size = 0x4, scoped, tag = 'scoped memory for tpu_custom_call.1']
    #allocation7 [shape = 'u8[393216]{0}', space=vmem, size = 0x60000, scoped, tag = 'input window, operand 7, single buffered']
    #allocation8 [shape = 's32[1]{0}', space=sflag, size = 0x4, scoped, tag = 'scoped memory for tpu_custom_call.1']
    #allocation9 [shape = 'u8[32768]{0}', space=vmem, size = 0x8000, scoped, tag = 'output window, operand 0, single buffered']
    %17 = vsyncpa [#allocation5], 0
    %18 = vsyncpa [#allocation8], 0
    %19 = vsyncpa [#allocation6], 0
    // Predicated region
    $region2: #{tpu_custom_call.1} parent=1 // pred_check
      _
    $region3: #{tpu_custom_call.1} parent=1 // pred_check_branch
      %21 = sbr.rel (0) target = $region5
    $region4: #{tpu_custom_call.1} parent=1 // pred_region
      _
    $region5: #{tpu_custom_call.1} parent=1 // pred_fallthru
      _
    // Predicated region
    $region6: #{tpu_custom_call.1} parent=1 // pred_check
      _
    $region7: #{tpu_custom_call.1} parent=1 // pred_check_branch
      %23 = sbr.rel (0) target = $region9
    $region8: #{tpu_custom_call.1} parent=1 // pred_region
      _
    $region9: #{tpu_custom_call.1} parent=1 // pred_fallthru
      _
    // Predicated region
    $region10: #{tpu_custom_call.1} parent=1 // pred_check
      _
    $region11: #{tpu_custom_call.1} parent=1 // pred_check_branch
      %25 = sbr.rel (0) target = $region13
    $region12: #{tpu_custom_call.1} parent=1 // pred_region
      _
    $region13: #{tpu_custom_call.1} parent=1 // pred_fallthru
      _
    // Predicated region
    $region14: #{tpu_custom_call.1} parent=1 // pred_check
      _
    $region15: #{tpu_custom_call.1} parent=1 // pred_check_branch
      %27 = sbr.rel (0) target = $region17
    $region16: #{tpu_custom_call.1} parent=1 // pred_region
      _
    $region17: #{tpu_custom_call.1} parent=1 // pred_fallthru
      _
    // Predicated region
    $region18: #{tpu_custom_call.1} parent=1 // pred_check
      _
    $region19: #{tpu_custom_call.1} parent=1 // pred_check_branch
      %29 = sbr.rel (0) target = $region21
    $region20: #{tpu_custom_call.1} parent=1 // pred_region
      %s31 = ssub.s32 12288, 12288
      %32 = vsyncadd [#allocation5], %s31
      %s33 = sshll.u32 [#allocation4], 4
      %s34 = int_to_ptr.vmem [resolvable:$true] %s33
      %39 = dma.hbm_to_vmem [thread:$0]  %s4, 12288, %s34, [#allocation5], 128, 128, 8
    $region21: #{tpu_custom_call.1} parent=1 // pred_fallthru
      _
    // Predicated region
    $region22: #{tpu_custom_call.1} parent=1 // pred_check
      _
    $region23: #{tpu_custom_call.1} parent=1 // pred_check_branch
      %41 = sbr.rel (0) target = $region25
    $region24: #{tpu_custom_call.1} parent=1 // pred_region
      _
    $region25: #{tpu_custom_call.1} parent=1 // pred_fallthru
      _
    // Predicated region
    $region26: #{tpu_custom_call.1} parent=1 // pred_check
      _
    $region27: #{tpu_custom_call.1} parent=1 // pred_check_branch
      %43 = sbr.rel (0) target = $region29
    $region28: #{tpu_custom_call.1} parent=1 // pred_region
      _
    $region29: #{tpu_custom_call.1} parent=1 // pred_fallthru
      _
    // Predicated region
    $region30: #{tpu_custom_call.1} parent=1 // pred_check
      _
    $region31: #{tpu_custom_call.1} parent=1 // pred_check_branch
      %45 = sbr.rel (0) target = $region33
    $region32: #{tpu_custom_call.1} parent=1 // pred_region
      %s47 = ssub.s32 12288, 12288
      %48 = vsyncadd [#allocation8], %s47
      %s49 = sshll.u32 [#allocation7], 4
      %s50 = int_to_ptr.vmem [resolvable:$true] %s49
      %55 = dma.hbm_to_vmem [thread:$0]  %s7, 12288, %s50, [#allocation8], 128, 128, 8
    $region33: #{tpu_custom_call.1} parent=1 // pred_fallthru
      _
    // Predicated region
    $region34: #{tpu_custom_call.1} parent=1 // pred_check
      _
    $region35: #{tpu_custom_call.1} parent=1 // pred_check_branch
      %57 = sbr.rel (0) target = $region37
    $region36: #{tpu_custom_call.1} parent=1 // pred_region
      _
    $region37: #{tpu_custom_call.1} parent=1 // pred_fallthru
      _
    // Predicated region
    $region38: #{tpu_custom_call.1} parent=1 // pred_check
      _
    $region39: #{tpu_custom_call.1} parent=1 // pred_check_branch
      %59 = sbr.rel (0) target = $region41
    $region40: #{tpu_custom_call.1} parent=1 // pred_region
      _
    $region41: #{tpu_custom_call.1} parent=1 // pred_fallthru
      _
    // Predicated region
    $region42: #{tpu_custom_call.1} parent=1 // pred_check
      _
    $region43: #{tpu_custom_call.1} parent=1 // pred_check_branch
      %61 = sbr.rel (0) target = $region45
    $region44: #{tpu_custom_call.1} parent=1 // pred_region
      _
    $region45: #{tpu_custom_call.1} parent=1 // pred_fallthru
      _
    // Predicated region
    $region46: #{tpu_custom_call.1} parent=1 // pred_check
      _
    $region47: #{tpu_custom_call.1} parent=1 // pred_check_branch
      %63 = sbr.rel (0) target = $region49
    $region48: #{tpu_custom_call.1} parent=1 // pred_region
      _
    $region49: #{tpu_custom_call.1} parent=1 // pred_fallthru
      _
    // Predicated region
    $region50: #{tpu_custom_call.1} parent=1 // pred_check
      _
    $region51: #{tpu_custom_call.1} parent=1 // pred_check_branch
      %65 = sbr.rel (0) target = $region53
    $region52: #{tpu_custom_call.1} parent=1 // pred_region
      %66 = dma.done [#allocation5], 12288
    $region53: #{tpu_custom_call.1} parent=1 // pred_fallthru
      _
    // Predicated region
    $region54: #{tpu_custom_call.1} parent=1 // pred_check
      _
    $region55: #{tpu_custom_call.1} parent=1 // pred_check_branch
      %68 = sbr.rel (0) target = $region57
    $region56: #{tpu_custom_call.1} parent=1 // pred_region
      %69 = dma.done [#allocation8], 12288
    $region57: #{tpu_custom_call.1} parent=1 // pred_fallthru
      _
    %v71 = vlaneseq
    %v72 = vshrl.u32 %v71, 7
    %v73 = vadd.s32 %v72, 8
    %v74 = vadd.s32 %v72, 16
    %v75 = vadd.s32 %v72, 24
    %vm76 = vcmp.lt.s32.totalorder %v72, 0
    %v77 = vsub.s32 0, %v72
    %v78 = vsel %vm76, %v77, %v72
    %v79 = vshrl.u32 %v78, 4
    %v80 = vand.u32 %v78, 15
    %v81 = vsub.s32 0, %v80
    %v82 = vsel %vm76, %v81, %v80
    %vm83 = vcmp.lt.s32.totalorder %v73, 0
    %v84 = vsub.s32 0, %v73
    %v85 = vsel %vm83, %v84, %v73
    %v86 = vshrl.u32 %v85, 4
    %v87 = vand.u32 %v85, 15
    %v88 = vsub.s32 0, %v87
    %v89 = vsel %vm83, %v88, %v87
    %vm90 = vcmp.lt.s32.totalorder %v74, 0
    %v91 = vsub.s32 0, %v74
    %v92 = vsel %vm90, %v91, %v74
    %v93 = vshrl.u32 %v92, 4
    %v94 = vand.u32 %v92, 15
    %v95 = vsub.s32 0, %v94
    %v96 = vsel %vm90, %v95, %v94
    %vm97 = vcmp.lt.s32.totalorder %v75, 0
    %v98 = vsub.s32 0, %v75
    %v99 = vsel %vm97, %v98, %v75
    %v100 = vshrl.u32 %v99, 4
    %v101 = vand.u32 %v99, 15
    %v102 = vsub.s32 0, %v101
    %v103 = vsel %vm97, %v102, %v101
    %vm104 = vcmp.ne.s32.totalorder %v82, 0
    %vm105 = vcmp.ne.s32.totalorder %v89, 0
    %vm106 = vcmp.ne.s32.totalorder %v96, 0
    %vm107 = vcmp.ne.s32.totalorder %v103, 0
    %vm108 = vcmp.lt.s32.totalorder %v82, 0
    %vm109 = vcmp.lt.s32.totalorder %v89, 0
    %vm110 = vcmp.lt.s32.totalorder %v96, 0
    %vm111 = vcmp.lt.s32.totalorder %v103, 0
    %vm112 = vmand %vm108, %vm104
    %vm113 = vmand %vm109, %vm105
    %vm114 = vmand %vm110, %vm106
    %vm115 = vmand %vm111, %vm107
    %v116 = vadd.s32 %v82, 16
    %v117 = vadd.s32 %v89, 16
    %v118 = vadd.s32 %v96, 16
    %v119 = vadd.s32 %v103, 16
    %v120 = vsel %vm112, %v116, %v82
    %v121 = vsel %vm113, %v117, %v89
    %v122 = vsel %vm114, %v118, %v96
    %v123 = vsel %vm115, %v119, %v103
    %v124 = vld [vmem:[%s0] sm:$0xff]
    %v125 = vld [vmem:[%s0 + $0x8] sm:$0xff]
    %v126 = vld [vmem:[%s0 + $0x10] sm:$0xff]
    %v127 = vld [vmem:[%s0 + $0x18] sm:$0xff]
    %vm128 = vcmask 523264
    %129 = vst.msk [vmem:[#allocation2 + $0x10] sm:$0xff] %vm128, %v124
    %130 = vst.msk [vmem:[#allocation2 + $0x20] sm:$0xff] %vm128, %v125
    %131 = vst.msk [vmem:[#allocation2 + $0x30] sm:$0xff] %vm128, %v126
    %132 = vst.msk [vmem:[#allocation2 + $0x40] sm:$0xff] %vm128, %v127
    %v133 = vld [vmem:[#allocation2] sm:$0x80]
    %v134 = vld [vmem:[#allocation2 + $0x10] sm:$0xff]
    %v135 = vld [vmem:[#allocation2 + $0x20] sm:$0xff]
    %v136 = vld [vmem:[#allocation2 + $0x30] sm:$0xff]
    %v137 = vld [vmem:[#allocation2 + $0x40] sm:$0x7f]
    %v138 = vadd.s32 %v120, 4294967295
    %v139 = vadd.s32 %v121, 4294967295
    %v140 = vadd.s32 %v122, 4294967295
    %v141 = vadd.s32 %v123, 4294967295
    %vm142 = vcmp.ge.s32.totalorder %v138, 0
    %vm143 = vcmp.ge.s32.totalorder %v139, 0
    %vm144 = vcmp.ge.s32.totalorder %v140, 0
    %vm145 = vcmp.ge.s32.totalorder %v141, 0
    %vm146 = vcmp.le.s32.totalorder %v138, 15
    %vm147 = vcmp.le.s32.totalorder %v139, 15
    %vm148 = vcmp.le.s32.totalorder %v140, 15
    %vm149 = vcmp.le.s32.totalorder %v141, 15
    %vm150 = vmand %vm142, %vm146
    %vm151 = vmand %vm143, %vm147
    %vm152 = vmand %vm144, %vm148
    %vm153 = vmand %vm145, %vm149
    %v154 = vsel %vm150, 1, 0
    %v155 = vsel %vm151, 1, 0
    %v156 = vsel %vm152, 1, 0
    %v157 = vsel %vm153, 1, 0
    %vm158 = vcmp.eq.s32.totalorder %v154, 1
    %vm159 = vcmp.eq.s32.totalorder %v155, 1
    %vm160 = vcmp.eq.s32.totalorder %v156, 1
    %vm161 = vcmp.eq.s32.totalorder %v157, 1
    %vm167 = vcmask 1040384
    %v168 = vrot.slane %v133, 7
    %v169 = vrot.slane %v134, 7
    %v170 = vsel %vm167, %v168, %v169
    %v171 = vrot.slane %v135, 7
    %v172 = vsel %vm167, %v169, %v171
    %v173 = vrot.slane %v136, 7
    %v174 = vsel %vm167, %v171, %v173
    %v175 = vrot.slane %v137, 7
    %v176 = vsel %vm167, %v173, %v175
    %v181 = vsel %vm158, %v170, 0.0
    %v182 = vsel %vm159, %v172, 0.0
    %v183 = vsel %vm160, %v174, 0.0
    %v184 = vsel %vm161, %v176, 0.0
    %v185 = vpack.c.bf16 %v182, %v181
    %v186 = vpack.c.bf16 %v184, %v183
    %v187 = vld [vmem:[%s1] sm:$0xff]
    %v188 = vld [vmem:[%s1 + $0x8] sm:$0xff]
    %v189 = vld [vmem:[%s1 + $0x10] sm:$0xff]
    %v190 = vld [vmem:[%s1 + $0x18] sm:$0xff]
    %v191 = vld [vmem:[%s1 + $0x20] sm:$0xff]
    %v192 = vld [vmem:[%s1 + $0x28] sm:$0xff]
    %v193 = vld [vmem:[%s1 + $0x30] sm:$0xff]
    %v194 = vld [vmem:[%s1 + $0x38] sm:$0xff]
    %v195 = vld [vmem:[#allocation2 + $0x40] sm:$0xff]
    %vm196 = vcmp.ge.s32.totalorder %v120, 0
    %vm197 = vcmp.ge.s32.totalorder %v121, 0
    %vm198 = vcmp.ge.s32.totalorder %v122, 0
    %vm199 = vcmp.ge.s32.totalorder %v123, 0
    %vm200 = vcmp.le.s32.totalorder %v120, 15
    %vm201 = vcmp.le.s32.totalorder %v121, 15
    %vm202 = vcmp.le.s32.totalorder %v122, 15
    %vm203 = vcmp.le.s32.totalorder %v123, 15
    %vm204 = vmand %vm196, %vm200
    %vm205 = vmand %vm197, %vm201
    %vm206 = vmand %vm198, %vm202
    %vm207 = vmand %vm199, %vm203
    %v208 = vsel %vm204, 1, 0
    %v209 = vsel %vm205, 1, 0
    %v210 = vsel %vm206, 1, 0
    %v211 = vsel %vm207, 1, 0
    %vm212 = vcmp.eq.s32.totalorder %v208, 1
    %vm213 = vcmp.eq.s32.totalorder %v209, 1
    %vm214 = vcmp.eq.s32.totalorder %v210, 1
    %vm215 = vcmp.eq.s32.totalorder %v211, 1
    %v216 = vsel %vm212, %v134, 0.0
    %v217 = vsel %vm213, %v135, 0.0
    %v218 = vsel %vm214, %v136, 0.0
    %v219 = vsel %vm215, %v195, 0.0
    %v220 = vpack.c.bf16 %v217, %v216
    %v221 = vpack.c.bf16 %v219, %v218
    %s222 = scalar_lea.vmem %s1, 64
    %v223 = vld [vmem:[%s222] sm:$0xff]
    %v224 = vld [vmem:[%s222 + $0x8] sm:$0xff]
    %v225 = vld [vmem:[%s222 + $0x10] sm:$0xff]
    %v226 = vld [vmem:[%s222 + $0x18] sm:$0xff]
    %v227 = vld [vmem:[%s222 + $0x20] sm:$0xff]
    %v228 = vld [vmem:[%s222 + $0x28] sm:$0xff]
    %v229 = vld [vmem:[%s222 + $0x30] sm:$0xff]
    %v230 = vld [vmem:[%s222 + $0x38] sm:$0xff]
    %v239 = vunpack.c.l.b16 %v223
    %v240 = vunpack.c.h.b16 %v223
    %v241 = vunpack.c.l.b16 %v224
    %v242 = vunpack.c.h.b16 %v224
    %v243 = vunpack.c.l.b16 %v225
    %v244 = vunpack.c.h.b16 %v225
    %v245 = vunpack.c.l.b16 %v226
    %v246 = vunpack.c.h.b16 %v226
    %v247 = vunpack.c.l.b16 %v227
    %v248 = vunpack.c.h.b16 %v227
    %v249 = vunpack.c.l.b16 %v228
    %v250 = vunpack.c.h.b16 %v228
    %v251 = vunpack.c.l.b16 %v229
    %v252 = vunpack.c.h.b16 %v229
    %v253 = vunpack.c.l.b16 %v230
    %v254 = vunpack.c.h.b16 %v230
    %v255 = vpack.c.b16 %v241, %v239
    %v256 = vpack.c.b16 %v242, %v240
    %v257 = vpack.c.b16 %v245, %v243
    %v258 = vpack.c.b16 %v246, %v244
    %v259 = vpack.c.b16 %v249, %v247
    %v260 = vpack.c.b16 %v250, %v248
    %v261 = vpack.c.b16 %v253, %v251
    %v262 = vpack.c.b16 %v254, %v252
    %v272 = vsel %vm128, %v220, 0
    %v275 = vsel %vm128, %v221, 0
    %277 = vmatprep.subr.bf16.mxu0 %v256
    %278 = vmatpush1.bf16.msra.mxu0 %v255
    %279 = vmatprep.subr.bf16.mxu0 %v258
    %280 = vmatpush1.bf16.msra.mxu0 %v257
    %281 = vmatprep.subr.bf16.mxu0 %v260
    %282 = vmatpush1.bf16.msra.mxu0 %v259
    %283 = vmatprep.subr.bf16.mxu0 %v262
    %284 = vmatpush1.bf16.msra.mxu0 %v261
    %285 = vmatprep.subr.bf16.mxu0 0
    %286 = vmatpush1.bf16.msra.mxu0 0
    %287 = vmatprep.subr.bf16.mxu0 0
    %288 = vmatpush1.bf16.msra.mxu0 0
    %289 = vmatprep.subr.bf16.mxu0 0
    %290 = vmatpush1.bf16.msra.mxu0 0
    %291 = vmatprep.subr.bf16.mxu0 0
    %292 = vmatpush1.bf16.msra.mxu0 0
    %293 = vmatprep.subr.bf16.mxu0 0
    %294 = vmatpush1.bf16.msra.mxu0 0
    %295 = vmatprep.subr.bf16.mxu0 0
    %296 = vmatpush1.bf16.msra.mxu0 0
    %297 = vmatprep.subr.bf16.mxu0 0
    %298 = vmatpush1.bf16.msra.mxu0 0
    %299 = vmatprep.subr.bf16.mxu0 0
    %300 = vmatpush1.bf16.msra.mxu0 0
    %301 = vmatprep.subr.bf16.mxu0 0
    %302 = vmatpush1.bf16.msra.mxu0 0
    %303 = vmatprep.subr.bf16.mxu0 0
    %304 = vmatpush1.bf16.msra.mxu0 0
    %305 = vmatprep.subr.bf16.mxu0 0
    %306 = vmatpush1.bf16.msra.mxu0 0
    %307 = vmatprep.subr.bf16.mxu0 0
    %308 = vmatpush1.bf16.msra.mxu0 0
    %309 = vmatprep.mubr.bf16.mxu0 0
    %310 = vmatmul.mubr.bf16.gmra.mrb[0].mxu0 %v272
    %v311 = vpop.f32.mrb[0].mxu0
    %v312 = vadd.f32 0.0, %v311
    %v313 = vpop.f32.mrb[0].mxu0
    %v314 = vadd.f32 0.0, %v313
    %v315 = vpop.f32.mrb[0].mxu0
    %v316 = vadd.f32 0.0, %v315
    %v317 = vpop.f32.mrb[0].mxu0
    %v318 = vadd.f32 0.0, %v317
    %319 = vmatprep.mubr.bf16.mxu0 0
    %320 = vmatmul.mubr.bf16.gmra.mrb[0].mxu0 %v275
    %v321 = vpop.f32.mrb[0].mxu0
    %v322 = vadd.f32 0.0, %v321
    %v323 = vpop.f32.mrb[0].mxu0
    %v324 = vadd.f32 0.0, %v323
    %v325 = vpop.f32.mrb[0].mxu0
    %v326 = vadd.f32 0.0, %v325
    %v327 = vpop.f32.mrb[0].mxu0
    %v328 = vadd.f32 0.0, %v327
    %329 = vdwg.mxu0
    %v338 = vunpack.c.l.b16 %v187
    %v339 = vunpack.c.h.b16 %v187
    %v340 = vunpack.c.l.b16 %v188
    %v341 = vunpack.c.h.b16 %v188
    %v342 = vunpack.c.l.b16 %v189
    %v343 = vunpack.c.h.b16 %v189
    %v344 = vunpack.c.l.b16 %v190
    %v345 = vunpack.c.h.b16 %v190
    %v346 = vunpack.c.l.b16 %v191
    %v347 = vunpack.c.h.b16 %v191
    %v348 = vunpack.c.l.b16 %v192
    %v349 = vunpack.c.h.b16 %v192
    %v350 = vunpack.c.l.b16 %v193
    %v351 = vunpack.c.h.b16 %v193
    %v352 = vunpack.c.l.b16 %v194
    %v353 = vunpack.c.h.b16 %v194
    %v354 = vpack.c.b16 %v340, %v338
    %v355 = vpack.c.b16 %v341, %v339
    %v356 = vpack.c.b16 %v344, %v342
    %v357 = vpack.c.b16 %v345, %v343
    %v358 = vpack.c.b16 %v348, %v346
    %v359 = vpack.c.b16 %v349, %v347
    %v360 = vpack.c.b16 %v352, %v350
    %v361 = vpack.c.b16 %v353, %v351
    %v371 = vsel %vm128, %v185, 0
    %v374 = vsel %vm128, %v186, 0
    %376 = vmatprep.subr.bf16.mxu0 %v355
    %377 = vmatpush1.bf16.msra.mxu0 %v354
    %378 = vmatprep.subr.bf16.mxu0 %v357
    %379 = vmatpush1.bf16.msra.mxu0 %v356
    %380 = vmatprep.subr.bf16.mxu0 %v359
    %381 = vmatpush1.bf16.msra.mxu0 %v358
    %382 = vmatprep.subr.bf16.mxu0 %v361
    %383 = vmatpush1.bf16.msra.mxu0 %v360
    %384 = vmatprep.subr.bf16.mxu0 0
    %385 = vmatpush1.bf16.msra.mxu0 0
    %386 = vmatprep.subr.bf16.mxu0 0
    %387 = vmatpush1.bf16.msra.mxu0 0
    %388 = vmatprep.subr.bf16.mxu0 0
    %389 = vmatpush1.bf16.msra.mxu0 0
    %390 = vmatprep.subr.bf16.mxu0 0
    %391 = vmatpush1.bf16.msra.mxu0 0
    %392 = vmatprep.subr.bf16.mxu0 0
    %393 = vmatpush1.bf16.msra.mxu0 0
    %394 = vmatprep.subr.bf16.mxu0 0
    %395 = vmatpush1.bf16.msra.mxu0 0
    %396 = vmatprep.subr.bf16.mxu0 0
    %397 = vmatpush1.bf16.msra.mxu0 0
    %398 = vmatprep.subr.bf16.mxu0 0
    %399 = vmatpush1.bf16.msra.mxu0 0
    %400 = vmatprep.subr.bf16.mxu0 0
    %401 = vmatpush1.bf16.msra.mxu0 0
    %402 = vmatprep.subr.bf16.mxu0 0
    %403 = vmatpush1.bf16.msra.mxu0 0
    %404 = vmatprep.subr.bf16.mxu0 0
    %405 = vmatpush1.bf16.msra.mxu0 0
    %406 = vmatprep.subr.bf16.mxu0 0
    %407 = vmatpush1.bf16.msra.mxu0 0
    %408 = vmatprep.mubr.bf16.mxu0 0
    %409 = vmatmul.mubr.bf16.gmra.mrb[0].mxu0 %v371
    %v410 = vpop.f32.mrb[0].mxu0
    %v411 = vadd.f32 %v312, %v410
    %v412 = vpop.f32.mrb[0].mxu0
    %v413 = vadd.f32 %v314, %v412
    %v414 = vpop.f32.mrb[0].mxu0
    %v415 = vadd.f32 %v316, %v414
    %v416 = vpop.f32.mrb[0].mxu0
    %v417 = vadd.f32 %v318, %v416
    %418 = vmatprep.mubr.bf16.mxu0 0
    %419 = vmatmul.mubr.bf16.gmra.mrb[0].mxu0 %v374
    %v420 = vpop.f32.mrb[0].mxu0
    %v421 = vadd.f32 %v322, %v420
    %v422 = vpop.f32.mrb[0].mxu0
    %v423 = vadd.f32 %v324, %v422
    %v424 = vpop.f32.mrb[0].mxu0
    %v425 = vadd.f32 %v326, %v424
    %v426 = vpop.f32.mrb[0].mxu0
    %v427 = vadd.f32 %v328, %v426
    %428 = vdwg.mxu0
    %v429 = vld [vmem:[#allocation2 + $0x10] sm:$0xfe]
    %v430 = vld [vmem:[#allocation2 + $0x20] sm:$0xff]
    %v431 = vld [vmem:[#allocation2 + $0x30] sm:$0xff]
    %v432 = vld [vmem:[#allocation2 + $0x40] sm:$0xff]
    %v433 = vld [vmem:[#allocation2 + $0x50] sm:$0x1]
    %v434 = vadd.s32 %v120, 1
    %v435 = vadd.s32 %v121, 1
    %v436 = vadd.s32 %v122, 1
    %v437 = vadd.s32 %v123, 1
    %vm438 = vcmp.ge.s32.totalorder %v434, 0
    %vm439 = vcmp.ge.s32.totalorder %v435, 0
    %vm440 = vcmp.ge.s32.totalorder %v436, 0
    %vm441 = vcmp.ge.s32.totalorder %v437, 0
    %vm442 = vcmp.le.s32.totalorder %v434, 15
    %vm443 = vcmp.le.s32.totalorder %v435, 15
    %vm444 = vcmp.le.s32.totalorder %v436, 15
    %vm445 = vcmp.le.s32.totalorder %v437, 15
    %vm446 = vmand %vm438, %vm442
    %vm447 = vmand %vm439, %vm443
    %vm448 = vmand %vm440, %vm444
    %vm449 = vmand %vm441, %vm445
    %v450 = vsel %vm446, 1, 0
    %v451 = vsel %vm447, 1, 0
    %v452 = vsel %vm448, 1, 0
    %v453 = vsel %vm449, 1, 0
    %vm454 = vcmp.eq.s32.totalorder %v450, 1
    %vm455 = vcmp.eq.s32.totalorder %v451, 1
    %vm456 = vcmp.eq.s32.totalorder %v452, 1
    %vm457 = vcmp.eq.s32.totalorder %v453, 1
    %vm463 = vcmask 1046528
    %v464 = vrot.slane %v429, 1
    %v465 = vrot.slane %v430, 1
    %v466 = vsel %vm463, %v464, %v465
    %v467 = vrot.slane %v431, 1
    %v468 = vsel %vm463, %v465, %v467
    %v469 = vrot.slane %v432, 1
    %v470 = vsel %vm463, %v467, %v469
    %v471 = vrot.slane %v433, 1
    %v472 = vsel %vm463, %v469, %v471
    %v477 = vsel %vm454, %v466, 0.0
    %v478 = vsel %vm455, %v468, 0.0
    %v479 = vsel %vm456, %v470, 0.0
    %v480 = vsel %vm457, %v472, 0.0
    %v481 = vpack.c.bf16 %v478, %v477
    %v482 = vpack.c.bf16 %v480, %v479
    %s483 = scalar_lea.vmem %s1, 128
    %v484 = vld [vmem:[%s483] sm:$0xff]
    %v485 = vld [vmem:[%s483 + $0x8] sm:$0xff]
    %v486 = vld [vmem:[%s483 + $0x10] sm:$0xff]
    %v487 = vld [vmem:[%s483 + $0x18] sm:$0xff]
    %v488 = vld [vmem:[%s483 + $0x20] sm:$0xff]
    %v489 = vld [vmem:[%s483 + $0x28] sm:$0xff]
    %v490 = vld [vmem:[%s483 + $0x30] sm:$0xff]
    %v491 = vld [vmem:[%s483 + $0x38] sm:$0xff]
    %v500 = vunpack.c.l.b16 %v484
    %v501 = vunpack.c.h.b16 %v484
    %v502 = vunpack.c.l.b16 %v485
    %v503 = vunpack.c.h.b16 %v485
    %v504 = vunpack.c.l.b16 %v486
    %v505 = vunpack.c.h.b16 %v486
    %v506 = vunpack.c.l.b16 %v487
    %v507 = vunpack.c.h.b16 %v487
    %v508 = vunpack.c.l.b16 %v488
    %v509 = vunpack.c.h.b16 %v488
    %v510 = vunpack.c.l.b16 %v489
    %v511 = vunpack.c.h.b16 %v489
    %v512 = vunpack.c.l.b16 %v490
    %v513 = vunpack.c.h.b16 %v490
    %v514 = vunpack.c.l.b16 %v491
    %v515 = vunpack.c.h.b16 %v491
    %v516 = vpack.c.b16 %v502, %v500
    %v517 = vpack.c.b16 %v503, %v501
    %v518 = vpack.c.b16 %v506, %v504
    %v519 = vpack.c.b16 %v507, %v505
    %v520 = vpack.c.b16 %v510, %v508
    %v521 = vpack.c.b16 %v511, %v509
    %v522 = vpack.c.b16 %v514, %v512
    %v523 = vpack.c.b16 %v515, %v513
    %v533 = vsel %vm128, %v481, 0
    %v536 = vsel %vm128, %v482, 0
    %538 = vmatprep.subr.bf16.mxu0 %v517
    %539 = vmatpush1.bf16.msra.mxu0 %v516
    %540 = vmatprep.subr.bf16.mxu0 %v519
    %541 = vmatpush1.bf16.msra.mxu0 %v518
    %542 = vmatprep.subr.bf16.mxu0 %v521
    %543 = vmatpush1.bf16.msra.mxu0 %v520
    %544 = vmatprep.subr.bf16.mxu0 %v523
    %545 = vmatpush1.bf16.msra.mxu0 %v522
    %546 = vmatprep.subr.bf16.mxu0 0
    %547 = vmatpush1.bf16.msra.mxu0 0
    %548 = vmatprep.subr.bf16.mxu0 0
    %549 = vmatpush1.bf16.msra.mxu0 0
    %550 = vmatprep.subr.bf16.mxu0 0
    %551 = vmatpush1.bf16.msra.mxu0 0
    %552 = vmatprep.subr.bf16.mxu0 0
    %553 = vmatpush1.bf16.msra.mxu0 0
    %554 = vmatprep.subr.bf16.mxu0 0
    %555 = vmatpush1.bf16.msra.mxu0 0
    %556 = vmatprep.subr.bf16.mxu0 0
    %557 = vmatpush1.bf16.msra.mxu0 0
    %558 = vmatprep.subr.bf16.mxu0 0
    %559 = vmatpush1.bf16.msra.mxu0 0
    %560 = vmatprep.subr.bf16.mxu0 0
    %561 = vmatpush1.bf16.msra.mxu0 0
    %562 = vmatprep.subr.bf16.mxu0 0
    %563 = vmatpush1.bf16.msra.mxu0 0
    %564 = vmatprep.subr.bf16.mxu0 0
    %565 = vmatpush1.bf16.msra.mxu0 0
    %566 = vmatprep.subr.bf16.mxu0 0
    %567 = vmatpush1.bf16.msra.mxu0 0
    %568 = vmatprep.subr.bf16.mxu0 0
    %569 = vmatpush1.bf16.msra.mxu0 0
    %570 = vmatprep.mubr.bf16.mxu0 0
    %571 = vmatmul.mubr.bf16.gmra.mrb[0].mxu0 %v533
    %v572 = vpop.f32.mrb[0].mxu0
    %v573 = vadd.f32 0.0, %v572
    %v574 = vpop.f32.mrb[0].mxu0
    %v575 = vadd.f32 0.0, %v574
    %v576 = vpop.f32.mrb[0].mxu0
    %v577 = vadd.f32 0.0, %v576
    %v578 = vpop.f32.mrb[0].mxu0
    %v579 = vadd.f32 0.0, %v578
    %580 = vmatprep.mubr.bf16.mxu0 0
    %581 = vmatmul.mubr.bf16.gmra.mrb[0].mxu0 %v536
    %v582 = vpop.f32.mrb[0].mxu0
    %v583 = vadd.f32 0.0, %v582
    %v584 = vpop.f32.mrb[0].mxu0
    %v585 = vadd.f32 0.0, %v584
    %v586 = vpop.f32.mrb[0].mxu0
    %v587 = vadd.f32 0.0, %v586
    %v588 = vpop.f32.mrb[0].mxu0
    %v589 = vadd.f32 0.0, %v588
    %590 = vdwg.mxu0
    %v591 = vadd.f32 %v411, %v573
    %v592 = vadd.f32 %v413, %v575
    %v593 = vadd.f32 %v415, %v577
    %v594 = vadd.f32 %v417, %v579
    %v595 = vadd.f32 %v421, %v583
    %v596 = vadd.f32 %v423, %v585
    %v597 = vadd.f32 %v425, %v587
    %v598 = vadd.f32 %v427, %v589
    %v599 = vadd.f32 %v591, %v593
    %v600 = vrot.slane %v599, 4
    %v601 = vadd.f32 %v599, %v600
    %v602 = vrot.slane %v601, 2
    %v603 = vadd.f32 %v601, %v602
    %v604 = vrot.slane %v603, 1
    %v605 = vadd.f32 %v603, %v604
    %v606 = vadd.f32 %v592, %v594
    %v607 = vrot.slane %v606, 4
    %v608 = vadd.f32 %v606, %v607
    %v609 = vrot.slane %v608, 2
    %v610 = vadd.f32 %v608, %v609
    %v611 = vrot.slane %v610, 1
    %v612 = vadd.f32 %v610, %v611
    %v613 = vadd.f32 %v595, %v597
    %v614 = vrot.slane %v613, 4
    %v615 = vadd.f32 %v613, %v614
    %v616 = vrot.slane %v615, 2
    %v617 = vadd.f32 %v615, %v616
    %v618 = vrot.slane %v617, 1
    %v619 = vadd.f32 %v617, %v618
    %v620 = vadd.f32 %v596, %v598
    %v621 = vrot.slane %v620, 4
    %v622 = vadd.f32 %v620, %v621
    %v623 = vrot.slane %v622, 2
    %v624 = vadd.f32 %v622, %v623
    %v625 = vrot.slane %v624, 1
    %v626 = vadd.f32 %v624, %v625
    %v627 = vmul.f32 %v591, %v591
    %v628 = vmul.f32 %v592, %v592
    %v629 = vmul.f32 %v593, %v593
    %v630 = vmul.f32 %v594, %v594
    %v631 = vmul.f32 %v595, %v595
    %v632 = vmul.f32 %v596, %v596
    %v633 = vmul.f32 %v597, %v597
    %v634 = vmul.f32 %v598, %v598
    %v635 = vadd.f32 %v627, %v629
    %v636 = vrot.slane %v635, 4
    %v637 = vadd.f32 %v635, %v636
    %v638 = vrot.slane %v637, 2
    %v639 = vadd.f32 %v637, %v638
    %v640 = vrot.slane %v639, 1
    %v641 = vadd.f32 %v639, %v640
    %v642 = vadd.f32 %v628, %v630
    %v643 = vrot.slane %v642, 4
    %v644 = vadd.f32 %v642, %v643
    %v645 = vrot.slane %v644, 2
    %v646 = vadd.f32 %v644, %v645
    %v647 = vrot.slane %v646, 1
    %v648 = vadd.f32 %v646, %v647
    %v649 = vadd.f32 %v631, %v633
    %v650 = vrot.slane %v649, 4
    %v651 = vadd.f32 %v649, %v650
    %v652 = vrot.slane %v651, 2
    %v653 = vadd.f32 %v651, %v652
    %v654 = vrot.slane %v653, 1
    %v655 = vadd.f32 %v653, %v654
    %v656 = vadd.f32 %v632, %v634
    %v657 = vrot.slane %v656, 4
    %v658 = vadd.f32 %v656, %v657
    %v659 = vrot.slane %v658, 2
    %v660 = vadd.f32 %v658, %v659
    %v661 = vrot.slane %v660, 1
    %v662 = vadd.f32 %v660, %v661
    %v663 = vld [vmem:[%s10] sm:$0xff]
    %v664 = vld [vmem:[%s10 + $0x8] sm:$0xff]
    %v665 = vld [vmem:[%s10 + $0x10] sm:$0xff]
    %v666 = vld [vmem:[%s10 + $0x18] sm:$0xff]
    %v667 = vld [vmem:[%s10 + $0x20] sm:$0xff]
    %v668 = vld [vmem:[%s10 + $0x28] sm:$0xff]
    %v669 = vld [vmem:[%s10 + $0x30] sm:$0xff]
    %v670 = vld [vmem:[%s10 + $0x38] sm:$0xff]
    %v671 = vld [vmem:[%s10 + $0x40] sm:$0xff]
    %v672 = vld [vmem:[%s10 + $0x48] sm:$0xff]
    %v673 = vld [vmem:[%s10 + $0x50] sm:$0xff]
    %v674 = vld [vmem:[%s10 + $0x58] sm:$0xff]
    %v675 = vld [vmem:[%s10 + $0x60] sm:$0xff]
    %v676 = vld [vmem:[%s10 + $0x68] sm:$0xff]
    %v677 = vld [vmem:[%s10 + $0x70] sm:$0xff]
    %v678 = vld [vmem:[%s10 + $0x78] sm:$0xff]
    %v679 = vld [vmem:[%s10 + $0x80] sm:$0xff]
    %v680 = vld [vmem:[%s10 + $0x88] sm:$0xff]
    %v681 = vld [vmem:[%s10 + $0x90] sm:$0xff]
    %v682 = vld [vmem:[%s10 + $0x98] sm:$0xff]
    %v683 = vld [vmem:[%s10 + $0xa0] sm:$0xff]
    %v684 = vld [vmem:[%s10 + $0xa8] sm:$0xff]
    %v685 = vld [vmem:[%s10 + $0xb0] sm:$0xff]
    %v686 = vld [vmem:[%s10 + $0xb8] sm:$0xff]
    %v687 = vld [vmem:[%s10 + $0xc0] sm:$0xff]
    %v688 = vld [vmem:[%s10 + $0xc8] sm:$0xff]
    %v689 = vld [vmem:[%s10 + $0xd0] sm:$0xff]
    %v690 = vld [vmem:[%s10 + $0xd8] sm:$0xff]
    %v691 = vld [vmem:[%s10 + $0xe0] sm:$0xff]
    %v692 = vld [vmem:[%s10 + $0xe8] sm:$0xff]
    %v693 = vld [vmem:[%s10 + $0xf0] sm:$0xff]
    %v694 = vld [vmem:[%s10 + $0xf8] sm:$0xff]
    %vm699 = vcmask 1041409
    %v700 = vsel %vm699, %v619, %v605
    %v701 = vsel %vm699, %v626, %v612
    %704 = vmatprep.subr.mxu0 0.0
    %705 = vmatpush1.msra.mxu0 %v663
    %706 = vmatprep.subr.mxu0 0.0
    %707 = vmatpush1.msra.mxu0 %v664
    %708 = vmatprep.subr.mxu0 0.0
    %709 = vmatpush1.msra.mxu0 %v665
    %710 = vmatprep.subr.mxu0 0.0
    %711 = vmatpush1.msra.mxu0 %v666
    %712 = vmatprep.subr.mxu0 0.0
    %713 = vmatpush1.msra.mxu0 %v667
    %714 = vmatprep.subr.mxu0 0.0
    %715 = vmatpush1.msra.mxu0 %v668
    %716 = vmatprep.subr.mxu0 0.0
    %717 = vmatpush1.msra.mxu0 %v669
    %718 = vmatprep.subr.mxu0 0.0
    %719 = vmatpush1.msra.mxu0 %v670
    %720 = vmatprep.subr.mxu0 0.0
    %721 = vmatpush1.msra.mxu0 %v671
    %722 = vmatprep.subr.mxu0 0.0
    %723 = vmatpush1.msra.mxu0 %v672
    %724 = vmatprep.subr.mxu0 0.0
    %725 = vmatpush1.msra.mxu0 %v673
    %726 = vmatprep.subr.mxu0 0.0
    %727 = vmatpush1.msra.mxu0 %v674
    %728 = vmatprep.subr.mxu0 0.0
    %729 = vmatpush1.msra.mxu0 %v675
    %730 = vmatprep.subr.mxu0 0.0
    %731 = vmatpush1.msra.mxu0 %v676
    %732 = vmatprep.subr.mxu0 0.0
    %733 = vmatpush1.msra.mxu0 %v677
    %734 = vmatprep.subr.mxu0 0.0
    %735 = vmatpush1.msra.mxu0 %v678
    %736 = vmatprep.subr.mxu0 0.0
    %737 = vmatpush1.msra.mxu0 %v679
    %738 = vmatprep.subr.mxu0 0.0
    %739 = vmatpush1.msra.mxu0 %v680
    %740 = vmatprep.subr.mxu0 0.0
    %741 = vmatpush1.msra.mxu0 %v681
    %742 = vmatprep.subr.mxu0 0.0
    %743 = vmatpush1.msra.mxu0 %v682
    %744 = vmatprep.subr.mxu0 0.0
    %745 = vmatpush1.msra.mxu0 %v683
    %746 = vmatprep.subr.mxu0 0.0
    %747 = vmatpush1.msra.mxu0 %v684
    %748 = vmatprep.subr.mxu0 0.0
    %749 = vmatpush1.msra.mxu0 %v685
    %750 = vmatprep.subr.mxu0 0.0
    %751 = vmatpush1.msra.mxu0 %v686
    %752 = vmatprep.subr.mxu0 0.0
    %753 = vmatpush1.msra.mxu0 %v687
    %754 = vmatprep.subr.mxu0 0.0
    %755 = vmatpush1.msra.mxu0 %v688
    %756 = vmatprep.subr.mxu0 0.0
    %757 = vmatpush1.msra.mxu0 %v689
    %758 = vmatprep.subr.mxu0 0.0
    %759 = vmatpush1.msra.mxu0 %v690
    %760 = vmatprep.subr.mxu0 0.0
    %761 = vmatpush1.msra.mxu0 %v691
    %762 = vmatprep.subr.mxu0 0.0
    %763 = vmatpush1.msra.mxu0 %v692
    %764 = vmatprep.subr.mxu0 0.0
    %765 = vmatpush1.msra.mxu0 %v693
    %766 = vmatprep.subr.mxu0 0.0
    %767 = vmatpush1.msra.mxu0 %v694
    %768 = vmatprep.mubr.f32.mxu0 %v701
    %769 = vmatmul.mubr.f32.gmra.mrb[0].mxu0 %v700
    %v770 = vpop.f32.mrb[0].mxu0
    %v771 = vadd.f32 0.0, %v770
    %v772 = vpop.f32.mrb[0].mxu0
    %773 = vdwg.mxu0
    %v778 = vsel %vm699, %v655, %v641
    %v779 = vsel %vm699, %v662, %v648
    %782 = vmatprep.subr.mxu0 0.0
    %783 = vmatpush1.msra.mxu0 %v663
    %784 = vmatprep.subr.mxu0 0.0
    %785 = vmatpush1.msra.mxu0 %v664
    %786 = vmatprep.subr.mxu0 0.0
    %787 = vmatpush1.msra.mxu0 %v665
    %788 = vmatprep.subr.mxu0 0.0
    %789 = vmatpush1.msra.mxu0 %v666
    %790 = vmatprep.subr.mxu0 0.0
    %791 = vmatpush1.msra.mxu0 %v667
    %792 = vmatprep.subr.mxu0 0.0
    %793 = vmatpush1.msra.mxu0 %v668
    %794 = vmatprep.subr.mxu0 0.0
    %795 = vmatpush1.msra.mxu0 %v669
    %796 = vmatprep.subr.mxu0 0.0
    %797 = vmatpush1.msra.mxu0 %v670
    %798 = vmatprep.subr.mxu0 0.0
    %799 = vmatpush1.msra.mxu0 %v671
    %800 = vmatprep.subr.mxu0 0.0
    %801 = vmatpush1.msra.mxu0 %v672
    %802 = vmatprep.subr.mxu0 0.0
    %803 = vmatpush1.msra.mxu0 %v673
    %804 = vmatprep.subr.mxu0 0.0
    %805 = vmatpush1.msra.mxu0 %v674
    %806 = vmatprep.subr.mxu0 0.0
    %807 = vmatpush1.msra.mxu0 %v675
    %808 = vmatprep.subr.mxu0 0.0
    %809 = vmatpush1.msra.mxu0 %v676
    %810 = vmatprep.subr.mxu0 0.0
    %811 = vmatpush1.msra.mxu0 %v677
    %812 = vmatprep.subr.mxu0 0.0
    %813 = vmatpush1.msra.mxu0 %v678
    %814 = vmatprep.subr.mxu0 0.0
    %815 = vmatpush1.msra.mxu0 %v679
    %816 = vmatprep.subr.mxu0 0.0
    %817 = vmatpush1.msra.mxu0 %v680
    %818 = vmatprep.subr.mxu0 0.0
    %819 = vmatpush1.msra.mxu0 %v681
    %820 = vmatprep.subr.mxu0 0.0
    %821 = vmatpush1.msra.mxu0 %v682
    %822 = vmatprep.subr.mxu0 0.0
    %823 = vmatpush1.msra.mxu0 %v683
    %824 = vmatprep.subr.mxu0 0.0
    %825 = vmatpush1.msra.mxu0 %v684
    %826 = vmatprep.subr.mxu0 0.0
    %827 = vmatpush1.msra.mxu0 %v685
    %828 = vmatprep.subr.mxu0 0.0
    %829 = vmatpush1.msra.mxu0 %v686
    %830 = vmatprep.subr.mxu0 0.0
    %831 = vmatpush1.msra.mxu0 %v687
    %832 = vmatprep.subr.mxu0 0.0
    %833 = vmatpush1.msra.mxu0 %v688
    %834 = vmatprep.subr.mxu0 0.0
    %835 = vmatpush1.msra.mxu0 %v689
    %836 = vmatprep.subr.mxu0 0.0
    %837 = vmatpush1.msra.mxu0 %v690
    %838 = vmatprep.subr.mxu0 0.0
    %839 = vmatpush1.msra.mxu0 %v691
    %840 = vmatprep.subr.mxu0 0.0
    %841 = vmatpush1.msra.mxu0 %v692
    %842 = vmatprep.subr.mxu0 0.0
    %843 = vmatpush1.msra.mxu0 %v693
    %844 = vmatprep.subr.mxu0 0.0
    %845 = vmatpush1.msra.mxu0 %v694
    %846 = vmatprep.mubr.f32.mxu0 %v779
    %847 = vmatmul.mubr.f32.gmra.mrb[0].mxu0 %v778
    %v848 = vpop.f32.mrb[0].mxu0
    %v849 = vadd.f32 0.0, %v848
    %v850 = vpop.f32.mrb[0].mxu0
    %851 = vdwg.mxu0
    %v852 = vmul.f32 %v771, %v771
    %v853 = vsub.f32 %v849, %v852
    %v854 = vmax.f32 %v853, 0.0
    %v855 = vadd.f32 %v854, 1e-05
    %v856 = vrsqrt.pop %v855
    %v857 = vld [vmem:[%s2] sm:$0x1]
    %v859 = vlaneseq
    %v860 = vshrl.u32 %v859, 7
    %v861 = vsub.s32 0, %v860
    %v862 = vrot.slane %v857, %v861
    %v864 = vmul.f32 %v856, %v862
    %v865 = vld [vmem:[%s3] sm:$0x1]
    %v866 = vmul.f32 %v771, %v864
    %v868 = vlaneseq
    %v869 = vshrl.u32 %v868, 7
    %v870 = vsub.s32 0, %v869
    %v871 = vrot.slane %v865, %v870
    %v873 = vsub.f32 %v871, %v866
    %v874 = vld [vmem:[%s11] sm:$0xff]
    %v875 = vld [vmem:[%s11 + $0x8] sm:$0xff]
    %v876 = vld [vmem:[%s11 + $0x10] sm:$0xff]
    %v877 = vld [vmem:[%s11 + $0x18] sm:$0xff]
    %vm878 = vcmask 130048
    %v880 = vsel %vm878, %v864, 0
    %882 = vmatprep.subr.mxu0 %v875
    %883 = vmatpush1.msra.mxu0 %v874
    %884 = vmatprep.subr.mxu0 %v877
    %885 = vmatpush1.msra.mxu0 %v876
    %886 = vmatprep.subr.mxu0 0.0
    %887 = vmatpush1.msra.mxu0 0.0
    %888 = vmatprep.subr.mxu0 0.0
    %889 = vmatpush1.msra.mxu0 0.0
    %890 = vmatprep.subr.mxu0 0.0
    %891 = vmatpush1.msra.mxu0 0.0
    %892 = vmatprep.subr.mxu0 0.0
    %893 = vmatpush1.msra.mxu0 0.0
    %894 = vmatprep.subr.mxu0 0.0
    %895 = vmatpush1.msra.mxu0 0.0
    %896 = vmatprep.subr.mxu0 0.0
    %897 = vmatpush1.msra.mxu0 0.0
    %898 = vmatprep.subr.mxu0 0.0
    %899 = vmatpush1.msra.mxu0 0.0
    %900 = vmatprep.subr.mxu0 0.0
    %901 = vmatpush1.msra.mxu0 0.0
    %902 = vmatprep.subr.mxu0 0.0
    %903 = vmatpush1.msra.mxu0 0.0
    %904 = vmatprep.subr.mxu0 0.0
    %905 = vmatpush1.msra.mxu0 0.0
    %906 = vmatprep.subr.mxu0 0.0
    %907 = vmatpush1.msra.mxu0 0.0
    %908 = vmatprep.subr.mxu0 0.0
    %909 = vmatpush1.msra.mxu0 0.0
    %910 = vmatprep.subr.mxu0 0.0
    %911 = vmatpush1.msra.mxu0 0.0
    %912 = vmatprep.subr.mxu0 0.0
    %913 = vmatpush1.msra.mxu0 0.0
    %914 = vmatprep.subr.mxu0 0.0
    %915 = vmatpush1.msra.mxu0 0.0
    %916 = vmatprep.subr.mxu0 0.0
    %917 = vmatpush1.msra.mxu0 0.0
    %918 = vmatprep.subr.mxu0 0.0
    %919 = vmatpush1.msra.mxu0 0.0
    %920 = vmatprep.subr.mxu0 0.0
    %921 = vmatpush1.msra.mxu0 0.0
    %922 = vmatprep.subr.mxu0 0.0
    %923 = vmatpush1.msra.mxu0 0.0
    %924 = vmatprep.subr.mxu0 0.0
    %925 = vmatpush1.msra.mxu0 0.0
    %926 = vmatprep.subr.mxu0 0.0
    %927 = vmatpush1.msra.mxu0 0.0
    %928 = vmatprep.subr.mxu0 0.0
    %929 = vmatpush1.msra.mxu0 0.0
    %930 = vmatprep.subr.mxu0 0.0
    %931 = vmatpush1.msra.mxu0 0.0
    %932 = vmatprep.subr.mxu0 0.0
    %933 = vmatpush1.msra.mxu0 0.0
    %934 = vmatprep.subr.mxu0 0.0
    %935 = vmatpush1.msra.mxu0 0.0
    %936 = vmatprep.subr.mxu0 0.0
    %937 = vmatpush1.msra.mxu0 0.0
    %938 = vmatprep.subr.mxu0 0.0
    %939 = vmatpush1.msra.mxu0 0.0
    %940 = vmatprep.subr.mxu0 0.0
    %941 = vmatpush1.msra.mxu0 0.0
    %942 = vmatprep.subr.mxu0 0.0
    %943 = vmatpush1.msra.mxu0 0.0
    %944 = vmatprep.subr.mxu0 0.0
    %945 = vmatpush1.msra.mxu0 0.0
    %946 = vmatprep.mubr.f32.mxu0 0.0
    %947 = vmatmul.mubr.f32.gmra.mrb[0].mxu0 %v880
    %v948 = vpop.f32.mrb[0].mxu0
    %v949 = vadd.f32 0.0, %v948
    %v950 = vpop.f32.mrb[0].mxu0
    %v951 = vadd.f32 0.0, %v950
    %952 = vdwg.mxu0
    %v954 = vsel %vm878, %v873, 0
    %956 = vmatprep.subr.mxu0 %v875
    %957 = vmatpush1.msra.mxu0 %v874
    %958 = vmatprep.subr.mxu0 %v877
    %959 = vmatpush1.msra.mxu0 %v876
    %960 = vmatprep.subr.mxu0 0.0
    %961 = vmatpush1.msra.mxu0 0.0
    %962 = vmatprep.subr.mxu0 0.0
    %963 = vmatpush1.msra.mxu0 0.0
    %964 = vmatprep.subr.mxu0 0.0
    %965 = vmatpush1.msra.mxu0 0.0
    %966 = vmatprep.subr.mxu0 0.0
    %967 = vmatpush1.msra.mxu0 0.0
    %968 = vmatprep.subr.mxu0 0.0
    %969 = vmatpush1.msra.mxu0 0.0
    %970 = vmatprep.subr.mxu0 0.0
    %971 = vmatpush1.msra.mxu0 0.0
    %972 = vmatprep.subr.mxu0 0.0
    %973 = vmatpush1.msra.mxu0 0.0
    %974 = vmatprep.subr.mxu0 0.0
    %975 = vmatpush1.msra.mxu0 0.0
    %976 = vmatprep.subr.mxu0 0.0
    %977 = vmatpush1.msra.mxu0 0.0
    %978 = vmatprep.subr.mxu0 0.0
    %979 = vmatpush1.msra.mxu0 0.0
    %980 = vmatprep.subr.mxu0 0.0
    %981 = vmatpush1.msra.mxu0 0.0
    %982 = vmatprep.subr.mxu0 0.0
    %983 = vmatpush1.msra.mxu0 0.0
    %984 = vmatprep.subr.mxu0 0.0
    %985 = vmatpush1.msra.mxu0 0.0
    %986 = vmatprep.subr.mxu0 0.0
    %987 = vmatpush1.msra.mxu0 0.0
    %988 = vmatprep.subr.mxu0 0.0
    %989 = vmatpush1.msra.mxu0 0.0
    %990 = vmatprep.subr.mxu0 0.0
    %991 = vmatpush1.msra.mxu0 0.0
    %992 = vmatprep.subr.mxu0 0.0
    %993 = vmatpush1.msra.mxu0 0.0
    %994 = vmatprep.subr.mxu0 0.0
    %995 = vmatpush1.msra.mxu0 0.0
    %996 = vmatprep.subr.mxu0 0.0
    %997 = vmatpush1.msra.mxu0 0.0
    %998 = vmatprep.subr.mxu0 0.0
    %999 = vmatpush1.msra.mxu0 0.0
    %1000 = vmatprep.subr.mxu0 0.0
    %1001 = vmatpush1.msra.mxu0 0.0
    %1002 = vmatprep.subr.mxu0 0.0
    %1003 = vmatpush1.msra.mxu0 0.0
    %1004 = vmatprep.subr.mxu0 0.0
    %1005 = vmatpush1.msra.mxu0 0.0
    %1006 = vmatprep.subr.mxu0 0.0
    %1007 = vmatpush1.msra.mxu0 0.0
    %1008 = vmatprep.subr.mxu0 0.0
    %1009 = vmatpush1.msra.mxu0 0.0
    %1010 = vmatprep.subr.mxu0 0.0
    %1011 = vmatpush1.msra.mxu0 0.0
    %1012 = vmatprep.subr.mxu0 0.0
    %1013 = vmatpush1.msra.mxu0 0.0
    %1014 = vmatprep.subr.mxu0 0.0
    %1015 = vmatpush1.msra.mxu0 0.0
    %1016 = vmatprep.subr.mxu0 0.0
    %1017 = vmatpush1.msra.mxu0 0.0
    %1018 = vmatprep.subr.mxu0 0.0
    %1019 = vmatpush1.msra.mxu0 0.0
    %1020 = vmatprep.mubr.f32.mxu0 0.0
    %1021 = vmatmul.mubr.f32.gmra.mrb[0].mxu0 %v954
    %v1022 = vpop.f32.mrb[0].mxu0
    %v1023 = vadd.f32 0.0, %v1022
    %v1024 = vpop.f32.mrb[0].mxu0
    %v1025 = vadd.f32 0.0, %v1024
    %1026 = vdwg.mxu0
    %v1029 = vcombine.low %v949, %v951
    %v1031 = vunpack.c.l.s4 1966171168
    %v1032 = vunpack.c.0.s8 %v1031
    %v1033 = vlaneseq
    %v1034 = vshrl.u32 %v1033, 7
    %v1035 = vsub.s32 %v1032, %v1034
    %v1036 = vrot.slane %v1029, %v1035
    %v1037 = vcombine.high %v1036, %v1036
    %v1039 = vunpack.c.l.s4 1966171168
    %v1040 = vunpack.c.0.s8 %v1039
    %v1041 = vlaneseq
    %v1042 = vshrl.u32 %v1041, 7
    %v1043 = vsub.s32 %v1040, %v1042
    %v1044 = vrot.slane %v1036, %v1043
    %v1046 = vunpack.c.l.s4 1966171168
    %v1047 = vunpack.c.0.s8 %v1046
    %v1048 = vlaneseq
    %v1049 = vshrl.u32 %v1048, 7
    %v1050 = vsub.s32 %v1047, %v1049
    %v1051 = vrot.slane %v1037, %v1050
    %v1052 = vlaneseq
    %v1053 = vshrl.u32 %v1052, 7
    %v1054 = vsub.s32 0, %v1053
    %v1055 = vrot.slane %v1044, %v1054
    %v1056 = vlaneseq
    %v1057 = vshrl.u32 %v1056, 7
    %v1058 = vsub.s32 1, %v1057
    %v1059 = vrot.slane %v1044, %v1058
    %v1060 = vlaneseq
    %v1061 = vshrl.u32 %v1060, 7
    %v1062 = vsub.s32 0, %v1061
    %v1063 = vrot.slane %v1051, %v1062
    %v1064 = vlaneseq
    %v1065 = vshrl.u32 %v1064, 7
    %v1066 = vsub.s32 1, %v1065
    %v1067 = vrot.slane %v1051, %v1066
    %v1072 = vmul.f32 %v591, %v1055
    %v1073 = vmul.f32 %v592, %v1059
    %v1074 = vmul.f32 %v593, %v1055
    %v1075 = vmul.f32 %v594, %v1059
    %v1076 = vmul.f32 %v595, %v1063
    %v1077 = vmul.f32 %v596, %v1067
    %v1078 = vmul.f32 %v597, %v1063
    %v1079 = vmul.f32 %v598, %v1067
    %v1082 = vcombine.low %v1023, %v1025
    %v1084 = vunpack.c.l.s4 1966171168
    %v1085 = vunpack.c.0.s8 %v1084
    %v1086 = vlaneseq
    %v1087 = vshrl.u32 %v1086, 7
    %v1088 = vsub.s32 %v1085, %v1087
    %v1089 = vrot.slane %v1082, %v1088
    %v1090 = vcombine.high %v1089, %v1089
    %v1092 = vunpack.c.l.s4 1966171168
    %v1093 = vunpack.c.0.s8 %v1092
    %v1094 = vlaneseq
    %v1095 = vshrl.u32 %v1094, 7
    %v1096 = vsub.s32 %v1093, %v1095
    %v1097 = vrot.slane %v1089, %v1096
    %v1099 = vunpack.c.l.s4 1966171168
    %v1100 = vunpack.c.0.s8 %v1099
    %v1101 = vlaneseq
    %v1102 = vshrl.u32 %v1101, 7
    %v1103 = vsub.s32 %v1100, %v1102
    %v1104 = vrot.slane %v1090, %v1103
    %v1105 = vlaneseq
    %v1106 = vshrl.u32 %v1105, 7
    %v1107 = vsub.s32 0, %v1106
    %v1108 = vrot.slane %v1097, %v1107
    %v1109 = vlaneseq
    %v1110 = vshrl.u32 %v1109, 7
    %v1111 = vsub.s32 1, %v1110
    %v1112 = vrot.slane %v1097, %v1111
    %v1113 = vlaneseq
    %v1114 = vshrl.u32 %v1113, 7
    %v1115 = vsub.s32 0, %v1114
    %v1116 = vrot.slane %v1104, %v1115
    %v1117 = vlaneseq
    %v1118 = vshrl.u32 %v1117, 7
    %v1119 = vsub.s32 1, %v1118
    %v1120 = vrot.slane %v1104, %v1119
    %v1125 = vadd.f32 %v1072, %v1108
    %v1126 = vadd.f32 %v1073, %v1112
    %v1127 = vadd.f32 %v1074, %v1108
    %v1128 = vadd.f32 %v1075, %v1112
    %v1129 = vadd.f32 %v1076, %v1116
    %v1130 = vadd.f32 %v1077, %v1120
    %v1131 = vadd.f32 %v1078, %v1116
    %v1132 = vadd.f32 %v1079, %v1120
    %vm1133 = vcmp.gt.f32.partialorder %v1125, 0.0
    %vm1134 = vcmp.gt.f32.partialorder %v1126, 0.0
    %vm1135 = vcmp.gt.f32.partialorder %v1127, 0.0
    %vm1136 = vcmp.gt.f32.partialorder %v1128, 0.0
    %vm1137 = vcmp.gt.f32.partialorder %v1129, 0.0
    %vm1138 = vcmp.gt.f32.partialorder %v1130, 0.0
    %vm1139 = vcmp.gt.f32.partialorder %v1131, 0.0
    %vm1140 = vcmp.gt.f32.partialorder %v1132, 0.0
    %v1141 = vmin.f32 %v1125, 0.0
    %v1142 = vmin.f32 %v1126, 0.0
    %v1143 = vmin.f32 %v1127, 0.0
    %v1144 = vmin.f32 %v1128, 0.0
    %v1145 = vmin.f32 %v1129, 0.0
    %v1146 = vmin.f32 %v1130, 0.0
    %v1147 = vmin.f32 %v1131, 0.0
    %v1148 = vmin.f32 %v1132, 0.0
    %v1149 = vmul.f32 %v1141, 1.442695
    %v1150 = vpow.pop %v1149
    %v1151 = vmul.f32 %v1142, 1.442695
    %v1152 = vpow.pop %v1151
    %v1153 = vmul.f32 %v1143, 1.442695
    %v1154 = vpow.pop %v1153
    %v1155 = vmul.f32 %v1144, 1.442695
    %v1156 = vpow.pop %v1155
    %v1157 = vmul.f32 %v1145, 1.442695
    %v1158 = vpow.pop %v1157
    %v1159 = vmul.f32 %v1146, 1.442695
    %v1160 = vpow.pop %v1159
    %v1161 = vmul.f32 %v1147, 1.442695
    %v1162 = vpow.pop %v1161
    %v1163 = vmul.f32 %v1148, 1.442695
    %v1164 = vpow.pop %v1163
    %v1165 = vsub.f32 %v1150, 1.0
    %v1166 = vsub.f32 %v1152, 1.0
    %v1167 = vsub.f32 %v1154, 1.0
    %v1168 = vsub.f32 %v1156, 1.0
    %v1169 = vsub.f32 %v1158, 1.0
    %v1170 = vsub.f32 %v1160, 1.0
    %v1171 = vsub.f32 %v1162, 1.0
    %v1172 = vsub.f32 %v1164, 1.0
    %v1173 = vsel %vm1133, %v1125, %v1165
    %v1174 = vsel %vm1134, %v1126, %v1166
    %v1175 = vsel %vm1135, %v1127, %v1167
    %v1176 = vsel %vm1136, %v1128, %v1168
    %v1177 = vsel %vm1137, %v1129, %v1169
    %v1178 = vsel %vm1138, %v1130, %v1170
    %v1179 = vsel %vm1139, %v1131, %v1171
    %v1180 = vsel %vm1140, %v1132, %v1172
    %1181 = vst [vmem:[#allocation3] sm:$0xff] %v1173
    %1182 = vst [vmem:[#allocation3 + $0x8] sm:$0xff] %v1174
    %1183 = vst [vmem:[#allocation3 + $0x10] sm:$0xff] %v1175
    %1184 = vst [vmem:[#allocation3 + $0x18] sm:$0xff] %v1176
    %1185 = vst [vmem:[#allocation3 + $0x20] sm:$0xff] %v1177
    %1186 = vst [vmem:[#allocation3 + $0x28] sm:$0xff] %v1178
    %1187 = vst [vmem:[#allocation3 + $0x30] sm:$0xff] %v1179
    %1188 = vst [vmem:[#allocation3 + $0x38] sm:$0xff] %v1180
    %1189 = vst [vmem:[#allocation2 + $0x10] sm:$0xff] %v1173
    %1190 = vst [vmem:[#allocation2 + $0x18] sm:$0xff] %v1174
    %1191 = vst [vmem:[#allocation2 + $0x20] sm:$0xff] %v1175
    %1192 = vst [vmem:[#allocation2 + $0x28] sm:$0xff] %v1176
    %1193 = vst [vmem:[#allocation2 + $0x30] sm:$0xff] %v1177
    %1194 = vst [vmem:[#allocation2 + $0x38] sm:$0xff] %v1178
    %1195 = vst [vmem:[#allocation2 + $0x40] sm:$0xff] %v1179
    %1196 = vst [vmem:[#allocation2 + $0x48] sm:$0xff] %v1180
    %v1197 = vld [vmem:[#allocation2] sm:$0x80]
    %v1198 = vld [vmem:[#allocation2 + $0x8] sm:$0x80]
    %v1199 = vld [vmem:[#allocation2 + $0x10] sm:$0xff]
    %v1200 = vld [vmem:[#allocation2 + $0x18] sm:$0xff]
    %v1201 = vld [vmem:[#allocation2 + $0x20] sm:$0xff]
    %v1202 = vld [vmem:[#allocation2 + $0x28] sm:$0xff]
    %v1203 = vld [vmem:[#allocation2 + $0x30] sm:$0xff]
    %v1204 = vld [vmem:[#allocation2 + $0x38] sm:$0xff]
    %v1205 = vld [vmem:[#allocation2 + $0x40] sm:$0x7f]
    %v1206 = vld [vmem:[#allocation2 + $0x48] sm:$0x7f]
    %v1217 = vrot.slane %v1197, 7
    %v1218 = vrot.slane %v1199, 7
    %v1219 = vsel %vm167, %v1217, %v1218
    %v1220 = vrot.slane %v1198, 7
    %v1221 = vrot.slane %v1200, 7
    %v1222 = vsel %vm167, %v1220, %v1221
    %v1223 = vrot.slane %v1201, 7
    %v1224 = vsel %vm167, %v1218, %v1223
    %v1225 = vrot.slane %v1202, 7
    %v1226 = vsel %vm167, %v1221, %v1225
    %v1227 = vrot.slane %v1203, 7
    %v1228 = vsel %vm167, %v1223, %v1227
    %v1229 = vrot.slane %v1204, 7
    %v1230 = vsel %vm167, %v1225, %v1229
    %v1231 = vrot.slane %v1205, 7
    %v1232 = vsel %vm167, %v1227, %v1231
    %v1233 = vrot.slane %v1206, 7
    %v1234 = vsel %vm167, %v1229, %v1233
    %v1243 = vsel %vm158, %v1219, 0.0
    %v1244 = vsel %vm158, %v1222, 0.0
    %v1245 = vsel %vm159, %v1224, 0.0
    %v1246 = vsel %vm159, %v1226, 0.0
    %v1247 = vsel %vm160, %v1228, 0.0
    %v1248 = vsel %vm160, %v1230, 0.0
    %v1249 = vsel %vm161, %v1232, 0.0
    %v1250 = vsel %vm161, %v1234, 0.0
    %v1251 = vpack.c.bf16 %v1245, %v1243
    %v1252 = vpack.c.bf16 %v1246, %v1244
    %v1253 = vpack.c.bf16 %v1249, %v1247
    %v1254 = vpack.c.bf16 %v1250, %v1248
    %v1255 = vld [vmem:[#allocation4] sm:$0xff]
    %v1256 = vld [vmem:[#allocation4 + $0x8] sm:$0xff]
    %v1257 = vld [vmem:[#allocation4 + $0x10] sm:$0xff]
    %v1258 = vld [vmem:[#allocation4 + $0x18] sm:$0xff]
    %v1259 = vld [vmem:[#allocation4 + $0x20] sm:$0xff]
    %v1260 = vld [vmem:[#allocation4 + $0x28] sm:$0xff]
    %v1261 = vld [vmem:[#allocation4 + $0x30] sm:$0xff]
    %v1262 = vld [vmem:[#allocation4 + $0x38] sm:$0xff]
    %v1263 = vld [vmem:[#allocation4 + $0x40] sm:$0xff]
    %v1264 = vld [vmem:[#allocation4 + $0x48] sm:$0xff]
    %v1265 = vld [vmem:[#allocation4 + $0x50] sm:$0xff]
    %v1266 = vld [vmem:[#allocation4 + $0x58] sm:$0xff]
    %v1267 = vld [vmem:[#allocation4 + $0x60] sm:$0xff]
    %v1268 = vld [vmem:[#allocation4 + $0x68] sm:$0xff]
    %v1269 = vld [vmem:[#allocation4 + $0x70] sm:$0xff]
    %v1270 = vld [vmem:[#allocation4 + $0x78] sm:$0xff]
    %v1271 = vld [vmem:[#allocation4 + $0x80] sm:$0xff]
    %v1272 = vld [vmem:[#allocation4 + $0x88] sm:$0xff]
    %v1273 = vld [vmem:[#allocation4 + $0x90] sm:$0xff]
    %v1274 = vld [vmem:[#allocation4 + $0x98] sm:$0xff]
    %v1275 = vld [vmem:[#allocation4 + $0xa0] sm:$0xff]
    %v1276 = vld [vmem:[#allocation4 + $0xa8] sm:$0xff]
    %v1277 = vld [vmem:[#allocation4 + $0xb0] sm:$0xff]
    %v1278 = vld [vmem:[#allocation4 + $0xb8] sm:$0xff]
    %v1279 = vld [vmem:[#allocation4 + $0xc0] sm:$0xff]
    %v1280 = vld [vmem:[#allocation4 + $0xc8] sm:$0xff]
    %v1281 = vld [vmem:[#allocation4 + $0xd0] sm:$0xff]
    %v1282 = vld [vmem:[#allocation4 + $0xd8] sm:$0xff]
    %v1283 = vld [vmem:[#allocation4 + $0xe0] sm:$0xff]
    %v1284 = vld [vmem:[#allocation4 + $0xe8] sm:$0xff]
    %v1285 = vld [vmem:[#allocation4 + $0xf0] sm:$0xff]
    %v1286 = vld [vmem:[#allocation4 + $0xf8] sm:$0xff]
    %v1287 = vld [vmem:[#allocation2 + $0x40] sm:$0xff]
    %v1288 = vld [vmem:[#allocation2 + $0x48] sm:$0xff]
    %v1289 = vsel %vm212, %v1199, 0.0
    %v1290 = vsel %vm212, %v1200, 0.0
    %v1291 = vsel %vm213, %v1201, 0.0
    %v1292 = vsel %vm213, %v1202, 0.0
    %v1293 = vsel %vm214, %v1203, 0.0
    %v1294 = vsel %vm214, %v1204, 0.0
    %v1295 = vsel %vm215, %v1287, 0.0
    %v1296 = vsel %vm215, %v1288, 0.0
    %v1297 = vpack.c.bf16 %v1291, %v1289
    %v1298 = vpack.c.bf16 %v1292, %v1290
    %v1299 = vpack.c.bf16 %v1295, %v1293
    %v1300 = vpack.c.bf16 %v1296, %v1294
    %s1301 = scalar_lea.vmem [#allocation4], 256
    %v1302 = vld [vmem:[%s1301] sm:$0xff]
    %v1303 = vld [vmem:[%s1301 + $0x8] sm:$0xff]
    %v1304 = vld [vmem:[%s1301 + $0x10] sm:$0xff]
    %v1305 = vld [vmem:[%s1301 + $0x18] sm:$0xff]
    %v1306 = vld [vmem:[%s1301 + $0x20] sm:$0xff]
    %v1307 = vld [vmem:[%s1301 + $0x28] sm:$0xff]
    %v1308 = vld [vmem:[%s1301 + $0x30] sm:$0xff]
    %v1309 = vld [vmem:[%s1301 + $0x38] sm:$0xff]
    %v1310 = vld [vmem:[%s1301 + $0x40] sm:$0xff]
    %v1311 = vld [vmem:[%s1301 + $0x48] sm:$0xff]
    %v1312 = vld [vmem:[%s1301 + $0x50] sm:$0xff]
    %v1313 = vld [vmem:[%s1301 + $0x58] sm:$0xff]
    %v1314 = vld [vmem:[%s1301 + $0x60] sm:$0xff]
    %v1315 = vld [vmem:[%s1301 + $0x68] sm:$0xff]
    %v1316 = vld [vmem:[%s1301 + $0x70] sm:$0xff]
    %v1317 = vld [vmem:[%s1301 + $0x78] sm:$0xff]
    %v1318 = vld [vmem:[%s1301 + $0x80] sm:$0xff]
    %v1319 = vld [vmem:[%s1301 + $0x88] sm:$0xff]
    %v1320 = vld [vmem:[%s1301 + $0x90] sm:$0xff]
    %v1321 = vld [vmem:[%s1301 + $0x98] sm:$0xff]
    %v1322 = vld [vmem:[%s1301 + $0xa0] sm:$0xff]
    %v1323 = vld [vmem:[%s1301 + $0xa8] sm:$0xff]
    %v1324 = vld [vmem:[%s1301 + $0xb0] sm:$0xff]
    %v1325 = vld [vmem:[%s1301 + $0xb8] sm:$0xff]
    %v1326 = vld [vmem:[%s1301 + $0xc0] sm:$0xff]
    %v1327 = vld [vmem:[%s1301 + $0xc8] sm:$0xff]
    %v1328 = vld [vmem:[%s1301 + $0xd0] sm:$0xff]
    %v1329 = vld [vmem:[%s1301 + $0xd8] sm:$0xff]
    %v1330 = vld [vmem:[%s1301 + $0xe0] sm:$0xff]
    %v1331 = vld [vmem:[%s1301 + $0xe8] sm:$0xff]
    %v1332 = vld [vmem:[%s1301 + $0xf0] sm:$0xff]
    %v1333 = vld [vmem:[%s1301 + $0xf8] sm:$0xff]
    %v1366 = vunpack.c.l.b16 %v1302
    %v1367 = vunpack.c.h.b16 %v1302
    %v1368 = vunpack.c.l.b16 %v1303
    %v1369 = vunpack.c.h.b16 %v1303
    %v1370 = vunpack.c.l.b16 %v1304
    %v1371 = vunpack.c.h.b16 %v1304
    %v1372 = vunpack.c.l.b16 %v1305
    %v1373 = vunpack.c.h.b16 %v1305
    %v1374 = vunpack.c.l.b16 %v1306
    %v1375 = vunpack.c.h.b16 %v1306
    %v1376 = vunpack.c.l.b16 %v1307
    %v1377 = vunpack.c.h.b16 %v1307
    %v1378 = vunpack.c.l.b16 %v1308
    %v1379 = vunpack.c.h.b16 %v1308
    %v1380 = vunpack.c.l.b16 %v1309
    %v1381 = vunpack.c.h.b16 %v1309
    %v1382 = vunpack.c.l.b16 %v1310
    %v1383 = vunpack.c.h.b16 %v1310
    %v1384 = vunpack.c.l.b16 %v1311
    %v1385 = vunpack.c.h.b16 %v1311
    %v1386 = vunpack.c.l.b16 %v1312
    %v1387 = vunpack.c.h.b16 %v1312
    %v1388 = vunpack.c.l.b16 %v1313
    %v1389 = vunpack.c.h.b16 %v1313
    %v1390 = vunpack.c.l.b16 %v1314
    %v1391 = vunpack.c.h.b16 %v1314
    %v1392 = vunpack.c.l.b16 %v1315
    %v1393 = vunpack.c.h.b16 %v1315
    %v1394 = vunpack.c.l.b16 %v1316
    %v1395 = vunpack.c.h.b16 %v1316
    %v1396 = vunpack.c.l.b16 %v1317
    %v1397 = vunpack.c.h.b16 %v1317
    %v1398 = vunpack.c.l.b16 %v1318
    %v1399 = vunpack.c.h.b16 %v1318
    %v1400 = vunpack.c.l.b16 %v1319
    %v1401 = vunpack.c.h.b16 %v1319
    %v1402 = vunpack.c.l.b16 %v1320
    %v1403 = vunpack.c.h.b16 %v1320
    %v1404 = vunpack.c.l.b16 %v1321
    %v1405 = vunpack.c.h.b16 %v1321
    %v1406 = vunpack.c.l.b16 %v1322
    %v1407 = vunpack.c.h.b16 %v1322
    %v1408 = vunpack.c.l.b16 %v1323
    %v1409 = vunpack.c.h.b16 %v1323
    %v1410 = vunpack.c.l.b16 %v1324
    %v1411 = vunpack.c.h.b16 %v1324
    %v1412 = vunpack.c.l.b16 %v1325
    %v1413 = vunpack.c.h.b16 %v1325
    %v1414 = vunpack.c.l.b16 %v1326
    %v1415 = vunpack.c.h.b16 %v1326
    %v1416 = vunpack.c.l.b16 %v1327
    %v1417 = vunpack.c.h.b16 %v1327
    %v1418 = vunpack.c.l.b16 %v1328
    %v1419 = vunpack.c.h.b16 %v1328
    %v1420 = vunpack.c.l.b16 %v1329
    %v1421 = vunpack.c.h.b16 %v1329
    %v1422 = vunpack.c.l.b16 %v1330
    %v1423 = vunpack.c.h.b16 %v1330
    %v1424 = vunpack.c.l.b16 %v1331
    %v1425 = vunpack.c.h.b16 %v1331
    %v1426 = vunpack.c.l.b16 %v1332
    %v1427 = vunpack.c.h.b16 %v1332
    %v1428 = vunpack.c.l.b16 %v1333
    %v1429 = vunpack.c.h.b16 %v1333
    %v1430 = vpack.c.b16 %v1368, %v1366
    %v1431 = vpack.c.b16 %v1369, %v1367
    %v1432 = vpack.c.b16 %v1372, %v1370
    %v1433 = vpack.c.b16 %v1373, %v1371
    %v1434 = vpack.c.b16 %v1376, %v1374
    %v1435 = vpack.c.b16 %v1377, %v1375
    %v1436 = vpack.c.b16 %v1380, %v1378
    %v1437 = vpack.c.b16 %v1381, %v1379
    %v1438 = vpack.c.b16 %v1384, %v1382
    %v1439 = vpack.c.b16 %v1385, %v1383
    %v1440 = vpack.c.b16 %v1388, %v1386
    %v1441 = vpack.c.b16 %v1389, %v1387
    %v1442 = vpack.c.b16 %v1392, %v1390
    %v1443 = vpack.c.b16 %v1393, %v1391
    %v1444 = vpack.c.b16 %v1396, %v1394
    %v1445 = vpack.c.b16 %v1397, %v1395
    %v1446 = vpack.c.b16 %v1400, %v1398
    %v1447 = vpack.c.b16 %v1401, %v1399
    %v1448 = vpack.c.b16 %v1404, %v1402
    %v1449 = vpack.c.b16 %v1405, %v1403
    %v1450 = vpack.c.b16 %v1408, %v1406
    %v1451 = vpack.c.b16 %v1409, %v1407
    %v1452 = vpack.c.b16 %v1412, %v1410
    %v1453 = vpack.c.b16 %v1413, %v1411
    %v1454 = vpack.c.b16 %v1416, %v1414
    %v1455 = vpack.c.b16 %v1417, %v1415
    %v1456 = vpack.c.b16 %v1420, %v1418
    %v1457 = vpack.c.b16 %v1421, %v1419
    %v1458 = vpack.c.b16 %v1424, %v1422
    %v1459 = vpack.c.b16 %v1425, %v1423
    %v1460 = vpack.c.b16 %v1428, %v1426
    %v1461 = vpack.c.b16 %v1429, %v1427
    %1494 = vmatprep.subr.bf16.mxu0 %v1431
    %1495 = vmatpush1.bf16.msra.mxu0 %v1430
    %1496 = vmatprep.subr.bf16.mxu0 %v1433
    %1497 = vmatpush1.bf16.msra.mxu0 %v1432
    %1498 = vmatprep.subr.bf16.mxu0 %v1435
    %1499 = vmatpush1.bf16.msra.mxu0 %v1434
    %1500 = vmatprep.subr.bf16.mxu0 %v1437
    %1501 = vmatpush1.bf16.msra.mxu0 %v1436
    %1502 = vmatprep.subr.bf16.mxu0 %v1439
    %1503 = vmatpush1.bf16.msra.mxu0 %v1438
    %1504 = vmatprep.subr.bf16.mxu0 %v1441
    %1505 = vmatpush1.bf16.msra.mxu0 %v1440
    %1506 = vmatprep.subr.bf16.mxu0 %v1443
    %1507 = vmatpush1.bf16.msra.mxu0 %v1442
    %1508 = vmatprep.subr.bf16.mxu0 %v1445
    %1509 = vmatpush1.bf16.msra.mxu0 %v1444
    %1510 = vmatprep.subr.bf16.mxu0 %v1447
    %1511 = vmatpush1.bf16.msra.mxu0 %v1446
    %1512 = vmatprep.subr.bf16.mxu0 %v1449
    %1513 = vmatpush1.bf16.msra.mxu0 %v1448
    %1514 = vmatprep.subr.bf16.mxu0 %v1451
    %1515 = vmatpush1.bf16.msra.mxu0 %v1450
    %1516 = vmatprep.subr.bf16.mxu0 %v1453
    %1517 = vmatpush1.bf16.msra.mxu0 %v1452
    %1518 = vmatprep.subr.bf16.mxu0 %v1455
    %1519 = vmatpush1.bf16.msra.mxu0 %v1454
    %1520 = vmatprep.subr.bf16.mxu0 %v1457
    %1521 = vmatpush1.bf16.msra.mxu0 %v1456
    %1522 = vmatprep.subr.bf16.mxu0 %v1459
    %1523 = vmatpush1.bf16.msra.mxu0 %v1458
    %1524 = vmatprep.subr.bf16.mxu0 %v1461
    %1525 = vmatpush1.bf16.msra.mxu0 %v1460
    %1526 = vmatprep.mubr.bf16.mxu0 %v1298
    %1527 = vmatmul.mubr.bf16.gmra.mrb[0].mxu0 %v1297
    %v1528 = vpop.f32.mrb[0].mxu0
    %v1529 = vadd.f32 0.0, %v1528
    %v1530 = vpop.f32.mrb[0].mxu0
    %v1531 = vadd.f32 0.0, %v1530
    %v1532 = vpop.f32.mrb[0].mxu0
    %v1533 = vadd.f32 0.0, %v1532
    %v1534 = vpop.f32.mrb[0].mxu0
    %v1535 = vadd.f32 0.0, %v1534
    %1536 = vmatprep.mubr.bf16.mxu0 %v1300
    %1537 = vmatmul.mubr.bf16.gmra.mrb[0].mxu0 %v1299
    %v1538 = vpop.f32.mrb[0].mxu0
    %v1539 = vadd.f32 0.0, %v1538
    %v1540 = vpop.f32.mrb[0].mxu0
    %v1541 = vadd.f32 0.0, %v1540
    %v1542 = vpop.f32.mrb[0].mxu0
    %v1543 = vadd.f32 0.0, %v1542
    %v1544 = vpop.f32.mrb[0].mxu0
    %v1545 = vadd.f32 0.0, %v1544
    %1546 = vdwg.mxu0
    %v1579 = vunpack.c.l.b16 %v1255
    %v1580 = vunpack.c.h.b16 %v1255
    %v1581 = vunpack.c.l.b16 %v1256
    %v1582 = vunpack.c.h.b16 %v1256
    %v1583 = vunpack.c.l.b16 %v1257
    %v1584 = vunpack.c.h.b16 %v1257
    %v1585 = vunpack.c.l.b16 %v1258
    %v1586 = vunpack.c.h.b16 %v1258
    %v1587 = vunpack.c.l.b16 %v1259
    %v1588 = vunpack.c.h.b16 %v1259
    %v1589 = vunpack.c.l.b16 %v1260
    %v1590 = vunpack.c.h.b16 %v1260
    %v1591 = vunpack.c.l.b16 %v1261
    %v1592 = vunpack.c.h.b16 %v1261
    %v1593 = vunpack.c.l.b16 %v1262
    %v1594 = vunpack.c.h.b16 %v1262
    %v1595 = vunpack.c.l.b16 %v1263
    %v1596 = vunpack.c.h.b16 %v1263
    %v1597 = vunpack.c.l.b16 %v1264
    %v1598 = vunpack.c.h.b16 %v1264
    %v1599 = vunpack.c.l.b16 %v1265
    %v1600 = vunpack.c.h.b16 %v1265
    %v1601 = vunpack.c.l.b16 %v1266
    %v1602 = vunpack.c.h.b16 %v1266
    %v1603 = vunpack.c.l.b16 %v1267
    %v1604 = vunpack.c.h.b16 %v1267
    %v1605 = vunpack.c.l.b16 %v1268
    %v1606 = vunpack.c.h.b16 %v1268
    %v1607 = vunpack.c.l.b16 %v1269
    %v1608 = vunpack.c.h.b16 %v1269
    %v1609 = vunpack.c.l.b16 %v1270
    %v1610 = vunpack.c.h.b16 %v1270
    %v1611 = vunpack.c.l.b16 %v1271
    %v1612 = vunpack.c.h.b16 %v1271
    %v1613 = vunpack.c.l.b16 %v1272
    %v1614 = vunpack.c.h.b16 %v1272
    %v1615 = vunpack.c.l.b16 %v1273
    %v1616 = vunpack.c.h.b16 %v1273
    %v1617 = vunpack.c.l.b16 %v1274
    %v1618 = vunpack.c.h.b16 %v1274
    %v1619 = vunpack.c.l.b16 %v1275
    %v1620 = vunpack.c.h.b16 %v1275
    %v1621 = vunpack.c.l.b16 %v1276
    %v1622 = vunpack.c.h.b16 %v1276
    %v1623 = vunpack.c.l.b16 %v1277
    %v1624 = vunpack.c.h.b16 %v1277
    %v1625 = vunpack.c.l.b16 %v1278
    %v1626 = vunpack.c.h.b16 %v1278
    %v1627 = vunpack.c.l.b16 %v1279
    %v1628 = vunpack.c.h.b16 %v1279
    %v1629 = vunpack.c.l.b16 %v1280
    %v1630 = vunpack.c.h.b16 %v1280
    %v1631 = vunpack.c.l.b16 %v1281
    %v1632 = vunpack.c.h.b16 %v1281
    %v1633 = vunpack.c.l.b16 %v1282
    %v1634 = vunpack.c.h.b16 %v1282
    %v1635 = vunpack.c.l.b16 %v1283
    %v1636 = vunpack.c.h.b16 %v1283
    %v1637 = vunpack.c.l.b16 %v1284
    %v1638 = vunpack.c.h.b16 %v1284
    %v1639 = vunpack.c.l.b16 %v1285
    %v1640 = vunpack.c.h.b16 %v1285
    %v1641 = vunpack.c.l.b16 %v1286
    %v1642 = vunpack.c.h.b16 %v1286
    %v1643 = vpack.c.b16 %v1581, %v1579
    %v1644 = vpack.c.b16 %v1582, %v1580
    %v1645 = vpack.c.b16 %v1585, %v1583
    %v1646 = vpack.c.b16 %v1586, %v1584
    %v1647 = vpack.c.b16 %v1589, %v1587
    %v1648 = vpack.c.b16 %v1590, %v1588
    %v1649 = vpack.c.b16 %v1593, %v1591
    %v1650 = vpack.c.b16 %v1594, %v1592
    %v1651 = vpack.c.b16 %v1597, %v1595
    %v1652 = vpack.c.b16 %v1598, %v1596
    %v1653 = vpack.c.b16 %v1601, %v1599
    %v1654 = vpack.c.b16 %v1602, %v1600
    %v1655 = vpack.c.b16 %v1605, %v1603
    %v1656 = vpack.c.b16 %v1606, %v1604
    %v1657 = vpack.c.b16 %v1609, %v1607
    %v1658 = vpack.c.b16 %v1610, %v1608
    %v1659 = vpack.c.b16 %v1613, %v1611
    %v1660 = vpack.c.b16 %v1614, %v1612
    %v1661 = vpack.c.b16 %v1617, %v1615
    %v1662 = vpack.c.b16 %v1618, %v1616
    %v1663 = vpack.c.b16 %v1621, %v1619
    %v1664 = vpack.c.b16 %v1622, %v1620
    %v1665 = vpack.c.b16 %v1625, %v1623
    %v1666 = vpack.c.b16 %v1626, %v1624
    %v1667 = vpack.c.b16 %v1629, %v1627
    %v1668 = vpack.c.b16 %v1630, %v1628
    %v1669 = vpack.c.b16 %v1633, %v1631
    %v1670 = vpack.c.b16 %v1634, %v1632
    %v1671 = vpack.c.b16 %v1637, %v1635
    %v1672 = vpack.c.b16 %v1638, %v1636
    %v1673 = vpack.c.b16 %v1641, %v1639
    %v1674 = vpack.c.b16 %v1642, %v1640
    %1707 = vmatprep.subr.bf16.mxu0 %v1644
    %1708 = vmatpush1.bf16.msra.mxu0 %v1643
    %1709 = vmatprep.subr.bf16.mxu0 %v1646
    %1710 = vmatpush1.bf16.msra.mxu0 %v1645
    %1711 = vmatprep.subr.bf16.mxu0 %v1648
    %1712 = vmatpush1.bf16.msra.mxu0 %v1647
    %1713 = vmatprep.subr.bf16.mxu0 %v1650
    %1714 = vmatpush1.bf16.msra.mxu0 %v1649
    %1715 = vmatprep.subr.bf16.mxu0 %v1652
    %1716 = vmatpush1.bf16.msra.mxu0 %v1651
    %1717 = vmatprep.subr.bf16.mxu0 %v1654
    %1718 = vmatpush1.bf16.msra.mxu0 %v1653
    %1719 = vmatprep.subr.bf16.mxu0 %v1656
    %1720 = vmatpush1.bf16.msra.mxu0 %v1655
    %1721 = vmatprep.subr.bf16.mxu0 %v1658
    %1722 = vmatpush1.bf16.msra.mxu0 %v1657
    %1723 = vmatprep.subr.bf16.mxu0 %v1660
    %1724 = vmatpush1.bf16.msra.mxu0 %v1659
    %1725 = vmatprep.subr.bf16.mxu0 %v1662
    %1726 = vmatpush1.bf16.msra.mxu0 %v1661
    %1727 = vmatprep.subr.bf16.mxu0 %v1664
    %1728 = vmatpush1.bf16.msra.mxu0 %v1663
    %1729 = vmatprep.subr.bf16.mxu0 %v1666
    %1730 = vmatpush1.bf16.msra.mxu0 %v1665
    %1731 = vmatprep.subr.bf16.mxu0 %v1668
    %1732 = vmatpush1.bf16.msra.mxu0 %v1667
    %1733 = vmatprep.subr.bf16.mxu0 %v1670
    %1734 = vmatpush1.bf16.msra.mxu0 %v1669
    %1735 = vmatprep.subr.bf16.mxu0 %v1672
    %1736 = vmatpush1.bf16.msra.mxu0 %v1671
    %1737 = vmatprep.subr.bf16.mxu0 %v1674
    %1738 = vmatpush1.bf16.msra.mxu0 %v1673
    %1739 = vmatprep.mubr.bf16.mxu0 %v1252
    %1740 = vmatmul.mubr.bf16.gmra.mrb[0].mxu0 %v1251
    %v1741 = vpop.f32.mrb[0].mxu0
    %v1742 = vadd.f32 %v1529, %v1741
    %v1743 = vpop.f32.mrb[0].mxu0
    %v1744 = vadd.f32 %v1531, %v1743
    %v1745 = vpop.f32.mrb[0].mxu0
    %v1746 = vadd.f32 %v1533, %v1745
    %v1747 = vpop.f32.mrb[0].mxu0
    %v1748 = vadd.f32 %v1535, %v1747
    %1749 = vmatprep.mubr.bf16.mxu0 %v1254
    %1750 = vmatmul.mubr.bf16.gmra.mrb[0].mxu0 %v1253
    %v1751 = vpop.f32.mrb[0].mxu0
    %v1752 = vadd.f32 %v1539, %v1751
    %v1753 = vpop.f32.mrb[0].mxu0
    %v1754 = vadd.f32 %v1541, %v1753
    %v1755 = vpop.f32.mrb[0].mxu0
    %v1756 = vadd.f32 %v1543, %v1755
    %v1757 = vpop.f32.mrb[0].mxu0
    %v1758 = vadd.f32 %v1545, %v1757
    %1759 = vdwg.mxu0
    %v1760 = vld [vmem:[#allocation2 + $0x10] sm:$0xfe]
    %v1761 = vld [vmem:[#allocation2 + $0x18] sm:$0xfe]
    %v1762 = vld [vmem:[#allocation2 + $0x20] sm:$0xff]
    %v1763 = vld [vmem:[#allocation2 + $0x28] sm:$0xff]
    %v1764 = vld [vmem:[#allocation2 + $0x30] sm:$0xff]
    %v1765 = vld [vmem:[#allocation2 + $0x38] sm:$0xff]
    %v1766 = vld [vmem:[#allocation2 + $0x40] sm:$0xff]
    %v1767 = vld [vmem:[#allocation2 + $0x48] sm:$0xff]
    %v1768 = vld [vmem:[#allocation2 + $0x50] sm:$0x1]
    %v1769 = vld [vmem:[#allocation2 + $0x58] sm:$0x1]
    %v1780 = vrot.slane %v1760, 1
    %v1781 = vrot.slane %v1762, 1
    %v1782 = vsel %vm463, %v1780, %v1781
    %v1783 = vrot.slane %v1761, 1
    %v1784 = vrot.slane %v1763, 1
    %v1785 = vsel %vm463, %v1783, %v1784
    %v1786 = vrot.slane %v1764, 1
    %v1787 = vsel %vm463, %v1781, %v1786
    %v1788 = vrot.slane %v1765, 1
    %v1789 = vsel %vm463, %v1784, %v1788
    %v1790 = vrot.slane %v1766, 1
    %v1791 = vsel %vm463, %v1786, %v1790
    %v1792 = vrot.slane %v1767, 1
    %v1793 = vsel %vm463, %v1788, %v1792
    %v1794 = vrot.slane %v1768, 1
    %v1795 = vsel %vm463, %v1790, %v1794
    %v1796 = vrot.slane %v1769, 1
    %v1797 = vsel %vm463, %v1792, %v1796
    %v1806 = vsel %vm454, %v1782, 0.0
    %v1807 = vsel %vm454, %v1785, 0.0
    %v1808 = vsel %vm455, %v1787, 0.0
    %v1809 = vsel %vm455, %v1789, 0.0
    %v1810 = vsel %vm456, %v1791, 0.0
    %v1811 = vsel %vm456, %v1793, 0.0
    %v1812 = vsel %vm457, %v1795, 0.0
    %v1813 = vsel %vm457, %v1797, 0.0
    %v1814 = vpack.c.bf16 %v1808, %v1806
    %v1815 = vpack.c.bf16 %v1809, %v1807
    %v1816 = vpack.c.bf16 %v1812, %v1810
    %v1817 = vpack.c.bf16 %v1813, %v1811
    %s1818 = scalar_lea.vmem [#allocation4], 512
    %v1819 = vld [vmem:[%s1818] sm:$0xff]
    %v1820 = vld [vmem:[%s1818 + $0x8] sm:$0xff]
    %v1821 = vld [vmem:[%s1818 + $0x10] sm:$0xff]
    %v1822 = vld [vmem:[%s1818 + $0x18] sm:$0xff]
    %v1823 = vld [vmem:[%s1818 + $0x20] sm:$0xff]
    %v1824 = vld [vmem:[%s1818 + $0x28] sm:$0xff]
    %v1825 = vld [vmem:[%s1818 + $0x30] sm:$0xff]
    %v1826 = vld [vmem:[%s1818 + $0x38] sm:$0xff]
    %v1827 = vld [vmem:[%s1818 + $0x40] sm:$0xff]
    %v1828 = vld [vmem:[%s1818 + $0x48] sm:$0xff]
    %v1829 = vld [vmem:[%s1818 + $0x50] sm:$0xff]
    %v1830 = vld [vmem:[%s1818 + $0x58] sm:$0xff]
    %v1831 = vld [vmem:[%s1818 + $0x60] sm:$0xff]
    %v1832 = vld [vmem:[%s1818 + $0x68] sm:$0xff]
    %v1833 = vld [vmem:[%s1818 + $0x70] sm:$0xff]
    %v1834 = vld [vmem:[%s1818 + $0x78] sm:$0xff]
    %v1835 = vld [vmem:[%s1818 + $0x80] sm:$0xff]
    %v1836 = vld [vmem:[%s1818 + $0x88] sm:$0xff]
    %v1837 = vld [vmem:[%s1818 + $0x90] sm:$0xff]
    %v1838 = vld [vmem:[%s1818 + $0x98] sm:$0xff]
    %v1839 = vld [vmem:[%s1818 + $0xa0] sm:$0xff]
    %v1840 = vld [vmem:[%s1818 + $0xa8] sm:$0xff]
    %v1841 = vld [vmem:[%s1818 + $0xb0] sm:$0xff]
    %v1842 = vld [vmem:[%s1818 + $0xb8] sm:$0xff]
    %v1843 = vld [vmem:[%s1818 + $0xc0] sm:$0xff]
    %v1844 = vld [vmem:[%s1818 + $0xc8] sm:$0xff]
    %v1845 = vld [vmem:[%s1818 + $0xd0] sm:$0xff]
    %v1846 = vld [vmem:[%s1818 + $0xd8] sm:$0xff]
    %v1847 = vld [vmem:[%s1818 + $0xe0] sm:$0xff]
    %v1848 = vld [vmem:[%s1818 + $0xe8] sm:$0xff]
    %v1849 = vld [vmem:[%s1818 + $0xf0] sm:$0xff]
    %v1850 = vld [vmem:[%s1818 + $0xf8] sm:$0xff]
    %v1883 = vunpack.c.l.b16 %v1819
    %v1884 = vunpack.c.h.b16 %v1819
    %v1885 = vunpack.c.l.b16 %v1820
    %v1886 = vunpack.c.h.b16 %v1820
    %v1887 = vunpack.c.l.b16 %v1821
    %v1888 = vunpack.c.h.b16 %v1821
    %v1889 = vunpack.c.l.b16 %v1822
    %v1890 = vunpack.c.h.b16 %v1822
    %v1891 = vunpack.c.l.b16 %v1823
    %v1892 = vunpack.c.h.b16 %v1823
    %v1893 = vunpack.c.l.b16 %v1824
    %v1894 = vunpack.c.h.b16 %v1824
    %v1895 = vunpack.c.l.b16 %v1825
    %v1896 = vunpack.c.h.b16 %v1825
    %v1897 = vunpack.c.l.b16 %v1826
    %v1898 = vunpack.c.h.b16 %v1826
    %v1899 = vunpack.c.l.b16 %v1827
    %v1900 = vunpack.c.h.b16 %v1827
    %v1901 = vunpack.c.l.b16 %v1828
    %v1902 = vunpack.c.h.b16 %v1828
    %v1903 = vunpack.c.l.b16 %v1829
    %v1904 = vunpack.c.h.b16 %v1829
    %v1905 = vunpack.c.l.b16 %v1830
    %v1906 = vunpack.c.h.b16 %v1830
    %v1907 = vunpack.c.l.b16 %v1831
    %v1908 = vunpack.c.h.b16 %v1831
    %v1909 = vunpack.c.l.b16 %v1832
    %v1910 = vunpack.c.h.b16 %v1832
    %v1911 = vunpack.c.l.b16 %v1833
    %v1912 = vunpack.c.h.b16 %v1833
    %v1913 = vunpack.c.l.b16 %v1834
    %v1914 = vunpack.c.h.b16 %v1834
    %v1915 = vunpack.c.l.b16 %v1835
    %v1916 = vunpack.c.h.b16 %v1835
    %v1917 = vunpack.c.l.b16 %v1836
    %v1918 = vunpack.c.h.b16 %v1836
    %v1919 = vunpack.c.l.b16 %v1837
    %v1920 = vunpack.c.h.b16 %v1837
    %v1921 = vunpack.c.l.b16 %v1838
    %v1922 = vunpack.c.h.b16 %v1838
    %v1923 = vunpack.c.l.b16 %v1839
    %v1924 = vunpack.c.h.b16 %v1839
    %v1925 = vunpack.c.l.b16 %v1840
    %v1926 = vunpack.c.h.b16 %v1840
    %v1927 = vunpack.c.l.b16 %v1841
    %v1928 = vunpack.c.h.b16 %v1841
    %v1929 = vunpack.c.l.b16 %v1842
    %v1930 = vunpack.c.h.b16 %v1842
    %v1931 = vunpack.c.l.b16 %v1843
    %v1932 = vunpack.c.h.b16 %v1843
    %v1933 = vunpack.c.l.b16 %v1844
    %v1934 = vunpack.c.h.b16 %v1844
    %v1935 = vunpack.c.l.b16 %v1845
    %v1936 = vunpack.c.h.b16 %v1845
    %v1937 = vunpack.c.l.b16 %v1846
    %v1938 = vunpack.c.h.b16 %v1846
    %v1939 = vunpack.c.l.b16 %v1847
    %v1940 = vunpack.c.h.b16 %v1847
    %v1941 = vunpack.c.l.b16 %v1848
    %v1942 = vunpack.c.h.b16 %v1848
    %v1943 = vunpack.c.l.b16 %v1849
    %v1944 = vunpack.c.h.b16 %v1849
    %v1945 = vunpack.c.l.b16 %v1850
    %v1946 = vunpack.c.h.b16 %v1850
    %v1947 = vpack.c.b16 %v1885, %v1883
    %v1948 = vpack.c.b16 %v1886, %v1884
    %v1949 = vpack.c.b16 %v1889, %v1887
    %v1950 = vpack.c.b16 %v1890, %v1888
    %v1951 = vpack.c.b16 %v1893, %v1891
    %v1952 = vpack.c.b16 %v1894, %v1892
    %v1953 = vpack.c.b16 %v1897, %v1895
    %v1954 = vpack.c.b16 %v1898, %v1896
    %v1955 = vpack.c.b16 %v1901, %v1899
    %v1956 = vpack.c.b16 %v1902, %v1900
    %v1957 = vpack.c.b16 %v1905, %v1903
    %v1958 = vpack.c.b16 %v1906, %v1904
    %v1959 = vpack.c.b16 %v1909, %v1907
    %v1960 = vpack.c.b16 %v1910, %v1908
    %v1961 = vpack.c.b16 %v1913, %v1911
    %v1962 = vpack.c.b16 %v1914, %v1912
    %v1963 = vpack.c.b16 %v1917, %v1915
    %v1964 = vpack.c.b16 %v1918, %v1916
    %v1965 = vpack.c.b16 %v1921, %v1919
    %v1966 = vpack.c.b16 %v1922, %v1920
    %v1967 = vpack.c.b16 %v1925, %v1923
    %v1968 = vpack.c.b16 %v1926, %v1924
    %v1969 = vpack.c.b16 %v1929, %v1927
    %v1970 = vpack.c.b16 %v1930, %v1928
    %v1971 = vpack.c.b16 %v1933, %v1931
    %v1972 = vpack.c.b16 %v1934, %v1932
    %v1973 = vpack.c.b16 %v1937, %v1935
    %v1974 = vpack.c.b16 %v1938, %v1936
    %v1975 = vpack.c.b16 %v1941, %v1939
    %v1976 = vpack.c.b16 %v1942, %v1940
    %v1977 = vpack.c.b16 %v1945, %v1943
    %v1978 = vpack.c.b16 %v1946, %v1944
    %2011 = vmatprep.subr.bf16.mxu0 %v1948
    %2012 = vmatpush1.bf16.msra.mxu0 %v1947
    %2013 = vmatprep.subr.bf16.mxu0 %v1950
    %2014 = vmatpush1.bf16.msra.mxu0 %v1949
    %2015 = vmatprep.subr.bf16.mxu0 %v1952
    %2016 = vmatpush1.bf16.msra.mxu0 %v1951
    %2017 = vmatprep.subr.bf16.mxu0 %v1954
    %2018 = vmatpush1.bf16.msra.mxu0 %v1953
    %2019 = vmatprep.subr.bf16.mxu0 %v1956
    %2020 = vmatpush1.bf16.msra.mxu0 %v1955
    %2021 = vmatprep.subr.bf16.mxu0 %v1958
    %2022 = vmatpush1.bf16.msra.mxu0 %v1957
    %2023 = vmatprep.subr.bf16.mxu0 %v1960
    %2024 = vmatpush1.bf16.msra.mxu0 %v1959
    %2025 = vmatprep.subr.bf16.mxu0 %v1962
    %2026 = vmatpush1.bf16.msra.mxu0 %v1961
    %2027 = vmatprep.subr.bf16.mxu0 %v1964
    %2028 = vmatpush1.bf16.msra.mxu0 %v1963
    %2029 = vmatprep.subr.bf16.mxu0 %v1966
    %2030 = vmatpush1.bf16.msra.mxu0 %v1965
    %2031 = vmatprep.subr.bf16.mxu0 %v1968
    %2032 = vmatpush1.bf16.msra.mxu0 %v1967
    %2033 = vmatprep.subr.bf16.mxu0 %v1970
    %2034 = vmatpush1.bf16.msra.mxu0 %v1969
    %2035 = vmatprep.subr.bf16.mxu0 %v1972
    %2036 = vmatpush1.bf16.msra.mxu0 %v1971
    %2037 = vmatprep.subr.bf16.mxu0 %v1974
    %2038 = vmatpush1.bf16.msra.mxu0 %v1973
    %2039 = vmatprep.subr.bf16.mxu0 %v1976
    %2040 = vmatpush1.bf16.msra.mxu0 %v1975
    %2041 = vmatprep.subr.bf16.mxu0 %v1978
    %2042 = vmatpush1.bf16.msra.mxu0 %v1977
    %2043 = vmatprep.mubr.bf16.mxu0 %v1815
    %2044 = vmatmul.mubr.bf16.gmra.mrb[0].mxu0 %v1814
    %v2045 = vpop.f32.mrb[0].mxu0
    %v2046 = vadd.f32 0.0, %v2045
    %v2047 = vpop.f32.mrb[0].mxu0
    %v2048 = vadd.f32 0.0, %v2047
    %v2049 = vpop.f32.mrb[0].mxu0
    %v2050 = vadd.f32 0.0, %v2049
    %v2051 = vpop.f32.mrb[0].mxu0
    %v2052 = vadd.f32 0.0, %v2051
    %2053 = vmatprep.mubr.bf16.mxu0 %v1817
    %2054 = vmatmul.mubr.bf16.gmra.mrb[0].mxu0 %v1816
    %v2055 = vpop.f32.mrb[0].mxu0
    %v2056 = vadd.f32 0.0, %v2055
    %v2057 = vpop.f32.mrb[0].mxu0
    %v2058 = vadd.f32 0.0, %v2057
    %v2059 = vpop.f32.mrb[0].mxu0
    %v2060 = vadd.f32 0.0, %v2059
    %v2061 = vpop.f32.mrb[0].mxu0
    %v2062 = vadd.f32 0.0, %v2061
    %2063 = vdwg.mxu0
    %v2064 = vadd.f32 %v1742, %v2046
    %v2065 = vadd.f32 %v1744, %v2048
    %v2066 = vadd.f32 %v1746, %v2050
    %v2067 = vadd.f32 %v1748, %v2052
    %v2068 = vadd.f32 %v1752, %v2056
    %v2069 = vadd.f32 %v1754, %v2058
    %v2070 = vadd.f32 %v1756, %v2060
    %v2071 = vadd.f32 %v1758, %v2062
    %v2072 = vadd.f32 %v2064, %v2066
    %v2073 = vrot.slane %v2072, 4
    %v2074 = vadd.f32 %v2072, %v2073
    %v2075 = vrot.slane %v2074, 2
    %v2076 = vadd.f32 %v2074, %v2075
    %v2077 = vrot.slane %v2076, 1
    %v2078 = vadd.f32 %v2076, %v2077
    %v2079 = vadd.f32 %v2065, %v2067
    %v2080 = vrot.slane %v2079, 4
    %v2081 = vadd.f32 %v2079, %v2080
    %v2082 = vrot.slane %v2081, 2
    %v2083 = vadd.f32 %v2081, %v2082
    %v2084 = vrot.slane %v2083, 1
    %v2085 = vadd.f32 %v2083, %v2084
    %v2086 = vadd.f32 %v2068, %v2070
    %v2087 = vrot.slane %v2086, 4
    %v2088 = vadd.f32 %v2086, %v2087
    %v2089 = vrot.slane %v2088, 2
    %v2090 = vadd.f32 %v2088, %v2089
    %v2091 = vrot.slane %v2090, 1
    %v2092 = vadd.f32 %v2090, %v2091
    %v2093 = vadd.f32 %v2069, %v2071
    %v2094 = vrot.slane %v2093, 4
    %v2095 = vadd.f32 %v2093, %v2094
    %v2096 = vrot.slane %v2095, 2
    %v2097 = vadd.f32 %v2095, %v2096
    %v2098 = vrot.slane %v2097, 1
    %v2099 = vadd.f32 %v2097, %v2098
    %v2100 = vmul.f32 %v2064, %v2064
    %v2101 = vmul.f32 %v2065, %v2065
    %v2102 = vmul.f32 %v2066, %v2066
    %v2103 = vmul.f32 %v2067, %v2067
    %v2104 = vmul.f32 %v2068, %v2068
    %v2105 = vmul.f32 %v2069, %v2069
    %v2106 = vmul.f32 %v2070, %v2070
    %v2107 = vmul.f32 %v2071, %v2071
    %v2108 = vadd.f32 %v2100, %v2102
    %v2109 = vrot.slane %v2108, 4
    %v2110 = vadd.f32 %v2108, %v2109
    %v2111 = vrot.slane %v2110, 2
    %v2112 = vadd.f32 %v2110, %v2111
    %v2113 = vrot.slane %v2112, 1
    %v2114 = vadd.f32 %v2112, %v2113
    %v2115 = vadd.f32 %v2101, %v2103
    %v2116 = vrot.slane %v2115, 4
    %v2117 = vadd.f32 %v2115, %v2116
    %v2118 = vrot.slane %v2117, 2
    %v2119 = vadd.f32 %v2117, %v2118
    %v2120 = vrot.slane %v2119, 1
    %v2121 = vadd.f32 %v2119, %v2120
    %v2122 = vadd.f32 %v2104, %v2106
    %v2123 = vrot.slane %v2122, 4
    %v2124 = vadd.f32 %v2122, %v2123
    %v2125 = vrot.slane %v2124, 2
    %v2126 = vadd.f32 %v2124, %v2125
    %v2127 = vrot.slane %v2126, 1
    %v2128 = vadd.f32 %v2126, %v2127
    %v2129 = vadd.f32 %v2105, %v2107
    %v2130 = vrot.slane %v2129, 4
    %v2131 = vadd.f32 %v2129, %v2130
    %v2132 = vrot.slane %v2131, 2
    %v2133 = vadd.f32 %v2131, %v2132
    %v2134 = vrot.slane %v2133, 1
    %v2135 = vadd.f32 %v2133, %v2134
    %v2136 = vld [vmem:[%s10] sm:$0xff]
    %v2137 = vld [vmem:[%s10 + $0x8] sm:$0xff]
    %v2138 = vld [vmem:[%s10 + $0x10] sm:$0xff]
    %v2139 = vld [vmem:[%s10 + $0x18] sm:$0xff]
    %v2140 = vld [vmem:[%s10 + $0x20] sm:$0xff]
    %v2141 = vld [vmem:[%s10 + $0x28] sm:$0xff]
    %v2142 = vld [vmem:[%s10 + $0x30] sm:$0xff]
    %v2143 = vld [vmem:[%s10 + $0x38] sm:$0xff]
    %v2144 = vld [vmem:[%s10 + $0x40] sm:$0xff]
    %v2145 = vld [vmem:[%s10 + $0x48] sm:$0xff]
    %v2146 = vld [vmem:[%s10 + $0x50] sm:$0xff]
    %v2147 = vld [vmem:[%s10 + $0x58] sm:$0xff]
    %v2148 = vld [vmem:[%s10 + $0x60] sm:$0xff]
    %v2149 = vld [vmem:[%s10 + $0x68] sm:$0xff]
    %v2150 = vld [vmem:[%s10 + $0x70] sm:$0xff]
    %v2151 = vld [vmem:[%s10 + $0x78] sm:$0xff]
    %v2152 = vld [vmem:[%s10 + $0x80] sm:$0xff]
    %v2153 = vld [vmem:[%s10 + $0x88] sm:$0xff]
    %v2154 = vld [vmem:[%s10 + $0x90] sm:$0xff]
    %v2155 = vld [vmem:[%s10 + $0x98] sm:$0xff]
    %v2156 = vld [vmem:[%s10 + $0xa0] sm:$0xff]
    %v2157 = vld [vmem:[%s10 + $0xa8] sm:$0xff]
    %v2158 = vld [vmem:[%s10 + $0xb0] sm:$0xff]
    %v2159 = vld [vmem:[%s10 + $0xb8] sm:$0xff]
    %v2160 = vld [vmem:[%s10 + $0xc0] sm:$0xff]
    %v2161 = vld [vmem:[%s10 + $0xc8] sm:$0xff]
    %v2162 = vld [vmem:[%s10 + $0xd0] sm:$0xff]
    %v2163 = vld [vmem:[%s10 + $0xd8] sm:$0xff]
    %v2164 = vld [vmem:[%s10 + $0xe0] sm:$0xff]
    %v2165 = vld [vmem:[%s10 + $0xe8] sm:$0xff]
    %v2166 = vld [vmem:[%s10 + $0xf0] sm:$0xff]
    %v2167 = vld [vmem:[%s10 + $0xf8] sm:$0xff]
    %v2172 = vsel %vm699, %v2092, %v2078
    %v2173 = vsel %vm699, %v2099, %v2085
    %2176 = vmatprep.subr.mxu0 0.0
    %2177 = vmatpush1.msra.mxu0 %v2136
    %2178 = vmatprep.subr.mxu0 0.0
    %2179 = vmatpush1.msra.mxu0 %v2137
    %2180 = vmatprep.subr.mxu0 0.0
    %2181 = vmatpush1.msra.mxu0 %v2138
    %2182 = vmatprep.subr.mxu0 0.0
    %2183 = vmatpush1.msra.mxu0 %v2139
    %2184 = vmatprep.subr.mxu0 0.0
    %2185 = vmatpush1.msra.mxu0 %v2140
    %2186 = vmatprep.subr.mxu0 0.0
    %2187 = vmatpush1.msra.mxu0 %v2141
    %2188 = vmatprep.subr.mxu0 0.0
    %2189 = vmatpush1.msra.mxu0 %v2142
    %2190 = vmatprep.subr.mxu0 0.0
    %2191 = vmatpush1.msra.mxu0 %v2143
    %2192 = vmatprep.subr.mxu0 0.0
    %2193 = vmatpush1.msra.mxu0 %v2144
    %2194 = vmatprep.subr.mxu0 0.0
    %2195 = vmatpush1.msra.mxu0 %v2145
    %2196 = vmatprep.subr.mxu0 0.0
    %2197 = vmatpush1.msra.mxu0 %v2146
    %2198 = vmatprep.subr.mxu0 0.0
    %2199 = vmatpush1.msra.mxu0 %v2147
    %2200 = vmatprep.subr.mxu0 0.0
    %2201 = vmatpush1.msra.mxu0 %v2148
    %2202 = vmatprep.subr.mxu0 0.0
    %2203 = vmatpush1.msra.mxu0 %v2149
    %2204 = vmatprep.subr.mxu0 0.0
    %2205 = vmatpush1.msra.mxu0 %v2150
    %2206 = vmatprep.subr.mxu0 0.0
    %2207 = vmatpush1.msra.mxu0 %v2151
    %2208 = vmatprep.subr.mxu0 0.0
    %2209 = vmatpush1.msra.mxu0 %v2152
    %2210 = vmatprep.subr.mxu0 0.0
    %2211 = vmatpush1.msra.mxu0 %v2153
    %2212 = vmatprep.subr.mxu0 0.0
    %2213 = vmatpush1.msra.mxu0 %v2154
    %2214 = vmatprep.subr.mxu0 0.0
    %2215 = vmatpush1.msra.mxu0 %v2155
    %2216 = vmatprep.subr.mxu0 0.0
    %2217 = vmatpush1.msra.mxu0 %v2156
    %2218 = vmatprep.subr.mxu0 0.0
    %2219 = vmatpush1.msra.mxu0 %v2157
    %2220 = vmatprep.subr.mxu0 0.0
    %2221 = vmatpush1.msra.mxu0 %v2158
    %2222 = vmatprep.subr.mxu0 0.0
    %2223 = vmatpush1.msra.mxu0 %v2159
    %2224 = vmatprep.subr.mxu0 0.0
    %2225 = vmatpush1.msra.mxu0 %v2160
    %2226 = vmatprep.subr.mxu0 0.0
    %2227 = vmatpush1.msra.mxu0 %v2161
    %2228 = vmatprep.subr.mxu0 0.0
    %2229 = vmatpush1.msra.mxu0 %v2162
    %2230 = vmatprep.subr.mxu0 0.0
    %2231 = vmatpush1.msra.mxu0 %v2163
    %2232 = vmatprep.subr.mxu0 0.0
    %2233 = vmatpush1.msra.mxu0 %v2164
    %2234 = vmatprep.subr.mxu0 0.0
    %2235 = vmatpush1.msra.mxu0 %v2165
    %2236 = vmatprep.subr.mxu0 0.0
    %2237 = vmatpush1.msra.mxu0 %v2166
    %2238 = vmatprep.subr.mxu0 0.0
    %2239 = vmatpush1.msra.mxu0 %v2167
    %2240 = vmatprep.mubr.f32.mxu0 %v2173
    %2241 = vmatmul.mubr.f32.gmra.mrb[0].mxu0 %v2172
    %v2242 = vpop.f32.mrb[0].mxu0
    %v2243 = vadd.f32 0.0, %v2242
    %v2244 = vpop.f32.mrb[0].mxu0
    %2245 = vdwg.mxu0
    %v2250 = vsel %vm699, %v2128, %v2114
    %v2251 = vsel %vm699, %v2135, %v2121
    %2254 = vmatprep.subr.mxu0 0.0
    %2255 = vmatpush1.msra.mxu0 %v2136
    %2256 = vmatprep.subr.mxu0 0.0
    %2257 = vmatpush1.msra.mxu0 %v2137
    %2258 = vmatprep.subr.mxu0 0.0
    %2259 = vmatpush1.msra.mxu0 %v2138
    %2260 = vmatprep.subr.mxu0 0.0
    %2261 = vmatpush1.msra.mxu0 %v2139
    %2262 = vmatprep.subr.mxu0 0.0
    %2263 = vmatpush1.msra.mxu0 %v2140
    %2264 = vmatprep.subr.mxu0 0.0
    %2265 = vmatpush1.msra.mxu0 %v2141
    %2266 = vmatprep.subr.mxu0 0.0
    %2267 = vmatpush1.msra.mxu0 %v2142
    %2268 = vmatprep.subr.mxu0 0.0
    %2269 = vmatpush1.msra.mxu0 %v2143
    %2270 = vmatprep.subr.mxu0 0.0
    %2271 = vmatpush1.msra.mxu0 %v2144
    %2272 = vmatprep.subr.mxu0 0.0
    %2273 = vmatpush1.msra.mxu0 %v2145
    %2274 = vmatprep.subr.mxu0 0.0
    %2275 = vmatpush1.msra.mxu0 %v2146
    %2276 = vmatprep.subr.mxu0 0.0
    %2277 = vmatpush1.msra.mxu0 %v2147
    %2278 = vmatprep.subr.mxu0 0.0
    %2279 = vmatpush1.msra.mxu0 %v2148
    %2280 = vmatprep.subr.mxu0 0.0
    %2281 = vmatpush1.msra.mxu0 %v2149
    %2282 = vmatprep.subr.mxu0 0.0
    %2283 = vmatpush1.msra.mxu0 %v2150
    %2284 = vmatprep.subr.mxu0 0.0
    %2285 = vmatpush1.msra.mxu0 %v2151
    %2286 = vmatprep.subr.mxu0 0.0
    %2287 = vmatpush1.msra.mxu0 %v2152
    %2288 = vmatprep.subr.mxu0 0.0
    %2289 = vmatpush1.msra.mxu0 %v2153
    %2290 = vmatprep.subr.mxu0 0.0
    %2291 = vmatpush1.msra.mxu0 %v2154
    %2292 = vmatprep.subr.mxu0 0.0
    %2293 = vmatpush1.msra.mxu0 %v2155
    %2294 = vmatprep.subr.mxu0 0.0
    %2295 = vmatpush1.msra.mxu0 %v2156
    %2296 = vmatprep.subr.mxu0 0.0
    %2297 = vmatpush1.msra.mxu0 %v2157
    %2298 = vmatprep.subr.mxu0 0.0
    %2299 = vmatpush1.msra.mxu0 %v2158
    %2300 = vmatprep.subr.mxu0 0.0
    %2301 = vmatpush1.msra.mxu0 %v2159
    %2302 = vmatprep.subr.mxu0 0.0
    %2303 = vmatpush1.msra.mxu0 %v2160
    %2304 = vmatprep.subr.mxu0 0.0
    %2305 = vmatpush1.msra.mxu0 %v2161
    %2306 = vmatprep.subr.mxu0 0.0
    %2307 = vmatpush1.msra.mxu0 %v2162
    %2308 = vmatprep.subr.mxu0 0.0
    %2309 = vmatpush1.msra.mxu0 %v2163
    %2310 = vmatprep.subr.mxu0 0.0
    %2311 = vmatpush1.msra.mxu0 %v2164
    %2312 = vmatprep.subr.mxu0 0.0
    %2313 = vmatpush1.msra.mxu0 %v2165
    %2314 = vmatprep.subr.mxu0 0.0
    %2315 = vmatpush1.msra.mxu0 %v2166
    %2316 = vmatprep.subr.mxu0 0.0
    %2317 = vmatpush1.msra.mxu0 %v2167
    %2318 = vmatprep.mubr.f32.mxu0 %v2251
    %2319 = vmatmul.mubr.f32.gmra.mrb[0].mxu0 %v2250
    %v2320 = vpop.f32.mrb[0].mxu0
    %v2321 = vadd.f32 0.0, %v2320
    %v2322 = vpop.f32.mrb[0].mxu0
    %2323 = vdwg.mxu0
    %v2324 = vmul.f32 %v2243, %v2243
    %v2325 = vsub.f32 %v2321, %v2324
    %v2326 = vmax.f32 %v2325, 0.0
    %v2327 = vadd.f32 %v2326, 1e-05
    %v2328 = vrsqrt.pop %v2327
    %v2329 = vld [vmem:[%s5] sm:$0x1]
    %v2331 = vlaneseq
    %v2332 = vshrl.u32 %v2331, 7
    %v2333 = vsub.s32 0, %v2332
    %v2334 = vrot.slane %v2329, %v2333
    %v2336 = vmul.f32 %v2328, %v2334
    %v2337 = vld [vmem:[%s6] sm:$0x1]
    %v2338 = vmul.f32 %v2243, %v2336
    %v2340 = vlaneseq
    %v2341 = vshrl.u32 %v2340, 7
    %v2342 = vsub.s32 0, %v2341
    %v2343 = vrot.slane %v2337, %v2342
    %v2345 = vsub.f32 %v2343, %v2338
    %v2346 = vld [vmem:[%s11] sm:$0xff]
    %v2347 = vld [vmem:[%s11 + $0x8] sm:$0xff]
    %v2348 = vld [vmem:[%s11 + $0x10] sm:$0xff]
    %v2349 = vld [vmem:[%s11 + $0x18] sm:$0xff]
    %v2351 = vsel %vm878, %v2336, 0
    %2353 = vmatprep.subr.mxu0 %v2347
    %2354 = vmatpush1.msra.mxu0 %v2346
    %2355 = vmatprep.subr.mxu0 %v2349
    %2356 = vmatpush1.msra.mxu0 %v2348
    %2357 = vmatprep.subr.mxu0 0.0
    %2358 = vmatpush1.msra.mxu0 0.0
    %2359 = vmatprep.subr.mxu0 0.0
    %2360 = vmatpush1.msra.mxu0 0.0
    %2361 = vmatprep.subr.mxu0 0.0
    %2362 = vmatpush1.msra.mxu0 0.0
    %2363 = vmatprep.subr.mxu0 0.0
    %2364 = vmatpush1.msra.mxu0 0.0
    %2365 = vmatprep.subr.mxu0 0.0
    %2366 = vmatpush1.msra.mxu0 0.0
    %2367 = vmatprep.subr.mxu0 0.0
    %2368 = vmatpush1.msra.mxu0 0.0
    %2369 = vmatprep.subr.mxu0 0.0
    %2370 = vmatpush1.msra.mxu0 0.0
    %2371 = vmatprep.subr.mxu0 0.0
    %2372 = vmatpush1.msra.mxu0 0.0
    %2373 = vmatprep.subr.mxu0 0.0
    %2374 = vmatpush1.msra.mxu0 0.0
    %2375 = vmatprep.subr.mxu0 0.0
    %2376 = vmatpush1.msra.mxu0 0.0
    %2377 = vmatprep.subr.mxu0 0.0
    %2378 = vmatpush1.msra.mxu0 0.0
    %2379 = vmatprep.subr.mxu0 0.0
    %2380 = vmatpush1.msra.mxu0 0.0
    %2381 = vmatprep.subr.mxu0 0.0
    %2382 = vmatpush1.msra.mxu0 0.0
    %2383 = vmatprep.subr.mxu0 0.0
    %2384 = vmatpush1.msra.mxu0 0.0
    %2385 = vmatprep.subr.mxu0 0.0
    %2386 = vmatpush1.msra.mxu0 0.0
    %2387 = vmatprep.subr.mxu0 0.0
    %2388 = vmatpush1.msra.mxu0 0.0
    %2389 = vmatprep.subr.mxu0 0.0
    %2390 = vmatpush1.msra.mxu0 0.0
    %2391 = vmatprep.subr.mxu0 0.0
    %2392 = vmatpush1.msra.mxu0 0.0
    %2393 = vmatprep.subr.mxu0 0.0
    %2394 = vmatpush1.msra.mxu0 0.0
    %2395 = vmatprep.subr.mxu0 0.0
    %2396 = vmatpush1.msra.mxu0 0.0
    %2397 = vmatprep.subr.mxu0 0.0
    %2398 = vmatpush1.msra.mxu0 0.0
    %2399 = vmatprep.subr.mxu0 0.0
    %2400 = vmatpush1.msra.mxu0 0.0
    %2401 = vmatprep.subr.mxu0 0.0
    %2402 = vmatpush1.msra.mxu0 0.0
    %2403 = vmatprep.subr.mxu0 0.0
    %2404 = vmatpush1.msra.mxu0 0.0
    %2405 = vmatprep.subr.mxu0 0.0
    %2406 = vmatpush1.msra.mxu0 0.0
    %2407 = vmatprep.subr.mxu0 0.0
    %2408 = vmatpush1.msra.mxu0 0.0
    %2409 = vmatprep.subr.mxu0 0.0
    %2410 = vmatpush1.msra.mxu0 0.0
    %2411 = vmatprep.subr.mxu0 0.0
    %2412 = vmatpush1.msra.mxu0 0.0
    %2413 = vmatprep.subr.mxu0 0.0
    %2414 = vmatpush1.msra.mxu0 0.0
    %2415 = vmatprep.subr.mxu0 0.0
    %2416 = vmatpush1.msra.mxu0 0.0
    %2417 = vmatprep.mubr.f32.mxu0 0.0
    %2418 = vmatmul.mubr.f32.gmra.mrb[0].mxu0 %v2351
    %v2419 = vpop.f32.mrb[0].mxu0
    %v2420 = vadd.f32 0.0, %v2419
    %v2421 = vpop.f32.mrb[0].mxu0
    %v2422 = vadd.f32 0.0, %v2421
    %2423 = vdwg.mxu0
    %v2425 = vsel %vm878, %v2345, 0
    %2427 = vmatprep.subr.mxu0 %v2347
    %2428 = vmatpush1.msra.mxu0 %v2346
    %2429 = vmatprep.subr.mxu0 %v2349
    %2430 = vmatpush1.msra.mxu0 %v2348
    %2431 = vmatprep.subr.mxu0 0.0
    %2432 = vmatpush1.msra.mxu0 0.0
    %2433 = vmatprep.subr.mxu0 0.0
    %2434 = vmatpush1.msra.mxu0 0.0
    %2435 = vmatprep.subr.mxu0 0.0
    %2436 = vmatpush1.msra.mxu0 0.0
    %2437 = vmatprep.subr.mxu0 0.0
    %2438 = vmatpush1.msra.mxu0 0.0
    %2439 = vmatprep.subr.mxu0 0.0
    %2440 = vmatpush1.msra.mxu0 0.0
    %2441 = vmatprep.subr.mxu0 0.0
    %2442 = vmatpush1.msra.mxu0 0.0
    %2443 = vmatprep.subr.mxu0 0.0
    %2444 = vmatpush1.msra.mxu0 0.0
    %2445 = vmatprep.subr.mxu0 0.0
    %2446 = vmatpush1.msra.mxu0 0.0
    %2447 = vmatprep.subr.mxu0 0.0
    %2448 = vmatpush1.msra.mxu0 0.0
    %2449 = vmatprep.subr.mxu0 0.0
    %2450 = vmatpush1.msra.mxu0 0.0
    %2451 = vmatprep.subr.mxu0 0.0
    %2452 = vmatpush1.msra.mxu0 0.0
    %2453 = vmatprep.subr.mxu0 0.0
    %2454 = vmatpush1.msra.mxu0 0.0
    %2455 = vmatprep.subr.mxu0 0.0
    %2456 = vmatpush1.msra.mxu0 0.0
    %2457 = vmatprep.subr.mxu0 0.0
    %2458 = vmatpush1.msra.mxu0 0.0
    %2459 = vmatprep.subr.mxu0 0.0
    %2460 = vmatpush1.msra.mxu0 0.0
    %2461 = vmatprep.subr.mxu0 0.0
    %2462 = vmatpush1.msra.mxu0 0.0
    %2463 = vmatprep.subr.mxu0 0.0
    %2464 = vmatpush1.msra.mxu0 0.0
    %2465 = vmatprep.subr.mxu0 0.0
    %2466 = vmatpush1.msra.mxu0 0.0
    %2467 = vmatprep.subr.mxu0 0.0
    %2468 = vmatpush1.msra.mxu0 0.0
    %2469 = vmatprep.subr.mxu0 0.0
    %2470 = vmatpush1.msra.mxu0 0.0
    %2471 = vmatprep.subr.mxu0 0.0
    %2472 = vmatpush1.msra.mxu0 0.0
    %2473 = vmatprep.subr.mxu0 0.0
    %2474 = vmatpush1.msra.mxu0 0.0
    %2475 = vmatprep.subr.mxu0 0.0
    %2476 = vmatpush1.msra.mxu0 0.0
    %2477 = vmatprep.subr.mxu0 0.0
    %2478 = vmatpush1.msra.mxu0 0.0
    %2479 = vmatprep.subr.mxu0 0.0
    %2480 = vmatpush1.msra.mxu0 0.0
    %2481 = vmatprep.subr.mxu0 0.0
    %2482 = vmatpush1.msra.mxu0 0.0
    %2483 = vmatprep.subr.mxu0 0.0
    %2484 = vmatpush1.msra.mxu0 0.0
    %2485 = vmatprep.subr.mxu0 0.0
    %2486 = vmatpush1.msra.mxu0 0.0
    %2487 = vmatprep.subr.mxu0 0.0
    %2488 = vmatpush1.msra.mxu0 0.0
    %2489 = vmatprep.subr.mxu0 0.0
    %2490 = vmatpush1.msra.mxu0 0.0
    %2491 = vmatprep.mubr.f32.mxu0 0.0
    %2492 = vmatmul.mubr.f32.gmra.mrb[0].mxu0 %v2425
    %v2493 = vpop.f32.mrb[0].mxu0
    %v2494 = vadd.f32 0.0, %v2493
    %v2495 = vpop.f32.mrb[0].mxu0
    %v2496 = vadd.f32 0.0, %v2495
    %2497 = vdwg.mxu0
    %v2500 = vcombine.low %v2420, %v2422
    %v2502 = vunpack.c.l.s4 1966171168
    %v2503 = vunpack.c.0.s8 %v2502
    %v2504 = vlaneseq
    %v2505 = vshrl.u32 %v2504, 7
    %v2506 = vsub.s32 %v2503, %v2505
    %v2507 = vrot.slane %v2500, %v2506
    %v2508 = vcombine.high %v2507, %v2507
    %v2510 = vunpack.c.l.s4 1966171168
    %v2511 = vunpack.c.0.s8 %v2510
    %v2512 = vlaneseq
    %v2513 = vshrl.u32 %v2512, 7
    %v2514 = vsub.s32 %v2511, %v2513
    %v2515 = vrot.slane %v2507, %v2514
    %v2517 = vunpack.c.l.s4 1966171168
    %v2518 = vunpack.c.0.s8 %v2517
    %v2519 = vlaneseq
    %v2520 = vshrl.u32 %v2519, 7
    %v2521 = vsub.s32 %v2518, %v2520
    %v2522 = vrot.slane %v2508, %v2521
    %v2523 = vlaneseq
    %v2524 = vshrl.u32 %v2523, 7
    %v2525 = vsub.s32 0, %v2524
    %v2526 = vrot.slane %v2515, %v2525
    %v2527 = vlaneseq
    %v2528 = vshrl.u32 %v2527, 7
    %v2529 = vsub.s32 1, %v2528
    %v2530 = vrot.slane %v2515, %v2529
    %v2531 = vlaneseq
    %v2532 = vshrl.u32 %v2531, 7
    %v2533 = vsub.s32 0, %v2532
    %v2534 = vrot.slane %v2522, %v2533
    %v2535 = vlaneseq
    %v2536 = vshrl.u32 %v2535, 7
    %v2537 = vsub.s32 1, %v2536
    %v2538 = vrot.slane %v2522, %v2537
    %v2543 = vmul.f32 %v2064, %v2526
    %v2544 = vmul.f32 %v2065, %v2530
    %v2545 = vmul.f32 %v2066, %v2526
    %v2546 = vmul.f32 %v2067, %v2530
    %v2547 = vmul.f32 %v2068, %v2534
    %v2548 = vmul.f32 %v2069, %v2538
    %v2549 = vmul.f32 %v2070, %v2534
    %v2550 = vmul.f32 %v2071, %v2538
    %v2553 = vcombine.low %v2494, %v2496
    %v2555 = vunpack.c.l.s4 1966171168
    %v2556 = vunpack.c.0.s8 %v2555
    %v2557 = vlaneseq
    %v2558 = vshrl.u32 %v2557, 7
    %v2559 = vsub.s32 %v2556, %v2558
    %v2560 = vrot.slane %v2553, %v2559
    %v2561 = vcombine.high %v2560, %v2560
    %v2563 = vunpack.c.l.s4 1966171168
    %v2564 = vunpack.c.0.s8 %v2563
    %v2565 = vlaneseq
    %v2566 = vshrl.u32 %v2565, 7
    %v2567 = vsub.s32 %v2564, %v2566
    %v2568 = vrot.slane %v2560, %v2567
    %v2570 = vunpack.c.l.s4 1966171168
    %v2571 = vunpack.c.0.s8 %v2570
    %v2572 = vlaneseq
    %v2573 = vshrl.u32 %v2572, 7
    %v2574 = vsub.s32 %v2571, %v2573
    %v2575 = vrot.slane %v2561, %v2574
    %v2576 = vlaneseq
    %v2577 = vshrl.u32 %v2576, 7
    %v2578 = vsub.s32 0, %v2577
    %v2579 = vrot.slane %v2568, %v2578
    %v2580 = vlaneseq
    %v2581 = vshrl.u32 %v2580, 7
    %v2582 = vsub.s32 1, %v2581
    %v2583 = vrot.slane %v2568, %v2582
    %v2584 = vlaneseq
    %v2585 = vshrl.u32 %v2584, 7
    %v2586 = vsub.s32 0, %v2585
    %v2587 = vrot.slane %v2575, %v2586
    %v2588 = vlaneseq
    %v2589 = vshrl.u32 %v2588, 7
    %v2590 = vsub.s32 1, %v2589
    %v2591 = vrot.slane %v2575, %v2590
    %v2596 = vadd.f32 %v2543, %v2579
    %v2597 = vadd.f32 %v2544, %v2583
    %v2598 = vadd.f32 %v2545, %v2579
    %v2599 = vadd.f32 %v2546, %v2583
    %v2600 = vadd.f32 %v2547, %v2587
    %v2601 = vadd.f32 %v2548, %v2591
    %v2602 = vadd.f32 %v2549, %v2587
    %v2603 = vadd.f32 %v2550, %v2591
    %vm2604 = vcmp.gt.f32.partialorder %v2596, 0.0
    %vm2605 = vcmp.gt.f32.partialorder %v2597, 0.0
    %vm2606 = vcmp.gt.f32.partialorder %v2598, 0.0
    %vm2607 = vcmp.gt.f32.partialorder %v2599, 0.0
    %vm2608 = vcmp.gt.f32.partialorder %v2600, 0.0
    %vm2609 = vcmp.gt.f32.partialorder %v2601, 0.0
    %vm2610 = vcmp.gt.f32.partialorder %v2602, 0.0
    %vm2611 = vcmp.gt.f32.partialorder %v2603, 0.0
    %v2612 = vmin.f32 %v2596, 0.0
    %v2613 = vmin.f32 %v2597, 0.0
    %v2614 = vmin.f32 %v2598, 0.0
    %v2615 = vmin.f32 %v2599, 0.0
    %v2616 = vmin.f32 %v2600, 0.0
    %v2617 = vmin.f32 %v2601, 0.0
    %v2618 = vmin.f32 %v2602, 0.0
    %v2619 = vmin.f32 %v2603, 0.0
    %v2620 = vmul.f32 %v2612, 1.442695
    %v2621 = vpow.pop %v2620
    %v2622 = vmul.f32 %v2613, 1.442695
    %v2623 = vpow.pop %v2622
    %v2624 = vmul.f32 %v2614, 1.442695
    %v2625 = vpow.pop %v2624
    %v2626 = vmul.f32 %v2615, 1.442695
    %v2627 = vpow.pop %v2626
    %v2628 = vmul.f32 %v2616, 1.442695
    %v2629 = vpow.pop %v2628
    %v2630 = vmul.f32 %v2617, 1.442695
    %v2631 = vpow.pop %v2630
    %v2632 = vmul.f32 %v2618, 1.442695
    %v2633 = vpow.pop %v2632
    %v2634 = vmul.f32 %v2619, 1.442695
    %v2635 = vpow.pop %v2634
    %v2636 = vsub.f32 %v2621, 1.0
    %v2637 = vsub.f32 %v2623, 1.0
    %v2638 = vsub.f32 %v2625, 1.0
    %v2639 = vsub.f32 %v2627, 1.0
    %v2640 = vsub.f32 %v2629, 1.0
    %v2641 = vsub.f32 %v2631, 1.0
    %v2642 = vsub.f32 %v2633, 1.0
    %v2643 = vsub.f32 %v2635, 1.0
    %v2644 = vsel %vm2604, %v2596, %v2636
    %v2645 = vsel %vm2605, %v2597, %v2637
    %v2646 = vsel %vm2606, %v2598, %v2638
    %v2647 = vsel %vm2607, %v2599, %v2639
    %v2648 = vsel %vm2608, %v2600, %v2640
    %v2649 = vsel %vm2609, %v2601, %v2641
    %v2650 = vsel %vm2610, %v2602, %v2642
    %v2651 = vsel %vm2611, %v2603, %v2643
    %2652 = vst [vmem:[#allocation2 + $0x10] sm:$0xff] %v2644
    %2653 = vst [vmem:[#allocation2 + $0x18] sm:$0xff] %v2645
    %2654 = vst [vmem:[#allocation2 + $0x20] sm:$0xff] %v2646
    %2655 = vst [vmem:[#allocation2 + $0x28] sm:$0xff] %v2647
    %2656 = vst [vmem:[#allocation2 + $0x30] sm:$0xff] %v2648
    %2657 = vst [vmem:[#allocation2 + $0x38] sm:$0xff] %v2649
    %2658 = vst [vmem:[#allocation2 + $0x40] sm:$0xff] %v2650
    %2659 = vst [vmem:[#allocation2 + $0x48] sm:$0xff] %v2651
    %v2660 = vld [vmem:[#allocation2] sm:$0x80]
    %v2661 = vld [vmem:[#allocation2 + $0x8] sm:$0x80]
    %v2662 = vld [vmem:[#allocation2 + $0x10] sm:$0xff]
    %v2663 = vld [vmem:[#allocation2 + $0x18] sm:$0xff]
    %v2664 = vld [vmem:[#allocation2 + $0x20] sm:$0xff]
    %v2665 = vld [vmem:[#allocation2 + $0x28] sm:$0xff]
    %v2666 = vld [vmem:[#allocation2 + $0x30] sm:$0xff]
    %v2667 = vld [vmem:[#allocation2 + $0x38] sm:$0xff]
    %v2668 = vld [vmem:[#allocation2 + $0x40] sm:$0x7f]
    %v2669 = vld [vmem:[#allocation2 + $0x48] sm:$0x7f]
    %v2680 = vrot.slane %v2660, 7
    %v2681 = vrot.slane %v2662, 7
    %v2682 = vsel %vm167, %v2680, %v2681
    %v2683 = vrot.slane %v2661, 7
    %v2684 = vrot.slane %v2663, 7
    %v2685 = vsel %vm167, %v2683, %v2684
    %v2686 = vrot.slane %v2664, 7
    %v2687 = vsel %vm167, %v2681, %v2686
    %v2688 = vrot.slane %v2665, 7
    %v2689 = vsel %vm167, %v2684, %v2688
    %v2690 = vrot.slane %v2666, 7
    %v2691 = vsel %vm167, %v2686, %v2690
    %v2692 = vrot.slane %v2667, 7
    %v2693 = vsel %vm167, %v2688, %v2692
    %v2694 = vrot.slane %v2668, 7
    %v2695 = vsel %vm167, %v2690, %v2694
    %v2696 = vrot.slane %v2669, 7
    %v2697 = vsel %vm167, %v2692, %v2696
    %v2706 = vsel %vm158, %v2682, 0.0
    %v2707 = vsel %vm158, %v2685, 0.0
    %v2708 = vsel %vm159, %v2687, 0.0
    %v2709 = vsel %vm159, %v2689, 0.0
    %v2710 = vsel %vm160, %v2691, 0.0
    %v2711 = vsel %vm160, %v2693, 0.0
    %v2712 = vsel %vm161, %v2695, 0.0
    %v2713 = vsel %vm161, %v2697, 0.0
    %v2714 = vpack.c.bf16 %v2708, %v2706
    %v2715 = vpack.c.bf16 %v2709, %v2707
    %v2716 = vpack.c.bf16 %v2712, %v2710
    %v2717 = vpack.c.bf16 %v2713, %v2711
    %v2718 = vld [vmem:[#allocation7] sm:$0xff]
    %v2719 = vld [vmem:[#allocation7 + $0x8] sm:$0xff]
    %v2720 = vld [vmem:[#allocation7 + $0x10] sm:$0xff]
    %v2721 = vld [vmem:[#allocation7 + $0x18] sm:$0xff]
    %v2722 = vld [vmem:[#allocation7 + $0x20] sm:$0xff]
    %v2723 = vld [vmem:[#allocation7 + $0x28] sm:$0xff]
    %v2724 = vld [vmem:[#allocation7 + $0x30] sm:$0xff]
    %v2725 = vld [vmem:[#allocation7 + $0x38] sm:$0xff]
    %v2726 = vld [vmem:[#allocation7 + $0x40] sm:$0xff]
    %v2727 = vld [vmem:[#allocation7 + $0x48] sm:$0xff]
    %v2728 = vld [vmem:[#allocation7 + $0x50] sm:$0xff]
    %v2729 = vld [vmem:[#allocation7 + $0x58] sm:$0xff]
    %v2730 = vld [vmem:[#allocation7 + $0x60] sm:$0xff]
    %v2731 = vld [vmem:[#allocation7 + $0x68] sm:$0xff]
    %v2732 = vld [vmem:[#allocation7 + $0x70] sm:$0xff]
    %v2733 = vld [vmem:[#allocation7 + $0x78] sm:$0xff]
    %v2734 = vld [vmem:[#allocation7 + $0x80] sm:$0xff]
    %v2735 = vld [vmem:[#allocation7 + $0x88] sm:$0xff]
    %v2736 = vld [vmem:[#allocation7 + $0x90] sm:$0xff]
    %v2737 = vld [vmem:[#allocation7 + $0x98] sm:$0xff]
    %v2738 = vld [vmem:[#allocation7 + $0xa0] sm:$0xff]
    %v2739 = vld [vmem:[#allocation7 + $0xa8] sm:$0xff]
    %v2740 = vld [vmem:[#allocation7 + $0xb0] sm:$0xff]
    %v2741 = vld [vmem:[#allocation7 + $0xb8] sm:$0xff]
    %v2742 = vld [vmem:[#allocation7 + $0xc0] sm:$0xff]
    %v2743 = vld [vmem:[#allocation7 + $0xc8] sm:$0xff]
    %v2744 = vld [vmem:[#allocation7 + $0xd0] sm:$0xff]
    %v2745 = vld [vmem:[#allocation7 + $0xd8] sm:$0xff]
    %v2746 = vld [vmem:[#allocation7 + $0xe0] sm:$0xff]
    %v2747 = vld [vmem:[#allocation7 + $0xe8] sm:$0xff]
    %v2748 = vld [vmem:[#allocation7 + $0xf0] sm:$0xff]
    %v2749 = vld [vmem:[#allocation7 + $0xf8] sm:$0xff]
    %v2750 = vld [vmem:[#allocation2 + $0x40] sm:$0xff]
    %v2751 = vld [vmem:[#allocation2 + $0x48] sm:$0xff]
    %v2752 = vsel %vm212, %v2662, 0.0
    %v2753 = vsel %vm212, %v2663, 0.0
    %v2754 = vsel %vm213, %v2664, 0.0
    %v2755 = vsel %vm213, %v2665, 0.0
    %v2756 = vsel %vm214, %v2666, 0.0
    %v2757 = vsel %vm214, %v2667, 0.0
    %v2758 = vsel %vm215, %v2750, 0.0
    %v2759 = vsel %vm215, %v2751, 0.0
    %v2760 = vpack.c.bf16 %v2754, %v2752
    %v2761 = vpack.c.bf16 %v2755, %v2753
    %v2762 = vpack.c.bf16 %v2758, %v2756
    %v2763 = vpack.c.bf16 %v2759, %v2757
    %s2764 = scalar_lea.vmem [#allocation7], 256
    %v2765 = vld [vmem:[%s2764] sm:$0xff]
    %v2766 = vld [vmem:[%s2764 + $0x8] sm:$0xff]
    %v2767 = vld [vmem:[%s2764 + $0x10] sm:$0xff]
    %v2768 = vld [vmem:[%s2764 + $0x18] sm:$0xff]
    %v2769 = vld [vmem:[%s2764 + $0x20] sm:$0xff]
    %v2770 = vld [vmem:[%s2764 + $0x28] sm:$0xff]
    %v2771 = vld [vmem:[%s2764 + $0x30] sm:$0xff]
    %v2772 = vld [vmem:[%s2764 + $0x38] sm:$0xff]
    %v2773 = vld [vmem:[%s2764 + $0x40] sm:$0xff]
    %v2774 = vld [vmem:[%s2764 + $0x48] sm:$0xff]
    %v2775 = vld [vmem:[%s2764 + $0x50] sm:$0xff]
    %v2776 = vld [vmem:[%s2764 + $0x58] sm:$0xff]
    %v2777 = vld [vmem:[%s2764 + $0x60] sm:$0xff]
    %v2778 = vld [vmem:[%s2764 + $0x68] sm:$0xff]
    %v2779 = vld [vmem:[%s2764 + $0x70] sm:$0xff]
    %v2780 = vld [vmem:[%s2764 + $0x78] sm:$0xff]
    %v2781 = vld [vmem:[%s2764 + $0x80] sm:$0xff]
    %v2782 = vld [vmem:[%s2764 + $0x88] sm:$0xff]
    %v2783 = vld [vmem:[%s2764 + $0x90] sm:$0xff]
    %v2784 = vld [vmem:[%s2764 + $0x98] sm:$0xff]
    %v2785 = vld [vmem:[%s2764 + $0xa0] sm:$0xff]
    %v2786 = vld [vmem:[%s2764 + $0xa8] sm:$0xff]
    %v2787 = vld [vmem:[%s2764 + $0xb0] sm:$0xff]
    %v2788 = vld [vmem:[%s2764 + $0xb8] sm:$0xff]
    %v2789 = vld [vmem:[%s2764 + $0xc0] sm:$0xff]
    %v2790 = vld [vmem:[%s2764 + $0xc8] sm:$0xff]
    %v2791 = vld [vmem:[%s2764 + $0xd0] sm:$0xff]
    %v2792 = vld [vmem:[%s2764 + $0xd8] sm:$0xff]
    %v2793 = vld [vmem:[%s2764 + $0xe0] sm:$0xff]
    %v2794 = vld [vmem:[%s2764 + $0xe8] sm:$0xff]
    %v2795 = vld [vmem:[%s2764 + $0xf0] sm:$0xff]
    %v2796 = vld [vmem:[%s2764 + $0xf8] sm:$0xff]
    %v2829 = vunpack.c.l.b16 %v2765
    %v2830 = vunpack.c.h.b16 %v2765
    %v2831 = vunpack.c.l.b16 %v2766
    %v2832 = vunpack.c.h.b16 %v2766
    %v2833 = vunpack.c.l.b16 %v2767
    %v2834 = vunpack.c.h.b16 %v2767
    %v2835 = vunpack.c.l.b16 %v2768
    %v2836 = vunpack.c.h.b16 %v2768
    %v2837 = vunpack.c.l.b16 %v2769
    %v2838 = vunpack.c.h.b16 %v2769
    %v2839 = vunpack.c.l.b16 %v2770
    %v2840 = vunpack.c.h.b16 %v2770
    %v2841 = vunpack.c.l.b16 %v2771
    %v2842 = vunpack.c.h.b16 %v2771
    %v2843 = vunpack.c.l.b16 %v2772
    %v2844 = vunpack.c.h.b16 %v2772
    %v2845 = vunpack.c.l.b16 %v2773
    %v2846 = vunpack.c.h.b16 %v2773
    %v2847 = vunpack.c.l.b16 %v2774
    %v2848 = vunpack.c.h.b16 %v2774
    %v2849 = vunpack.c.l.b16 %v2775
    %v2850 = vunpack.c.h.b16 %v2775
    %v2851 = vunpack.c.l.b16 %v2776
    %v2852 = vunpack.c.h.b16 %v2776
    %v2853 = vunpack.c.l.b16 %v2777
    %v2854 = vunpack.c.h.b16 %v2777
    %v2855 = vunpack.c.l.b16 %v2778
    %v2856 = vunpack.c.h.b16 %v2778
    %v2857 = vunpack.c.l.b16 %v2779
    %v2858 = vunpack.c.h.b16 %v2779
    %v2859 = vunpack.c.l.b16 %v2780
    %v2860 = vunpack.c.h.b16 %v2780
    %v2861 = vunpack.c.l.b16 %v2781
    %v2862 = vunpack.c.h.b16 %v2781
    %v2863 = vunpack.c.l.b16 %v2782
    %v2864 = vunpack.c.h.b16 %v2782
    %v2865 = vunpack.c.l.b16 %v2783
    %v2866 = vunpack.c.h.b16 %v2783
    %v2867 = vunpack.c.l.b16 %v2784
    %v2868 = vunpack.c.h.b16 %v2784
    %v2869 = vunpack.c.l.b16 %v2785
    %v2870 = vunpack.c.h.b16 %v2785
    %v2871 = vunpack.c.l.b16 %v2786
    %v2872 = vunpack.c.h.b16 %v2786
    %v2873 = vunpack.c.l.b16 %v2787
    %v2874 = vunpack.c.h.b16 %v2787
    %v2875 = vunpack.c.l.b16 %v2788
    %v2876 = vunpack.c.h.b16 %v2788
    %v2877 = vunpack.c.l.b16 %v2789
    %v2878 = vunpack.c.h.b16 %v2789
    %v2879 = vunpack.c.l.b16 %v2790
    %v2880 = vunpack.c.h.b16 %v2790
    %v2881 = vunpack.c.l.b16 %v2791
    %v2882 = vunpack.c.h.b16 %v2791
    %v2883 = vunpack.c.l.b16 %v2792
    %v2884 = vunpack.c.h.b16 %v2792
    %v2885 = vunpack.c.l.b16 %v2793
    %v2886 = vunpack.c.h.b16 %v2793
    %v2887 = vunpack.c.l.b16 %v2794
    %v2888 = vunpack.c.h.b16 %v2794
    %v2889 = vunpack.c.l.b16 %v2795
    %v2890 = vunpack.c.h.b16 %v2795
    %v2891 = vunpack.c.l.b16 %v2796
    %v2892 = vunpack.c.h.b16 %v2796
    %v2893 = vpack.c.b16 %v2831, %v2829
    %v2894 = vpack.c.b16 %v2832, %v2830
    %v2895 = vpack.c.b16 %v2835, %v2833
    %v2896 = vpack.c.b16 %v2836, %v2834
    %v2897 = vpack.c.b16 %v2839, %v2837
    %v2898 = vpack.c.b16 %v2840, %v2838
    %v2899 = vpack.c.b16 %v2843, %v2841
    %v2900 = vpack.c.b16 %v2844, %v2842
    %v2901 = vpack.c.b16 %v2847, %v2845
    %v2902 = vpack.c.b16 %v2848, %v2846
    %v2903 = vpack.c.b16 %v2851, %v2849
    %v2904 = vpack.c.b16 %v2852, %v2850
    %v2905 = vpack.c.b16 %v2855, %v2853
    %v2906 = vpack.c.b16 %v2856, %v2854
    %v2907 = vpack.c.b16 %v2859, %v2857
    %v2908 = vpack.c.b16 %v2860, %v2858
    %v2909 = vpack.c.b16 %v2863, %v2861
    %v2910 = vpack.c.b16 %v2864, %v2862
    %v2911 = vpack.c.b16 %v2867, %v2865
    %v2912 = vpack.c.b16 %v2868, %v2866
    %v2913 = vpack.c.b16 %v2871, %v2869
    %v2914 = vpack.c.b16 %v2872, %v2870
    %v2915 = vpack.c.b16 %v2875, %v2873
    %v2916 = vpack.c.b16 %v2876, %v2874
    %v2917 = vpack.c.b16 %v2879, %v2877
    %v2918 = vpack.c.b16 %v2880, %v2878
    %v2919 = vpack.c.b16 %v2883, %v2881
    %v2920 = vpack.c.b16 %v2884, %v2882
    %v2921 = vpack.c.b16 %v2887, %v2885
    %v2922 = vpack.c.b16 %v2888, %v2886
    %v2923 = vpack.c.b16 %v2891, %v2889
    %v2924 = vpack.c.b16 %v2892, %v2890
    %2957 = vmatprep.subr.bf16.mxu0 %v2894
    %2958 = vmatpush1.bf16.msra.mxu0 %v2893
    %2959 = vmatprep.subr.bf16.mxu0 %v2896
    %2960 = vmatpush1.bf16.msra.mxu0 %v2895
    %2961 = vmatprep.subr.bf16.mxu0 %v2898
    %2962 = vmatpush1.bf16.msra.mxu0 %v2897
    %2963 = vmatprep.subr.bf16.mxu0 %v2900
    %2964 = vmatpush1.bf16.msra.mxu0 %v2899
    %2965 = vmatprep.subr.bf16.mxu0 %v2902
    %2966 = vmatpush1.bf16.msra.mxu0 %v2901
    %2967 = vmatprep.subr.bf16.mxu0 %v2904
    %2968 = vmatpush1.bf16.msra.mxu0 %v2903
    %2969 = vmatprep.subr.bf16.mxu0 %v2906
    %2970 = vmatpush1.bf16.msra.mxu0 %v2905
    %2971 = vmatprep.subr.bf16.mxu0 %v2908
    %2972 = vmatpush1.bf16.msra.mxu0 %v2907
    %2973 = vmatprep.subr.bf16.mxu0 %v2910
    %2974 = vmatpush1.bf16.msra.mxu0 %v2909
    %2975 = vmatprep.subr.bf16.mxu0 %v2912
    %2976 = vmatpush1.bf16.msra.mxu0 %v2911
    %2977 = vmatprep.subr.bf16.mxu0 %v2914
    %2978 = vmatpush1.bf16.msra.mxu0 %v2913
    %2979 = vmatprep.subr.bf16.mxu0 %v2916
    %2980 = vmatpush1.bf16.msra.mxu0 %v2915
    %2981 = vmatprep.subr.bf16.mxu0 %v2918
    %2982 = vmatpush1.bf16.msra.mxu0 %v2917
    %2983 = vmatprep.subr.bf16.mxu0 %v2920
    %2984 = vmatpush1.bf16.msra.mxu0 %v2919
    %2985 = vmatprep.subr.bf16.mxu0 %v2922
    %2986 = vmatpush1.bf16.msra.mxu0 %v2921
    %2987 = vmatprep.subr.bf16.mxu0 %v2924
    %2988 = vmatpush1.bf16.msra.mxu0 %v2923
    %2989 = vmatprep.mubr.bf16.mxu0 %v2761
    %2990 = vmatmul.mubr.bf16.gmra.mrb[0].mxu0 %v2760
    %v2991 = vpop.f32.mrb[0].mxu0
    %v2992 = vadd.f32 0.0, %v2991
    %v2993 = vpop.f32.mrb[0].mxu0
    %v2994 = vadd.f32 0.0, %v2993
    %v2995 = vpop.f32.mrb[0].mxu0
    %v2996 = vadd.f32 0.0, %v2995
    %v2997 = vpop.f32.mrb[0].mxu0
    %v2998 = vadd.f32 0.0, %v2997
    %2999 = vmatprep.mubr.bf16.mxu0 %v2763
    %3000 = vmatmul.mubr.bf16.gmra.mrb[0].mxu0 %v2762
    %v3001 = vpop.f32.mrb[0].mxu0
    %v3002 = vadd.f32 0.0, %v3001
    %v3003 = vpop.f32.mrb[0].mxu0
    %v3004 = vadd.f32 0.0, %v3003
    %v3005 = vpop.f32.mrb[0].mxu0
    %v3006 = vadd.f32 0.0, %v3005
    %v3007 = vpop.f32.mrb[0].mxu0
    %v3008 = vadd.f32 0.0, %v3007
    %3009 = vdwg.mxu0
    %v3042 = vunpack.c.l.b16 %v2718
    %v3043 = vunpack.c.h.b16 %v2718
    %v3044 = vunpack.c.l.b16 %v2719
    %v3045 = vunpack.c.h.b16 %v2719
    %v3046 = vunpack.c.l.b16 %v2720
    %v3047 = vunpack.c.h.b16 %v2720
    %v3048 = vunpack.c.l.b16 %v2721
    %v3049 = vunpack.c.h.b16 %v2721
    %v3050 = vunpack.c.l.b16 %v2722
    %v3051 = vunpack.c.h.b16 %v2722
    %v3052 = vunpack.c.l.b16 %v2723
    %v3053 = vunpack.c.h.b16 %v2723
    %v3054 = vunpack.c.l.b16 %v2724
    %v3055 = vunpack.c.h.b16 %v2724
    %v3056 = vunpack.c.l.b16 %v2725
    %v3057 = vunpack.c.h.b16 %v2725
    %v3058 = vunpack.c.l.b16 %v2726
    %v3059 = vunpack.c.h.b16 %v2726
    %v3060 = vunpack.c.l.b16 %v2727
    %v3061 = vunpack.c.h.b16 %v2727
    %v3062 = vunpack.c.l.b16 %v2728
    %v3063 = vunpack.c.h.b16 %v2728
    %v3064 = vunpack.c.l.b16 %v2729
    %v3065 = vunpack.c.h.b16 %v2729
    %v3066 = vunpack.c.l.b16 %v2730
    %v3067 = vunpack.c.h.b16 %v2730
    %v3068 = vunpack.c.l.b16 %v2731
    %v3069 = vunpack.c.h.b16 %v2731
    %v3070 = vunpack.c.l.b16 %v2732
    %v3071 = vunpack.c.h.b16 %v2732
    %v3072 = vunpack.c.l.b16 %v2733
    %v3073 = vunpack.c.h.b16 %v2733
    %v3074 = vunpack.c.l.b16 %v2734
    %v3075 = vunpack.c.h.b16 %v2734
    %v3076 = vunpack.c.l.b16 %v2735
    %v3077 = vunpack.c.h.b16 %v2735
    %v3078 = vunpack.c.l.b16 %v2736
    %v3079 = vunpack.c.h.b16 %v2736
    %v3080 = vunpack.c.l.b16 %v2737
    %v3081 = vunpack.c.h.b16 %v2737
    %v3082 = vunpack.c.l.b16 %v2738
    %v3083 = vunpack.c.h.b16 %v2738
    %v3084 = vunpack.c.l.b16 %v2739
    %v3085 = vunpack.c.h.b16 %v2739
    %v3086 = vunpack.c.l.b16 %v2740
    %v3087 = vunpack.c.h.b16 %v2740
    %v3088 = vunpack.c.l.b16 %v2741
    %v3089 = vunpack.c.h.b16 %v2741
    %v3090 = vunpack.c.l.b16 %v2742
    %v3091 = vunpack.c.h.b16 %v2742
    %v3092 = vunpack.c.l.b16 %v2743
    %v3093 = vunpack.c.h.b16 %v2743
    %v3094 = vunpack.c.l.b16 %v2744
    %v3095 = vunpack.c.h.b16 %v2744
    %v3096 = vunpack.c.l.b16 %v2745
    %v3097 = vunpack.c.h.b16 %v2745
    %v3098 = vunpack.c.l.b16 %v2746
    %v3099 = vunpack.c.h.b16 %v2746
    %v3100 = vunpack.c.l.b16 %v2747
    %v3101 = vunpack.c.h.b16 %v2747
    %v3102 = vunpack.c.l.b16 %v2748
    %v3103 = vunpack.c.h.b16 %v2748
    %v3104 = vunpack.c.l.b16 %v2749
    %v3105 = vunpack.c.h.b16 %v2749
    %v3106 = vpack.c.b16 %v3044, %v3042
    %v3107 = vpack.c.b16 %v3045, %v3043
    %v3108 = vpack.c.b16 %v3048, %v3046
    %v3109 = vpack.c.b16 %v3049, %v3047
    %v3110 = vpack.c.b16 %v3052, %v3050
    %v3111 = vpack.c.b16 %v3053, %v3051
    %v3112 = vpack.c.b16 %v3056, %v3054
    %v3113 = vpack.c.b16 %v3057, %v3055
    %v3114 = vpack.c.b16 %v3060, %v3058
    %v3115 = vpack.c.b16 %v3061, %v3059
    %v3116 = vpack.c.b16 %v3064, %v3062
    %v3117 = vpack.c.b16 %v3065, %v3063
    %v3118 = vpack.c.b16 %v3068, %v3066
    %v3119 = vpack.c.b16 %v3069, %v3067
    %v3120 = vpack.c.b16 %v3072, %v3070
    %v3121 = vpack.c.b16 %v3073, %v3071
    %v3122 = vpack.c.b16 %v3076, %v3074
    %v3123 = vpack.c.b16 %v3077, %v3075
    %v3124 = vpack.c.b16 %v3080, %v3078
    %v3125 = vpack.c.b16 %v3081, %v3079
    %v3126 = vpack.c.b16 %v3084, %v3082
    %v3127 = vpack.c.b16 %v3085, %v3083
    %v3128 = vpack.c.b16 %v3088, %v3086
    %v3129 = vpack.c.b16 %v3089, %v3087
    %v3130 = vpack.c.b16 %v3092, %v3090
    %v3131 = vpack.c.b16 %v3093, %v3091
    %v3132 = vpack.c.b16 %v3096, %v3094
    %v3133 = vpack.c.b16 %v3097, %v3095
    %v3134 = vpack.c.b16 %v3100, %v3098
    %v3135 = vpack.c.b16 %v3101, %v3099
    %v3136 = vpack.c.b16 %v3104, %v3102
    %v3137 = vpack.c.b16 %v3105, %v3103
    %3170 = vmatprep.subr.bf16.mxu0 %v3107
    %3171 = vmatpush1.bf16.msra.mxu0 %v3106
    %3172 = vmatprep.subr.bf16.mxu0 %v3109
    %3173 = vmatpush1.bf16.msra.mxu0 %v3108
    %3174 = vmatprep.subr.bf16.mxu0 %v3111
    %3175 = vmatpush1.bf16.msra.mxu0 %v3110
    %3176 = vmatprep.subr.bf16.mxu0 %v3113
    %3177 = vmatpush1.bf16.msra.mxu0 %v3112
    %3178 = vmatprep.subr.bf16.mxu0 %v3115
    %3179 = vmatpush1.bf16.msra.mxu0 %v3114
    %3180 = vmatprep.subr.bf16.mxu0 %v3117
    %3181 = vmatpush1.bf16.msra.mxu0 %v3116
    %3182 = vmatprep.subr.bf16.mxu0 %v3119
    %3183 = vmatpush1.bf16.msra.mxu0 %v3118
    %3184 = vmatprep.subr.bf16.mxu0 %v3121
    %3185 = vmatpush1.bf16.msra.mxu0 %v3120
    %3186 = vmatprep.subr.bf16.mxu0 %v3123
    %3187 = vmatpush1.bf16.msra.mxu0 %v3122
    %3188 = vmatprep.subr.bf16.mxu0 %v3125
    %3189 = vmatpush1.bf16.msra.mxu0 %v3124
    %3190 = vmatprep.subr.bf16.mxu0 %v3127
    %3191 = vmatpush1.bf16.msra.mxu0 %v3126
    %3192 = vmatprep.subr.bf16.mxu0 %v3129
    %3193 = vmatpush1.bf16.msra.mxu0 %v3128
    %3194 = vmatprep.subr.bf16.mxu0 %v3131
    %3195 = vmatpush1.bf16.msra.mxu0 %v3130
    %3196 = vmatprep.subr.bf16.mxu0 %v3133
    %3197 = vmatpush1.bf16.msra.mxu0 %v3132
    %3198 = vmatprep.subr.bf16.mxu0 %v3135
    %3199 = vmatpush1.bf16.msra.mxu0 %v3134
    %3200 = vmatprep.subr.bf16.mxu0 %v3137
    %3201 = vmatpush1.bf16.msra.mxu0 %v3136
    %3202 = vmatprep.mubr.bf16.mxu0 %v2715
    %3203 = vmatmul.mubr.bf16.gmra.mrb[0].mxu0 %v2714
    %v3204 = vpop.f32.mrb[0].mxu0
    %v3205 = vadd.f32 %v2992, %v3204
    %v3206 = vpop.f32.mrb[0].mxu0
    %v3207 = vadd.f32 %v2994, %v3206
    %v3208 = vpop.f32.mrb[0].mxu0
    %v3209 = vadd.f32 %v2996, %v3208
    %v3210 = vpop.f32.mrb[0].mxu0
    %v3211 = vadd.f32 %v2998, %v3210
    %3212 = vmatprep.mubr.bf16.mxu0 %v2717
    %3213 = vmatmul.mubr.bf16.gmra.mrb[0].mxu0 %v2716
    %v3214 = vpop.f32.mrb[0].mxu0
    %v3215 = vadd.f32 %v3002, %v3214
    %v3216 = vpop.f32.mrb[0].mxu0
    %v3217 = vadd.f32 %v3004, %v3216
    %v3218 = vpop.f32.mrb[0].mxu0
    %v3219 = vadd.f32 %v3006, %v3218
    %v3220 = vpop.f32.mrb[0].mxu0
    %v3221 = vadd.f32 %v3008, %v3220
    %3222 = vdwg.mxu0
    %v3223 = vld [vmem:[#allocation2 + $0x10] sm:$0xfe]
    %v3224 = vld [vmem:[#allocation2 + $0x18] sm:$0xfe]
    %v3225 = vld [vmem:[#allocation2 + $0x20] sm:$0xff]
    %v3226 = vld [vmem:[#allocation2 + $0x28] sm:$0xff]
    %v3227 = vld [vmem:[#allocation2 + $0x30] sm:$0xff]
    %v3228 = vld [vmem:[#allocation2 + $0x38] sm:$0xff]
    %v3229 = vld [vmem:[#allocation2 + $0x40] sm:$0xff]
    %v3230 = vld [vmem:[#allocation2 + $0x48] sm:$0xff]
    %v3231 = vld [vmem:[#allocation2 + $0x50] sm:$0x1]
    %v3232 = vld [vmem:[#allocation2 + $0x58] sm:$0x1]
    %v3243 = vrot.slane %v3223, 1
    %v3244 = vrot.slane %v3225, 1
    %v3245 = vsel %vm463, %v3243, %v3244
    %v3246 = vrot.slane %v3224, 1
    %v3247 = vrot.slane %v3226, 1
    %v3248 = vsel %vm463, %v3246, %v3247
    %v3249 = vrot.slane %v3227, 1
    %v3250 = vsel %vm463, %v3244, %v3249
    %v3251 = vrot.slane %v3228, 1
    %v3252 = vsel %vm463, %v3247, %v3251
    %v3253 = vrot.slane %v3229, 1
    %v3254 = vsel %vm463, %v3249, %v3253
    %v3255 = vrot.slane %v3230, 1
    %v3256 = vsel %vm463, %v3251, %v3255
    %v3257 = vrot.slane %v3231, 1
    %v3258 = vsel %vm463, %v3253, %v3257
    %v3259 = vrot.slane %v3232, 1
    %v3260 = vsel %vm463, %v3255, %v3259
    %v3269 = vsel %vm454, %v3245, 0.0
    %v3270 = vsel %vm454, %v3248, 0.0
    %v3271 = vsel %vm455, %v3250, 0.0
    %v3272 = vsel %vm455, %v3252, 0.0
    %v3273 = vsel %vm456, %v3254, 0.0
    %v3274 = vsel %vm456, %v3256, 0.0
    %v3275 = vsel %vm457, %v3258, 0.0
    %v3276 = vsel %vm457, %v3260, 0.0
    %v3277 = vpack.c.bf16 %v3271, %v3269
    %v3278 = vpack.c.bf16 %v3272, %v3270
    %v3279 = vpack.c.bf16 %v3275, %v3273
    %v3280 = vpack.c.bf16 %v3276, %v3274
    %s3281 = scalar_lea.vmem [#allocation7], 512
    %v3282 = vld [vmem:[%s3281] sm:$0xff]
    %v3283 = vld [vmem:[%s3281 + $0x8] sm:$0xff]
    %v3284 = vld [vmem:[%s3281 + $0x10] sm:$0xff]
    %v3285 = vld [vmem:[%s3281 + $0x18] sm:$0xff]
    %v3286 = vld [vmem:[%s3281 + $0x20] sm:$0xff]
    %v3287 = vld [vmem:[%s3281 + $0x28] sm:$0xff]
    %v3288 = vld [vmem:[%s3281 + $0x30] sm:$0xff]
    %v3289 = vld [vmem:[%s3281 + $0x38] sm:$0xff]
    %v3290 = vld [vmem:[%s3281 + $0x40] sm:$0xff]
    %v3291 = vld [vmem:[%s3281 + $0x48] sm:$0xff]
    %v3292 = vld [vmem:[%s3281 + $0x50] sm:$0xff]
    %v3293 = vld [vmem:[%s3281 + $0x58] sm:$0xff]
    %v3294 = vld [vmem:[%s3281 + $0x60] sm:$0xff]
    %v3295 = vld [vmem:[%s3281 + $0x68] sm:$0xff]
    %v3296 = vld [vmem:[%s3281 + $0x70] sm:$0xff]
    %v3297 = vld [vmem:[%s3281 + $0x78] sm:$0xff]
    %v3298 = vld [vmem:[%s3281 + $0x80] sm:$0xff]
    %v3299 = vld [vmem:[%s3281 + $0x88] sm:$0xff]
    %v3300 = vld [vmem:[%s3281 + $0x90] sm:$0xff]
    %v3301 = vld [vmem:[%s3281 + $0x98] sm:$0xff]
    %v3302 = vld [vmem:[%s3281 + $0xa0] sm:$0xff]
    %v3303 = vld [vmem:[%s3281 + $0xa8] sm:$0xff]
    %v3304 = vld [vmem:[%s3281 + $0xb0] sm:$0xff]
    %v3305 = vld [vmem:[%s3281 + $0xb8] sm:$0xff]
    %v3306 = vld [vmem:[%s3281 + $0xc0] sm:$0xff]
    %v3307 = vld [vmem:[%s3281 + $0xc8] sm:$0xff]
    %v3308 = vld [vmem:[%s3281 + $0xd0] sm:$0xff]
    %v3309 = vld [vmem:[%s3281 + $0xd8] sm:$0xff]
    %v3310 = vld [vmem:[%s3281 + $0xe0] sm:$0xff]
    %v3311 = vld [vmem:[%s3281 + $0xe8] sm:$0xff]
    %v3312 = vld [vmem:[%s3281 + $0xf0] sm:$0xff]
    %v3313 = vld [vmem:[%s3281 + $0xf8] sm:$0xff]
    %v3346 = vunpack.c.l.b16 %v3282
    %v3347 = vunpack.c.h.b16 %v3282
    %v3348 = vunpack.c.l.b16 %v3283
    %v3349 = vunpack.c.h.b16 %v3283
    %v3350 = vunpack.c.l.b16 %v3284
    %v3351 = vunpack.c.h.b16 %v3284
    %v3352 = vunpack.c.l.b16 %v3285
    %v3353 = vunpack.c.h.b16 %v3285
    %v3354 = vunpack.c.l.b16 %v3286
    %v3355 = vunpack.c.h.b16 %v3286
    %v3356 = vunpack.c.l.b16 %v3287
    %v3357 = vunpack.c.h.b16 %v3287
    %v3358 = vunpack.c.l.b16 %v3288
    %v3359 = vunpack.c.h.b16 %v3288
    %v3360 = vunpack.c.l.b16 %v3289
    %v3361 = vunpack.c.h.b16 %v3289
    %v3362 = vunpack.c.l.b16 %v3290
    %v3363 = vunpack.c.h.b16 %v3290
    %v3364 = vunpack.c.l.b16 %v3291
    %v3365 = vunpack.c.h.b16 %v3291
    %v3366 = vunpack.c.l.b16 %v3292
    %v3367 = vunpack.c.h.b16 %v3292
    %v3368 = vunpack.c.l.b16 %v3293
    %v3369 = vunpack.c.h.b16 %v3293
    %v3370 = vunpack.c.l.b16 %v3294
    %v3371 = vunpack.c.h.b16 %v3294
    %v3372 = vunpack.c.l.b16 %v3295
    %v3373 = vunpack.c.h.b16 %v3295
    %v3374 = vunpack.c.l.b16 %v3296
    %v3375 = vunpack.c.h.b16 %v3296
    %v3376 = vunpack.c.l.b16 %v3297
    %v3377 = vunpack.c.h.b16 %v3297
    %v3378 = vunpack.c.l.b16 %v3298
    %v3379 = vunpack.c.h.b16 %v3298
    %v3380 = vunpack.c.l.b16 %v3299
    %v3381 = vunpack.c.h.b16 %v3299
    %v3382 = vunpack.c.l.b16 %v3300
    %v3383 = vunpack.c.h.b16 %v3300
    %v3384 = vunpack.c.l.b16 %v3301
    %v3385 = vunpack.c.h.b16 %v3301
    %v3386 = vunpack.c.l.b16 %v3302
    %v3387 = vunpack.c.h.b16 %v3302
    %v3388 = vunpack.c.l.b16 %v3303
    %v3389 = vunpack.c.h.b16 %v3303
    %v3390 = vunpack.c.l.b16 %v3304
    %v3391 = vunpack.c.h.b16 %v3304
    %v3392 = vunpack.c.l.b16 %v3305
    %v3393 = vunpack.c.h.b16 %v3305
    %v3394 = vunpack.c.l.b16 %v3306
    %v3395 = vunpack.c.h.b16 %v3306
    %v3396 = vunpack.c.l.b16 %v3307
    %v3397 = vunpack.c.h.b16 %v3307
    %v3398 = vunpack.c.l.b16 %v3308
    %v3399 = vunpack.c.h.b16 %v3308
    %v3400 = vunpack.c.l.b16 %v3309
    %v3401 = vunpack.c.h.b16 %v3309
    %v3402 = vunpack.c.l.b16 %v3310
    %v3403 = vunpack.c.h.b16 %v3310
    %v3404 = vunpack.c.l.b16 %v3311
    %v3405 = vunpack.c.h.b16 %v3311
    %v3406 = vunpack.c.l.b16 %v3312
    %v3407 = vunpack.c.h.b16 %v3312
    %v3408 = vunpack.c.l.b16 %v3313
    %v3409 = vunpack.c.h.b16 %v3313
    %v3410 = vpack.c.b16 %v3348, %v3346
    %v3411 = vpack.c.b16 %v3349, %v3347
    %v3412 = vpack.c.b16 %v3352, %v3350
    %v3413 = vpack.c.b16 %v3353, %v3351
    %v3414 = vpack.c.b16 %v3356, %v3354
    %v3415 = vpack.c.b16 %v3357, %v3355
    %v3416 = vpack.c.b16 %v3360, %v3358
    %v3417 = vpack.c.b16 %v3361, %v3359
    %v3418 = vpack.c.b16 %v3364, %v3362
    %v3419 = vpack.c.b16 %v3365, %v3363
    %v3420 = vpack.c.b16 %v3368, %v3366
    %v3421 = vpack.c.b16 %v3369, %v3367
    %v3422 = vpack.c.b16 %v3372, %v3370
    %v3423 = vpack.c.b16 %v3373, %v3371
    %v3424 = vpack.c.b16 %v3376, %v3374
    %v3425 = vpack.c.b16 %v3377, %v3375
    %v3426 = vpack.c.b16 %v3380, %v3378
    %v3427 = vpack.c.b16 %v3381, %v3379
    %v3428 = vpack.c.b16 %v3384, %v3382
    %v3429 = vpack.c.b16 %v3385, %v3383
    %v3430 = vpack.c.b16 %v3388, %v3386
    %v3431 = vpack.c.b16 %v3389, %v3387
    %v3432 = vpack.c.b16 %v3392, %v3390
    %v3433 = vpack.c.b16 %v3393, %v3391
    %v3434 = vpack.c.b16 %v3396, %v3394
    %v3435 = vpack.c.b16 %v3397, %v3395
    %v3436 = vpack.c.b16 %v3400, %v3398
    %v3437 = vpack.c.b16 %v3401, %v3399
    %v3438 = vpack.c.b16 %v3404, %v3402
    %v3439 = vpack.c.b16 %v3405, %v3403
    %v3440 = vpack.c.b16 %v3408, %v3406
    %v3441 = vpack.c.b16 %v3409, %v3407
    %3474 = vmatprep.subr.bf16.mxu0 %v3411
    %3475 = vmatpush1.bf16.msra.mxu0 %v3410
    %3476 = vmatprep.subr.bf16.mxu0 %v3413
    %3477 = vmatpush1.bf16.msra.mxu0 %v3412
    %3478 = vmatprep.subr.bf16.mxu0 %v3415
    %3479 = vmatpush1.bf16.msra.mxu0 %v3414
    %3480 = vmatprep.subr.bf16.mxu0 %v3417
    %3481 = vmatpush1.bf16.msra.mxu0 %v3416
    %3482 = vmatprep.subr.bf16.mxu0 %v3419
    %3483 = vmatpush1.bf16.msra.mxu0 %v3418
    %3484 = vmatprep.subr.bf16.mxu0 %v3421
    %3485 = vmatpush1.bf16.msra.mxu0 %v3420
    %3486 = vmatprep.subr.bf16.mxu0 %v3423
    %3487 = vmatpush1.bf16.msra.mxu0 %v3422
    %3488 = vmatprep.subr.bf16.mxu0 %v3425
    %3489 = vmatpush1.bf16.msra.mxu0 %v3424
    %3490 = vmatprep.subr.bf16.mxu0 %v3427
    %3491 = vmatpush1.bf16.msra.mxu0 %v3426
    %3492 = vmatprep.subr.bf16.mxu0 %v3429
    %3493 = vmatpush1.bf16.msra.mxu0 %v3428
    %3494 = vmatprep.subr.bf16.mxu0 %v3431
    %3495 = vmatpush1.bf16.msra.mxu0 %v3430
    %3496 = vmatprep.subr.bf16.mxu0 %v3433
    %3497 = vmatpush1.bf16.msra.mxu0 %v3432
    %3498 = vmatprep.subr.bf16.mxu0 %v3435
    %3499 = vmatpush1.bf16.msra.mxu0 %v3434
    %3500 = vmatprep.subr.bf16.mxu0 %v3437
    %3501 = vmatpush1.bf16.msra.mxu0 %v3436
    %3502 = vmatprep.subr.bf16.mxu0 %v3439
    %3503 = vmatpush1.bf16.msra.mxu0 %v3438
    %3504 = vmatprep.subr.bf16.mxu0 %v3441
    %3505 = vmatpush1.bf16.msra.mxu0 %v3440
    %3506 = vmatprep.mubr.bf16.mxu0 %v3278
    %3507 = vmatmul.mubr.bf16.gmra.mrb[0].mxu0 %v3277
    %v3508 = vpop.f32.mrb[0].mxu0
    %v3509 = vadd.f32 0.0, %v3508
    %v3510 = vpop.f32.mrb[0].mxu0
    %v3511 = vadd.f32 0.0, %v3510
    %v3512 = vpop.f32.mrb[0].mxu0
    %v3513 = vadd.f32 0.0, %v3512
    %v3514 = vpop.f32.mrb[0].mxu0
    %v3515 = vadd.f32 0.0, %v3514
    %3516 = vmatprep.mubr.bf16.mxu0 %v3280
    %3517 = vmatmul.mubr.bf16.gmra.mrb[0].mxu0 %v3279
    %v3518 = vpop.f32.mrb[0].mxu0
    %v3519 = vadd.f32 0.0, %v3518
    %v3520 = vpop.f32.mrb[0].mxu0
    %v3521 = vadd.f32 0.0, %v3520
    %v3522 = vpop.f32.mrb[0].mxu0
    %v3523 = vadd.f32 0.0, %v3522
    %v3524 = vpop.f32.mrb[0].mxu0
    %v3525 = vadd.f32 0.0, %v3524
    %3526 = vdwg.mxu0
    %v3527 = vadd.f32 %v3205, %v3509
    %v3528 = vadd.f32 %v3207, %v3511
    %v3529 = vadd.f32 %v3209, %v3513
    %v3530 = vadd.f32 %v3211, %v3515
    %v3531 = vadd.f32 %v3215, %v3519
    %v3532 = vadd.f32 %v3217, %v3521
    %v3533 = vadd.f32 %v3219, %v3523
    %v3534 = vadd.f32 %v3221, %v3525
    %v3535 = vadd.f32 %v3527, %v3529
    %v3536 = vrot.slane %v3535, 4
    %v3537 = vadd.f32 %v3535, %v3536
    %v3538 = vrot.slane %v3537, 2
    %v3539 = vadd.f32 %v3537, %v3538
    %v3540 = vrot.slane %v3539, 1
    %v3541 = vadd.f32 %v3539, %v3540
    %v3542 = vadd.f32 %v3528, %v3530
    %v3543 = vrot.slane %v3542, 4
    %v3544 = vadd.f32 %v3542, %v3543
    %v3545 = vrot.slane %v3544, 2
    %v3546 = vadd.f32 %v3544, %v3545
    %v3547 = vrot.slane %v3546, 1
    %v3548 = vadd.f32 %v3546, %v3547
    %v3549 = vadd.f32 %v3531, %v3533
    %v3550 = vrot.slane %v3549, 4
    %v3551 = vadd.f32 %v3549, %v3550
    %v3552 = vrot.slane %v3551, 2
    %v3553 = vadd.f32 %v3551, %v3552
    %v3554 = vrot.slane %v3553, 1
    %v3555 = vadd.f32 %v3553, %v3554
    %v3556 = vadd.f32 %v3532, %v3534
    %v3557 = vrot.slane %v3556, 4
    %v3558 = vadd.f32 %v3556, %v3557
    %v3559 = vrot.slane %v3558, 2
    %v3560 = vadd.f32 %v3558, %v3559
    %v3561 = vrot.slane %v3560, 1
    %v3562 = vadd.f32 %v3560, %v3561
    %v3563 = vmul.f32 %v3527, %v3527
    %v3564 = vmul.f32 %v3528, %v3528
    %v3565 = vmul.f32 %v3529, %v3529
    %v3566 = vmul.f32 %v3530, %v3530
    %v3567 = vmul.f32 %v3531, %v3531
    %v3568 = vmul.f32 %v3532, %v3532
    %v3569 = vmul.f32 %v3533, %v3533
    %v3570 = vmul.f32 %v3534, %v3534
    %v3571 = vadd.f32 %v3563, %v3565
    %v3572 = vrot.slane %v3571, 4
    %v3573 = vadd.f32 %v3571, %v3572
    %v3574 = vrot.slane %v3573, 2
    %v3575 = vadd.f32 %v3573, %v3574
    %v3576 = vrot.slane %v3575, 1
    %v3577 = vadd.f32 %v3575, %v3576
    %v3578 = vadd.f32 %v3564, %v3566
    %v3579 = vrot.slane %v3578, 4
    %v3580 = vadd.f32 %v3578, %v3579
    %v3581 = vrot.slane %v3580, 2
    %v3582 = vadd.f32 %v3580, %v3581
    %v3583 = vrot.slane %v3582, 1
    %v3584 = vadd.f32 %v3582, %v3583
    %v3585 = vadd.f32 %v3567, %v3569
    %v3586 = vrot.slane %v3585, 4
    %v3587 = vadd.f32 %v3585, %v3586
    %v3588 = vrot.slane %v3587, 2
    %v3589 = vadd.f32 %v3587, %v3588
    %v3590 = vrot.slane %v3589, 1
    %v3591 = vadd.f32 %v3589, %v3590
    %v3592 = vadd.f32 %v3568, %v3570
    %v3593 = vrot.slane %v3592, 4
    %v3594 = vadd.f32 %v3592, %v3593
    %v3595 = vrot.slane %v3594, 2
    %v3596 = vadd.f32 %v3594, %v3595
    %v3597 = vrot.slane %v3596, 1
    %v3598 = vadd.f32 %v3596, %v3597
    %v3599 = vld [vmem:[%s10] sm:$0xff]
    %v3600 = vld [vmem:[%s10 + $0x8] sm:$0xff]
    %v3601 = vld [vmem:[%s10 + $0x10] sm:$0xff]
    %v3602 = vld [vmem:[%s10 + $0x18] sm:$0xff]
    %v3603 = vld [vmem:[%s10 + $0x20] sm:$0xff]
    %v3604 = vld [vmem:[%s10 + $0x28] sm:$0xff]
    %v3605 = vld [vmem:[%s10 + $0x30] sm:$0xff]
    %v3606 = vld [vmem:[%s10 + $0x38] sm:$0xff]
    %v3607 = vld [vmem:[%s10 + $0x40] sm:$0xff]
    %v3608 = vld [vmem:[%s10 + $0x48] sm:$0xff]
    %v3609 = vld [vmem:[%s10 + $0x50] sm:$0xff]
    %v3610 = vld [vmem:[%s10 + $0x58] sm:$0xff]
    %v3611 = vld [vmem:[%s10 + $0x60] sm:$0xff]
    %v3612 = vld [vmem:[%s10 + $0x68] sm:$0xff]
    %v3613 = vld [vmem:[%s10 + $0x70] sm:$0xff]
    %v3614 = vld [vmem:[%s10 + $0x78] sm:$0xff]
    %v3615 = vld [vmem:[%s10 + $0x80] sm:$0xff]
    %v3616 = vld [vmem:[%s10 + $0x88] sm:$0xff]
    %v3617 = vld [vmem:[%s10 + $0x90] sm:$0xff]
    %v3618 = vld [vmem:[%s10 + $0x98] sm:$0xff]
    %v3619 = vld [vmem:[%s10 + $0xa0] sm:$0xff]
    %v3620 = vld [vmem:[%s10 + $0xa8] sm:$0xff]
    %v3621 = vld [vmem:[%s10 + $0xb0] sm:$0xff]
    %v3622 = vld [vmem:[%s10 + $0xb8] sm:$0xff]
    %v3623 = vld [vmem:[%s10 + $0xc0] sm:$0xff]
    %v3624 = vld [vmem:[%s10 + $0xc8] sm:$0xff]
    %v3625 = vld [vmem:[%s10 + $0xd0] sm:$0xff]
    %v3626 = vld [vmem:[%s10 + $0xd8] sm:$0xff]
    %v3627 = vld [vmem:[%s10 + $0xe0] sm:$0xff]
    %v3628 = vld [vmem:[%s10 + $0xe8] sm:$0xff]
    %v3629 = vld [vmem:[%s10 + $0xf0] sm:$0xff]
    %v3630 = vld [vmem:[%s10 + $0xf8] sm:$0xff]
    %v3635 = vsel %vm699, %v3555, %v3541
    %v3636 = vsel %vm699, %v3562, %v3548
    %3639 = vmatprep.subr.mxu0 0.0
    %3640 = vmatpush1.msra.mxu0 %v3599
    %3641 = vmatprep.subr.mxu0 0.0
    %3642 = vmatpush1.msra.mxu0 %v3600
    %3643 = vmatprep.subr.mxu0 0.0
    %3644 = vmatpush1.msra.mxu0 %v3601
    %3645 = vmatprep.subr.mxu0 0.0
    %3646 = vmatpush1.msra.mxu0 %v3602
    %3647 = vmatprep.subr.mxu0 0.0
    %3648 = vmatpush1.msra.mxu0 %v3603
    %3649 = vmatprep.subr.mxu0 0.0
    %3650 = vmatpush1.msra.mxu0 %v3604
    %3651 = vmatprep.subr.mxu0 0.0
    %3652 = vmatpush1.msra.mxu0 %v3605
    %3653 = vmatprep.subr.mxu0 0.0
    %3654 = vmatpush1.msra.mxu0 %v3606
    %3655 = vmatprep.subr.mxu0 0.0
    %3656 = vmatpush1.msra.mxu0 %v3607
    %3657 = vmatprep.subr.mxu0 0.0
    %3658 = vmatpush1.msra.mxu0 %v3608
    %3659 = vmatprep.subr.mxu0 0.0
    %3660 = vmatpush1.msra.mxu0 %v3609
    %3661 = vmatprep.subr.mxu0 0.0
    %3662 = vmatpush1.msra.mxu0 %v3610
    %3663 = vmatprep.subr.mxu0 0.0
    %3664 = vmatpush1.msra.mxu0 %v3611
    %3665 = vmatprep.subr.mxu0 0.0
    %3666 = vmatpush1.msra.mxu0 %v3612
    %3667 = vmatprep.subr.mxu0 0.0
    %3668 = vmatpush1.msra.mxu0 %v3613
    %3669 = vmatprep.subr.mxu0 0.0
    %3670 = vmatpush1.msra.mxu0 %v3614
    %3671 = vmatprep.subr.mxu0 0.0
    %3672 = vmatpush1.msra.mxu0 %v3615
    %3673 = vmatprep.subr.mxu0 0.0
    %3674 = vmatpush1.msra.mxu0 %v3616
    %3675 = vmatprep.subr.mxu0 0.0
    %3676 = vmatpush1.msra.mxu0 %v3617
    %3677 = vmatprep.subr.mxu0 0.0
    %3678 = vmatpush1.msra.mxu0 %v3618
    %3679 = vmatprep.subr.mxu0 0.0
    %3680 = vmatpush1.msra.mxu0 %v3619
    %3681 = vmatprep.subr.mxu0 0.0
    %3682 = vmatpush1.msra.mxu0 %v3620
    %3683 = vmatprep.subr.mxu0 0.0
    %3684 = vmatpush1.msra.mxu0 %v3621
    %3685 = vmatprep.subr.mxu0 0.0
    %3686 = vmatpush1.msra.mxu0 %v3622
    %3687 = vmatprep.subr.mxu0 0.0
    %3688 = vmatpush1.msra.mxu0 %v3623
    %3689 = vmatprep.subr.mxu0 0.0
    %3690 = vmatpush1.msra.mxu0 %v3624
    %3691 = vmatprep.subr.mxu0 0.0
    %3692 = vmatpush1.msra.mxu0 %v3625
    %3693 = vmatprep.subr.mxu0 0.0
    %3694 = vmatpush1.msra.mxu0 %v3626
    %3695 = vmatprep.subr.mxu0 0.0
    %3696 = vmatpush1.msra.mxu0 %v3627
    %3697 = vmatprep.subr.mxu0 0.0
    %3698 = vmatpush1.msra.mxu0 %v3628
    %3699 = vmatprep.subr.mxu0 0.0
    %3700 = vmatpush1.msra.mxu0 %v3629
    %3701 = vmatprep.subr.mxu0 0.0
    %3702 = vmatpush1.msra.mxu0 %v3630
    %3703 = vmatprep.mubr.f32.mxu0 %v3636
    %3704 = vmatmul.mubr.f32.gmra.mrb[0].mxu0 %v3635
    %v3705 = vpop.f32.mrb[0].mxu0
    %v3706 = vadd.f32 0.0, %v3705
    %v3707 = vpop.f32.mrb[0].mxu0
    %3708 = vdwg.mxu0
    %v3713 = vsel %vm699, %v3591, %v3577
    %v3714 = vsel %vm699, %v3598, %v3584
    %3717 = vmatprep.subr.mxu0 0.0
    %3718 = vmatpush1.msra.mxu0 %v3599
    %3719 = vmatprep.subr.mxu0 0.0
    %3720 = vmatpush1.msra.mxu0 %v3600
    %3721 = vmatprep.subr.mxu0 0.0
    %3722 = vmatpush1.msra.mxu0 %v3601
    %3723 = vmatprep.subr.mxu0 0.0
    %3724 = vmatpush1.msra.mxu0 %v3602
    %3725 = vmatprep.subr.mxu0 0.0
    %3726 = vmatpush1.msra.mxu0 %v3603
    %3727 = vmatprep.subr.mxu0 0.0
    %3728 = vmatpush1.msra.mxu0 %v3604
    %3729 = vmatprep.subr.mxu0 0.0
    %3730 = vmatpush1.msra.mxu0 %v3605
    %3731 = vmatprep.subr.mxu0 0.0
    %3732 = vmatpush1.msra.mxu0 %v3606
    %3733 = vmatprep.subr.mxu0 0.0
    %3734 = vmatpush1.msra.mxu0 %v3607
    %3735 = vmatprep.subr.mxu0 0.0
    %3736 = vmatpush1.msra.mxu0 %v3608
    %3737 = vmatprep.subr.mxu0 0.0
    %3738 = vmatpush1.msra.mxu0 %v3609
    %3739 = vmatprep.subr.mxu0 0.0
    %3740 = vmatpush1.msra.mxu0 %v3610
    %3741 = vmatprep.subr.mxu0 0.0
    %3742 = vmatpush1.msra.mxu0 %v3611
    %3743 = vmatprep.subr.mxu0 0.0
    %3744 = vmatpush1.msra.mxu0 %v3612
    %3745 = vmatprep.subr.mxu0 0.0
    %3746 = vmatpush1.msra.mxu0 %v3613
    %3747 = vmatprep.subr.mxu0 0.0
    %3748 = vmatpush1.msra.mxu0 %v3614
    %3749 = vmatprep.subr.mxu0 0.0
    %3750 = vmatpush1.msra.mxu0 %v3615
    %3751 = vmatprep.subr.mxu0 0.0
    %3752 = vmatpush1.msra.mxu0 %v3616
    %3753 = vmatprep.subr.mxu0 0.0
    %3754 = vmatpush1.msra.mxu0 %v3617
    %3755 = vmatprep.subr.mxu0 0.0
    %3756 = vmatpush1.msra.mxu0 %v3618
    %3757 = vmatprep.subr.mxu0 0.0
    %3758 = vmatpush1.msra.mxu0 %v3619
    %3759 = vmatprep.subr.mxu0 0.0
    %3760 = vmatpush1.msra.mxu0 %v3620
    %3761 = vmatprep.subr.mxu0 0.0
    %3762 = vmatpush1.msra.mxu0 %v3621
    %3763 = vmatprep.subr.mxu0 0.0
    %3764 = vmatpush1.msra.mxu0 %v3622
    %3765 = vmatprep.subr.mxu0 0.0
    %3766 = vmatpush1.msra.mxu0 %v3623
    %3767 = vmatprep.subr.mxu0 0.0
    %3768 = vmatpush1.msra.mxu0 %v3624
    %3769 = vmatprep.subr.mxu0 0.0
    %3770 = vmatpush1.msra.mxu0 %v3625
    %3771 = vmatprep.subr.mxu0 0.0
    %3772 = vmatpush1.msra.mxu0 %v3626
    %3773 = vmatprep.subr.mxu0 0.0
    %3774 = vmatpush1.msra.mxu0 %v3627
    %3775 = vmatprep.subr.mxu0 0.0
    %3776 = vmatpush1.msra.mxu0 %v3628
    %3777 = vmatprep.subr.mxu0 0.0
    %3778 = vmatpush1.msra.mxu0 %v3629
    %3779 = vmatprep.subr.mxu0 0.0
    %3780 = vmatpush1.msra.mxu0 %v3630
    %3781 = vmatprep.mubr.f32.mxu0 %v3714
    %3782 = vmatmul.mubr.f32.gmra.mrb[0].mxu0 %v3713
    %v3783 = vpop.f32.mrb[0].mxu0
    %v3784 = vadd.f32 0.0, %v3783
    %v3785 = vpop.f32.mrb[0].mxu0
    %3786 = vdwg.mxu0
    %v3787 = vmul.f32 %v3706, %v3706
    %v3788 = vsub.f32 %v3784, %v3787
    %v3789 = vmax.f32 %v3788, 0.0
    %v3790 = vadd.f32 %v3789, 1e-05
    %v3791 = vrsqrt.pop %v3790
    %v3792 = vld [vmem:[%s8] sm:$0x1]
    %v3794 = vlaneseq
    %v3795 = vshrl.u32 %v3794, 7
    %v3796 = vsub.s32 0, %v3795
    %v3797 = vrot.slane %v3792, %v3796
    %v3799 = vmul.f32 %v3791, %v3797
    %v3800 = vld [vmem:[%s9] sm:$0x1]
    %v3801 = vmul.f32 %v3706, %v3799
    %v3803 = vlaneseq
    %v3804 = vshrl.u32 %v3803, 7
    %v3805 = vsub.s32 0, %v3804
    %v3806 = vrot.slane %v3800, %v3805
    %v3808 = vsub.f32 %v3806, %v3801
    %v3809 = vld [vmem:[%s11] sm:$0xff]
    %v3810 = vld [vmem:[%s11 + $0x8] sm:$0xff]
    %v3811 = vld [vmem:[%s11 + $0x10] sm:$0xff]
    %v3812 = vld [vmem:[%s11 + $0x18] sm:$0xff]
    %v3814 = vsel %vm878, %v3799, 0
    %3816 = vmatprep.subr.mxu0 %v3810
    %3817 = vmatpush1.msra.mxu0 %v3809
    %3818 = vmatprep.subr.mxu0 %v3812
    %3819 = vmatpush1.msra.mxu0 %v3811
    %3820 = vmatprep.subr.mxu0 0.0
    %3821 = vmatpush1.msra.mxu0 0.0
    %3822 = vmatprep.subr.mxu0 0.0
    %3823 = vmatpush1.msra.mxu0 0.0
    %3824 = vmatprep.subr.mxu0 0.0
    %3825 = vmatpush1.msra.mxu0 0.0
    %3826 = vmatprep.subr.mxu0 0.0
    %3827 = vmatpush1.msra.mxu0 0.0
    %3828 = vmatprep.subr.mxu0 0.0
    %3829 = vmatpush1.msra.mxu0 0.0
    %3830 = vmatprep.subr.mxu0 0.0
    %3831 = vmatpush1.msra.mxu0 0.0
    %3832 = vmatprep.subr.mxu0 0.0
    %3833 = vmatpush1.msra.mxu0 0.0
    %3834 = vmatprep.subr.mxu0 0.0
    %3835 = vmatpush1.msra.mxu0 0.0
    %3836 = vmatprep.subr.mxu0 0.0
    %3837 = vmatpush1.msra.mxu0 0.0
    %3838 = vmatprep.subr.mxu0 0.0
    %3839 = vmatpush1.msra.mxu0 0.0
    %3840 = vmatprep.subr.mxu0 0.0
    %3841 = vmatpush1.msra.mxu0 0.0
    %3842 = vmatprep.subr.mxu0 0.0
    %3843 = vmatpush1.msra.mxu0 0.0
    %3844 = vmatprep.subr.mxu0 0.0
    %3845 = vmatpush1.msra.mxu0 0.0
    %3846 = vmatprep.subr.mxu0 0.0
    %3847 = vmatpush1.msra.mxu0 0.0
    %3848 = vmatprep.subr.mxu0 0.0
    %3849 = vmatpush1.msra.mxu0 0.0
    %3850 = vmatprep.subr.mxu0 0.0
    %3851 = vmatpush1.msra.mxu0 0.0
    %3852 = vmatprep.subr.mxu0 0.0
    %3853 = vmatpush1.msra.mxu0 0.0
    %3854 = vmatprep.subr.mxu0 0.0
    %3855 = vmatpush1.msra.mxu0 0.0
    %3856 = vmatprep.subr.mxu0 0.0
    %3857 = vmatpush1.msra.mxu0 0.0
    %3858 = vmatprep.subr.mxu0 0.0
    %3859 = vmatpush1.msra.mxu0 0.0
    %3860 = vmatprep.subr.mxu0 0.0
    %3861 = vmatpush1.msra.mxu0 0.0
    %3862 = vmatprep.subr.mxu0 0.0
    %3863 = vmatpush1.msra.mxu0 0.0
    %3864 = vmatprep.subr.mxu0 0.0
    %3865 = vmatpush1.msra.mxu0 0.0
    %3866 = vmatprep.subr.mxu0 0.0
    %3867 = vmatpush1.msra.mxu0 0.0
    %3868 = vmatprep.subr.mxu0 0.0
    %3869 = vmatpush1.msra.mxu0 0.0
    %3870 = vmatprep.subr.mxu0 0.0
    %3871 = vmatpush1.msra.mxu0 0.0
    %3872 = vmatprep.subr.mxu0 0.0
    %3873 = vmatpush1.msra.mxu0 0.0
    %3874 = vmatprep.subr.mxu0 0.0
    %3875 = vmatpush1.msra.mxu0 0.0
    %3876 = vmatprep.subr.mxu0 0.0
    %3877 = vmatpush1.msra.mxu0 0.0
    %3878 = vmatprep.subr.mxu0 0.0
    %3879 = vmatpush1.msra.mxu0 0.0
    %3880 = vmatprep.mubr.f32.mxu0 0.0
    %3881 = vmatmul.mubr.f32.gmra.mrb[0].mxu0 %v3814
    %v3882 = vpop.f32.mrb[0].mxu0
    %v3883 = vadd.f32 0.0, %v3882
    %v3884 = vpop.f32.mrb[0].mxu0
    %v3885 = vadd.f32 0.0, %v3884
    %3886 = vdwg.mxu0
    %v3888 = vsel %vm878, %v3808, 0
    %3890 = vmatprep.subr.mxu0 %v3810
    %3891 = vmatpush1.msra.mxu0 %v3809
    %3892 = vmatprep.subr.mxu0 %v3812
    %3893 = vmatpush1.msra.mxu0 %v3811
    %3894 = vmatprep.subr.mxu0 0.0
    %3895 = vmatpush1.msra.mxu0 0.0
    %3896 = vmatprep.subr.mxu0 0.0
    %3897 = vmatpush1.msra.mxu0 0.0
    %3898 = vmatprep.subr.mxu0 0.0
    %3899 = vmatpush1.msra.mxu0 0.0
    %3900 = vmatprep.subr.mxu0 0.0
    %3901 = vmatpush1.msra.mxu0 0.0
    %3902 = vmatprep.subr.mxu0 0.0
    %3903 = vmatpush1.msra.mxu0 0.0
    %3904 = vmatprep.subr.mxu0 0.0
    %3905 = vmatpush1.msra.mxu0 0.0
    %3906 = vmatprep.subr.mxu0 0.0
    %3907 = vmatpush1.msra.mxu0 0.0
    %3908 = vmatprep.subr.mxu0 0.0
    %3909 = vmatpush1.msra.mxu0 0.0
    %3910 = vmatprep.subr.mxu0 0.0
    %3911 = vmatpush1.msra.mxu0 0.0
    %3912 = vmatprep.subr.mxu0 0.0
    %3913 = vmatpush1.msra.mxu0 0.0
    %3914 = vmatprep.subr.mxu0 0.0
    %3915 = vmatpush1.msra.mxu0 0.0
    %3916 = vmatprep.subr.mxu0 0.0
    %3917 = vmatpush1.msra.mxu0 0.0
    %3918 = vmatprep.subr.mxu0 0.0
    %3919 = vmatpush1.msra.mxu0 0.0
    %3920 = vmatprep.subr.mxu0 0.0
    %3921 = vmatpush1.msra.mxu0 0.0
    %3922 = vmatprep.subr.mxu0 0.0
    %3923 = vmatpush1.msra.mxu0 0.0
    %3924 = vmatprep.subr.mxu0 0.0
    %3925 = vmatpush1.msra.mxu0 0.0
    %3926 = vmatprep.subr.mxu0 0.0
    %3927 = vmatpush1.msra.mxu0 0.0
    %3928 = vmatprep.subr.mxu0 0.0
    %3929 = vmatpush1.msra.mxu0 0.0
    %3930 = vmatprep.subr.mxu0 0.0
    %3931 = vmatpush1.msra.mxu0 0.0
    %3932 = vmatprep.subr.mxu0 0.0
    %3933 = vmatpush1.msra.mxu0 0.0
    %3934 = vmatprep.subr.mxu0 0.0
    %3935 = vmatpush1.msra.mxu0 0.0
    %3936 = vmatprep.subr.mxu0 0.0
    %3937 = vmatpush1.msra.mxu0 0.0
    %3938 = vmatprep.subr.mxu0 0.0
    %3939 = vmatpush1.msra.mxu0 0.0
    %3940 = vmatprep.subr.mxu0 0.0
    %3941 = vmatpush1.msra.mxu0 0.0
    %3942 = vmatprep.subr.mxu0 0.0
    %3943 = vmatpush1.msra.mxu0 0.0
    %3944 = vmatprep.subr.mxu0 0.0
    %3945 = vmatpush1.msra.mxu0 0.0
    %3946 = vmatprep.subr.mxu0 0.0
    %3947 = vmatpush1.msra.mxu0 0.0
    %3948 = vmatprep.subr.mxu0 0.0
    %3949 = vmatpush1.msra.mxu0 0.0
    %3950 = vmatprep.subr.mxu0 0.0
    %3951 = vmatpush1.msra.mxu0 0.0
    %3952 = vmatprep.subr.mxu0 0.0
    %3953 = vmatpush1.msra.mxu0 0.0
    %3954 = vmatprep.mubr.f32.mxu0 0.0
    %3955 = vmatmul.mubr.f32.gmra.mrb[0].mxu0 %v3888
    %v3956 = vpop.f32.mrb[0].mxu0
    %v3957 = vadd.f32 0.0, %v3956
    %v3958 = vpop.f32.mrb[0].mxu0
    %v3959 = vadd.f32 0.0, %v3958
    %3960 = vdwg.mxu0
    %v3963 = vcombine.low %v3883, %v3885
    %v3965 = vunpack.c.l.s4 1966171168
    %v3966 = vunpack.c.0.s8 %v3965
    %v3967 = vlaneseq
    %v3968 = vshrl.u32 %v3967, 7
    %v3969 = vsub.s32 %v3966, %v3968
    %v3970 = vrot.slane %v3963, %v3969
    %v3971 = vcombine.high %v3970, %v3970
    %v3973 = vunpack.c.l.s4 1966171168
    %v3974 = vunpack.c.0.s8 %v3973
    %v3975 = vlaneseq
    %v3976 = vshrl.u32 %v3975, 7
    %v3977 = vsub.s32 %v3974, %v3976
    %v3978 = vrot.slane %v3970, %v3977
    %v3980 = vunpack.c.l.s4 1966171168
    %v3981 = vunpack.c.0.s8 %v3980
    %v3982 = vlaneseq
    %v3983 = vshrl.u32 %v3982, 7
    %v3984 = vsub.s32 %v3981, %v3983
    %v3985 = vrot.slane %v3971, %v3984
    %v3986 = vlaneseq
    %v3987 = vshrl.u32 %v3986, 7
    %v3988 = vsub.s32 0, %v3987
    %v3989 = vrot.slane %v3978, %v3988
    %v3990 = vlaneseq
    %v3991 = vshrl.u32 %v3990, 7
    %v3992 = vsub.s32 1, %v3991
    %v3993 = vrot.slane %v3978, %v3992
    %v3994 = vlaneseq
    %v3995 = vshrl.u32 %v3994, 7
    %v3996 = vsub.s32 0, %v3995
    %v3997 = vrot.slane %v3985, %v3996
    %v3998 = vlaneseq
    %v3999 = vshrl.u32 %v3998, 7
    %v4000 = vsub.s32 1, %v3999
    %v4001 = vrot.slane %v3985, %v4000
    %v4006 = vmul.f32 %v3527, %v3989
    %v4007 = vmul.f32 %v3528, %v3993
    %v4008 = vmul.f32 %v3529, %v3989
    %v4009 = vmul.f32 %v3530, %v3993
    %v4010 = vmul.f32 %v3531, %v3997
    %v4011 = vmul.f32 %v3532, %v4001
    %v4012 = vmul.f32 %v3533, %v3997
    %v4013 = vmul.f32 %v3534, %v4001
    %v4016 = vcombine.low %v3957, %v3959
    %v4018 = vunpack.c.l.s4 1966171168
    %v4019 = vunpack.c.0.s8 %v4018
    %v4020 = vlaneseq
    %v4021 = vshrl.u32 %v4020, 7
    %v4022 = vsub.s32 %v4019, %v4021
    %v4023 = vrot.slane %v4016, %v4022
    %v4024 = vcombine.high %v4023, %v4023
    %v4026 = vunpack.c.l.s4 1966171168
    %v4027 = vunpack.c.0.s8 %v4026
    %v4028 = vlaneseq
    %v4029 = vshrl.u32 %v4028, 7
    %v4030 = vsub.s32 %v4027, %v4029
    %v4031 = vrot.slane %v4023, %v4030
    %v4033 = vunpack.c.l.s4 1966171168
    %v4034 = vunpack.c.0.s8 %v4033
    %v4035 = vlaneseq
    %v4036 = vshrl.u32 %v4035, 7
    %v4037 = vsub.s32 %v4034, %v4036
    %v4038 = vrot.slane %v4024, %v4037
    %v4039 = vlaneseq
    %v4040 = vshrl.u32 %v4039, 7
    %v4041 = vsub.s32 0, %v4040
    %v4042 = vrot.slane %v4031, %v4041
    %v4043 = vlaneseq
    %v4044 = vshrl.u32 %v4043, 7
    %v4045 = vsub.s32 1, %v4044
    %v4046 = vrot.slane %v4031, %v4045
    %v4047 = vlaneseq
    %v4048 = vshrl.u32 %v4047, 7
    %v4049 = vsub.s32 0, %v4048
    %v4050 = vrot.slane %v4038, %v4049
    %v4051 = vlaneseq
    %v4052 = vshrl.u32 %v4051, 7
    %v4053 = vsub.s32 1, %v4052
    %v4054 = vrot.slane %v4038, %v4053
    %v4059 = vadd.f32 %v4006, %v4042
    %v4060 = vadd.f32 %v4007, %v4046
    %v4061 = vadd.f32 %v4008, %v4042
    %v4062 = vadd.f32 %v4009, %v4046
    %v4063 = vadd.f32 %v4010, %v4050
    %v4064 = vadd.f32 %v4011, %v4054
    %v4065 = vadd.f32 %v4012, %v4050
    %v4066 = vadd.f32 %v4013, %v4054
    %v4067 = vld [vmem:[#allocation3] sm:$0xff]
    %v4068 = vld [vmem:[#allocation3 + $0x8] sm:$0xff]
    %v4069 = vld [vmem:[#allocation3 + $0x10] sm:$0xff]
    %v4070 = vld [vmem:[#allocation3 + $0x18] sm:$0xff]
    %v4071 = vld [vmem:[#allocation3 + $0x20] sm:$0xff]
    %v4072 = vld [vmem:[#allocation3 + $0x28] sm:$0xff]
    %v4073 = vld [vmem:[#allocation3 + $0x30] sm:$0xff]
    %v4074 = vld [vmem:[#allocation3 + $0x38] sm:$0xff]
    %v4075 = vadd.f32 %v4059, %v4067
    %v4076 = vadd.f32 %v4060, %v4068
    %v4077 = vadd.f32 %v4061, %v4069
    %v4078 = vadd.f32 %v4062, %v4070
    %v4079 = vadd.f32 %v4063, %v4071
    %v4080 = vadd.f32 %v4064, %v4072
    %v4081 = vadd.f32 %v4065, %v4073
    %v4082 = vadd.f32 %v4066, %v4074
    %vm4083 = vcmp.gt.f32.partialorder %v4075, 0.0
    %vm4084 = vcmp.gt.f32.partialorder %v4076, 0.0
    %vm4085 = vcmp.gt.f32.partialorder %v4077, 0.0
    %vm4086 = vcmp.gt.f32.partialorder %v4078, 0.0
    %vm4087 = vcmp.gt.f32.partialorder %v4079, 0.0
    %vm4088 = vcmp.gt.f32.partialorder %v4080, 0.0
    %vm4089 = vcmp.gt.f32.partialorder %v4081, 0.0
    %vm4090 = vcmp.gt.f32.partialorder %v4082, 0.0
    %v4091 = vmin.f32 %v4075, 0.0
    %v4092 = vmin.f32 %v4076, 0.0
    %v4093 = vmin.f32 %v4077, 0.0
    %v4094 = vmin.f32 %v4078, 0.0
    %v4095 = vmin.f32 %v4079, 0.0
    %v4096 = vmin.f32 %v4080, 0.0
    %v4097 = vmin.f32 %v4081, 0.0
    %v4098 = vmin.f32 %v4082, 0.0
    %v4099 = vmul.f32 %v4091, 1.442695
    %v4100 = vpow.pop %v4099
    %v4101 = vmul.f32 %v4092, 1.442695
    %v4102 = vpow.pop %v4101
    %v4103 = vmul.f32 %v4093, 1.442695
    %v4104 = vpow.pop %v4103
    %v4105 = vmul.f32 %v4094, 1.442695
    %v4106 = vpow.pop %v4105
    %v4107 = vmul.f32 %v4095, 1.442695
    %v4108 = vpow.pop %v4107
    %v4109 = vmul.f32 %v4096, 1.442695
    %v4110 = vpow.pop %v4109
    %v4111 = vmul.f32 %v4097, 1.442695
    %v4112 = vpow.pop %v4111
    %v4113 = vmul.f32 %v4098, 1.442695
    %v4114 = vpow.pop %v4113
    %v4115 = vsub.f32 %v4100, 1.0
    %v4116 = vsub.f32 %v4102, 1.0
    %v4117 = vsub.f32 %v4104, 1.0
    %v4118 = vsub.f32 %v4106, 1.0
    %v4119 = vsub.f32 %v4108, 1.0
    %v4120 = vsub.f32 %v4110, 1.0
    %v4121 = vsub.f32 %v4112, 1.0
    %v4122 = vsub.f32 %v4114, 1.0
    %v4123 = vsel %vm4083, %v4075, %v4115
    %v4124 = vsel %vm4084, %v4076, %v4116
    %v4125 = vsel %vm4085, %v4077, %v4117
    %v4126 = vsel %vm4086, %v4078, %v4118
    %v4127 = vsel %vm4087, %v4079, %v4119
    %v4128 = vsel %vm4088, %v4080, %v4120
    %v4129 = vsel %vm4089, %v4081, %v4121
    %v4130 = vsel %vm4090, %v4082, %v4122
    %4131 = vst [vmem:[#allocation9] sm:$0xff] %v4123
    %4132 = vst [vmem:[#allocation9 + $0x8] sm:$0xff] %v4124
    %4133 = vst [vmem:[#allocation9 + $0x10] sm:$0xff] %v4125
    %4134 = vst [vmem:[#allocation9 + $0x18] sm:$0xff] %v4126
    %4135 = vst [vmem:[#allocation9 + $0x20] sm:$0xff] %v4127
    %4136 = vst [vmem:[#allocation9 + $0x28] sm:$0xff] %v4128
    %4137 = vst [vmem:[#allocation9 + $0x30] sm:$0xff] %v4129
    %4138 = vst [vmem:[#allocation9 + $0x38] sm:$0xff] %v4130
    // Predicated region
    $region58: #{tpu_custom_call.1} parent=1 // pred_check
      _
    $region59: #{tpu_custom_call.1} parent=1 // pred_check_branch
      %4140 = sbr.rel (0) target = $region61
    $region60: #{tpu_custom_call.1} parent=1 // pred_region
      %s4142 = ssub.s32 1024, 1024
      %4143 = vsyncadd [#allocation6], %s4142
      %s4144 = sshll.u32 [#allocation9], 4
      %s4145 = int_to_ptr.vmem [resolvable:$true] %s4144
      %4150 = dma.vmem_to_hbm [thread:$0]  %s4145, 1024, %s12, [#allocation6], 256, 256, 16
    $region61: #{tpu_custom_call.1} parent=1 // pred_fallthru
      _
    // Predicated region
    $region62: #{tpu_custom_call.1} parent=1 // pred_check
      _
    $region63: #{tpu_custom_call.1} parent=1 // pred_check_branch
      %4152 = sbr.rel (0) target = $region65
    $region64: #{tpu_custom_call.1} parent=1 // pred_region
      %4153 = dma.done [#allocation6], 1024
    $region65: #{tpu_custom_call.1} parent=1 // pred_fallthru
      _
    %4154 = vsyncpa [#allocation5], 1
    %4155 = vsyncpa [#allocation8], 1
    %4156 = vsyncpa [#allocation6], 1

</llo_original>
